<compile_context>
chip_gen: v6e
topology: v6e:2x2x1
jax: 0.10.0
libtpu: 0.0.40
codegen_flags: <defaults>
</compile_context>

<pallas_src>
import jax
import jax.numpy as jnp
from jax.experimental import pallas as pl
from jax.experimental.pallas import tpu as pltpu


# ----------------------------------------------------------------------------
# Pallas kernels
# ----------------------------------------------------------------------------
def _conv_pool_kernel(p00_ref, p01_ref, p10_ref, p11_ref, w_ref, b_ref, o_ref):
    """Fused conv(im2col matmul) + bias + ReLU + 2x2 maxpool.

    p_ab : (M, K) bf16  im2col patches for pool offset (a, b), M = N*PH*PW
    w    : (K, O) bf16  conv weight, columns = output channels
    b    : (1, O) f32
    o    : (M, O) f32   = relu(max_ab(p_ab @ w) + b)  == maxpool(relu(conv))
    """
    w = w_ref[...]
    acc = jnp.maximum(
        jnp.maximum(
            jnp.dot(p00_ref[...], w, preferred_element_type=jnp.float32),
            jnp.dot(p01_ref[...], w, preferred_element_type=jnp.float32)),
        jnp.maximum(
            jnp.dot(p10_ref[...], w, preferred_element_type=jnp.float32),
            jnp.dot(p11_ref[...], w, preferred_element_type=jnp.float32)))
    o_ref[...] = jnp.maximum(acc + b_ref[...], 0.0).astype(o_ref.dtype)


def _fc_head_kernel(x_ref, w1_ref, b1_ref, w2_ref, b2_ref, w3_ref, b3_ref, o_ref):
    """Fused fc1+ReLU -> fc2+ReLU -> fc3, all intermediates stay in VMEM/vregs."""
    h = jnp.dot(x_ref[...], w1_ref[...], preferred_element_type=jnp.float32)
    h = jnp.maximum(h + b1_ref[...], 0.0)
    h = jnp.dot(h, w2_ref[...], preferred_element_type=jnp.float32)
    h = jnp.maximum(h + b2_ref[...], 0.0)
    h = jnp.dot(h, w3_ref[...], preferred_element_type=jnp.float32)
    o_ref[...] = (h + b3_ref[...]).astype(o_ref.dtype)


# ----------------------------------------------------------------------------
# pallas_call wrappers
# ----------------------------------------------------------------------------
def _pick_m_tile(m):
    """Tile the M (rows) dim only when it is big enough to be worth a grid
    (large batch); then the 'parallel' axis lets v7x shard across its 2 TCs."""
    for tm in (1024, 512, 256):
        if m % tm == 0 and m // tm >= 2:
            return tm
    return m


def conv_pool_matmul(p4, w, b):
    m, k = p4[0].shape
    o = w.shape[1]
    out_shape = jax.ShapeDtypeStruct((m, o), jnp.float32)
    tm = _pick_m_tile(m)
    if tm == m:
        # Small M (e.g. batch=2): single whole-array block, no grid overhead.
        return pl.pallas_call(_conv_pool_kernel, out_shape=out_shape)(*p4, w, b)
    patch_spec = pl.BlockSpec((tm, k), lambda i: (i, 0))
    return pl.pallas_call(
        _conv_pool_kernel,
        grid=(m // tm,),
        in_specs=[patch_spec] * 4 + [
            pl.BlockSpec((k, o), lambda i: (0, 0)),
            pl.BlockSpec((1, o), lambda i: (0, 0)),
        ],
        out_specs=pl.BlockSpec((tm, o), lambda i: (i, 0)),
        out_shape=out_shape,
        compiler_params=pltpu.CompilerParams(
            dimension_semantics=("parallel",)),
    )(*p4, w, b)


def fc_head(x, w1, b1, w2, b2, w3, b3):
    n = x.shape[0]
    return pl.pallas_call(
        _fc_head_kernel,
        out_shape=jax.ShapeDtypeStruct((n, w3.shape[1]), jnp.float32),
    )(x, w1, b1, w2, b2, w3, b3)


# ----------------------------------------------------------------------------
# im2col glue (thin XLA slicing; all matmul/bias/relu/pool work is in Pallas)
# ----------------------------------------------------------------------------
def _pooled_patch_matrices(act, kh, kw):
    """act: (N, H, W, C) NHWC -> four bf16 patch matrices (N*PH*PW, KH*KW*C),
    one per 2x2-pool offset (a, b); patch columns ordered (ki, kj, c)."""
    n, h, w, c = act.shape
    oh, ow = h - kh + 1, w - kw + 1
    assert oh % 2 == 0 and ow % 2 == 0, "2x2/stride-2 maxpool expects even conv output"
    ph, pw = oh // 2, ow // 2
    mats = []
    for a in (0, 1):
        for b in (0, 1):
            cols = []
            for ki in range(kh):
                for kj in range(kw):
                    rs, cs = a + ki, b + kj
                    cols.append(act[:, rs:rs + 2 * ph - 1:2, cs:cs + 2 * pw - 1:2, :])
            q = jnp.concatenate(cols, axis=-1)          # (N, PH, PW, KH*KW*C)
            mats.append(q.reshape(n * ph * pw, kh * kw * c).astype(jnp.bfloat16))
    return mats, (n, ph, pw)


def conv_relu_pool(act_nhwc, w_km, b_1o, kh=5, kw=5):
    """Valid conv (stride 1) + bias + ReLU + 2x2 maxpool, NHWC in / NHWC out."""
    mats, (n, ph, pw) = _pooled_patch_matrices(act_nhwc, kh, kw)
    out = conv_pool_matmul(mats, w_km, b_1o)            # (N*PH*PW, O)
    return out.reshape(n, ph, pw, w_km.shape[1])        # (N, PH, PW, O)


# ----------------------------------------------------------------------------
# Parameters
# ----------------------------------------------------------------------------
def init_params():
    """Deterministic synthetic parameters in the PyTorch nn.Module layout."""
    keys = jax.random.split(jax.random.PRNGKey(42), 10)
    s = 0.1
    return {
        "conv1_w": s * jax.random.normal(keys[0], (6, 3, 5, 5), jnp.float32),
        "conv1_b": s * jax.random.normal(keys[1], (6,), jnp.float32),
        "conv2_w": s * jax.random.normal(keys[2], (16, 6, 5, 5), jnp.float32),
        "conv2_b": s * jax.random.normal(keys[3], (16,), jnp.float32),
        "fc1_w": s * jax.random.normal(keys[4], (120, 16 * 5 * 5), jnp.float32),
        "fc1_b": s * jax.random.normal(keys[5], (120,), jnp.float32),
        "fc2_w": s * jax.random.normal(keys[6], (84, 120), jnp.float32),
        "fc2_b": s * jax.random.normal(keys[7], (84,), jnp.float32),
        "fc3_w": s * jax.random.normal(keys[8], (10, 84), jnp.float32),
        "fc3_b": s * jax.random.normal(keys[9], (10,), jnp.float32),
    }


def prepare_params(p):
    """One-time (outside jit) weight re-layout:
       * conv weights -> (KH*KW*C, O) with row order (ki, kj, c), cast to bf16
       * fc weights   -> (K, N); fc1 columns permuted from torch's NCHW flatten
         order (c, h, w) to this pipeline's NHWC flatten order (h, w, c)
       * biases       -> (1, N) f32
    """
    fc1_w = p["fc1_w"].reshape(120, 16, 5, 5).transpose(0, 2, 3, 1).reshape(120, 400)
    return {
        "c1_w": p["conv1_w"].transpose(2, 3, 1, 0).reshape(75, 6).astype(jnp.bfloat16),
        "c1_b": p["conv1_b"].reshape(1, 6).astype(jnp.float32),
        "c2_w": p["conv2_w"].transpose(2, 3, 1, 0).reshape(150, 16).astype(jnp.bfloat16),
        "c2_b": p["conv2_b"].reshape(1, 16).astype(jnp.float32),
        "fc1_w": fc1_w.T.astype(jnp.float32),          # (400, 120)
        "fc1_b": p["fc1_b"].reshape(1, 120),
        "fc2_w": p["fc2_w"].T.astype(jnp.float32),     # (120, 84)
        "fc2_b": p["fc2_b"].reshape(1, 84),
        "fc3_w": p["fc3_w"].T.astype(jnp.float32),     # (84, 10)
        "fc3_b": p["fc3_b"].reshape(1, 10),
    }


# ----------------------------------------------------------------------------
# Full network forward (3 pallas_calls)
# ----------------------------------------------------------------------------
@jax.jit
def net_forward(kp, x):
    # x: (N, 3, 32, 32) NCHW float32 (PyTorch layout)
    a = x.transpose(0, 2, 3, 1)                                     # NHWC (24 KiB)
    a = conv_relu_pool(a, kp["c1_w"], kp["c1_b"])                   # (N, 14, 14, 6)
    a = conv_relu_pool(a, kp["c2_w"], kp["c2_b"])                   # (N, 5, 5, 16)
    a = a.reshape(a.shape[0], -1)                                   # (N, 400), (h,w,c) order
    return fc_head(a, kp["fc1_w"], kp["fc1_b"],
                   kp["fc2_w"], kp["fc2_b"],
                   kp["fc3_w"], kp["fc3_b"])                        # (N, 10)


if __name__ == "__main__":
    params = prepare_params(init_params())
    # Conv/FC shapes (16*5*5 flatten) imply 32x32 spatial input, like CIFAR.
    x = jax.random.normal(jax.random.PRNGKey(0), (2, 3, 32, 32), jnp.float32)
    out = jax.block_until_ready(net_forward(params, x))
    assert out.shape == (2, 10) and out.dtype == jnp.float32
    print("KERNEL_OK")
</pallas_src>

<mosaic_0001>
module attributes {stable_mosaic.version = 11 : i64} {
  func.func @_conv_pool_kernel(%arg0: memref<392x75xbf16, #tpu.memory_space<vmem>>, %arg1: memref<392x75xbf16, #tpu.memory_space<vmem>>, %arg2: memref<392x75xbf16, #tpu.memory_space<vmem>>, %arg3: memref<392x75xbf16, #tpu.memory_space<vmem>>, %arg4: memref<75x6xbf16, #tpu.memory_space<vmem>>, %arg5: memref<1x6xf32, #tpu.memory_space<vmem>>, %arg6: memref<392x6xf32, #tpu.memory_space<vmem>>) attributes {dimension_semantics = [], scalar_prefetch = 0 : i64, scratch_operands = 0 : i64, tpu.core_type = #tpu.core_type<tc>} {
    %c0 = arith.constant 0 : index
    %c0_0 = arith.constant 0 : index
    %0 = vector.load %arg4[%c0, %c0_0] : memref<75x6xbf16, #tpu.memory_space<vmem>>, vector<75x6xbf16>
    %c0_1 = arith.constant 0 : index
    %c0_2 = arith.constant 0 : index
    %1 = vector.load %arg0[%c0_1, %c0_2] : memref<392x75xbf16, #tpu.memory_space<vmem>>, vector<392x75xbf16>
    %cst = arith.constant dense<0.000000e+00> : vector<392x6xf32>
    %2 = tpu.matmul %1, %0, %cst {dimension_numbers = #tpu.dot_dimension_numbers<[1], [0], [0], [1], [0, 0, 1, 1], [], []>} : vector<392x75xbf16>, vector<75x6xbf16>, vector<392x6xf32> -> vector<392x6xf32>
    %c0_3 = arith.constant 0 : index
    %c0_4 = arith.constant 0 : index
    %3 = vector.load %arg1[%c0_3, %c0_4] : memref<392x75xbf16, #tpu.memory_space<vmem>>, vector<392x75xbf16>
    %cst_5 = arith.constant dense<0.000000e+00> : vector<392x6xf32>
    %4 = tpu.matmul %3, %0, %cst_5 {dimension_numbers = #tpu.dot_dimension_numbers<[1], [0], [0], [1], [0, 0, 1, 1], [], []>} : vector<392x75xbf16>, vector<75x6xbf16>, vector<392x6xf32> -> vector<392x6xf32>
    %5 = arith.maximumf %2, %4 : vector<392x6xf32>
    %c0_6 = arith.constant 0 : index
    %c0_7 = arith.constant 0 : index
    %6 = vector.load %arg2[%c0_6, %c0_7] : memref<392x75xbf16, #tpu.memory_space<vmem>>, vector<392x75xbf16>
    %cst_8 = arith.constant dense<0.000000e+00> : vector<392x6xf32>
    %7 = tpu.matmul %6, %0, %cst_8 {dimension_numbers = #tpu.dot_dimension_numbers<[1], [0], [0], [1], [0, 0, 1, 1], [], []>} : vector<392x75xbf16>, vector<75x6xbf16>, vector<392x6xf32> -> vector<392x6xf32>
    %c0_9 = arith.constant 0 : index
    %c0_10 = arith.constant 0 : index
    %8 = vector.load %arg3[%c0_9, %c0_10] : memref<392x75xbf16, #tpu.memory_space<vmem>>, vector<392x75xbf16>
    %cst_11 = arith.constant dense<0.000000e+00> : vector<392x6xf32>
    %9 = tpu.matmul %8, %0, %cst_11 {dimension_numbers = #tpu.dot_dimension_numbers<[1], [0], [0], [1], [0, 0, 1, 1], [], []>} : vector<392x75xbf16>, vector<75x6xbf16>, vector<392x6xf32> -> vector<392x6xf32>
    %10 = arith.maximumf %7, %9 : vector<392x6xf32>
    %11 = arith.maximumf %5, %10 : vector<392x6xf32>
    %c0_12 = arith.constant 0 : index
    %c0_13 = arith.constant 0 : index
    %12 = vector.load %arg5[%c0_12, %c0_13] : memref<1x6xf32, #tpu.memory_space<vmem>>, vector<1x6xf32>
    %13 = vector.broadcast %12 : vector<1x6xf32> to vector<392x6xf32>
    %14 = arith.addf %11, %13 : vector<392x6xf32>
    %cst_14 = arith.constant 0.000000e+00 : f32
    %15 = vector.broadcast %cst_14 : f32 to vector<392x6xf32>
    %16 = arith.maximumf %14, %15 : vector<392x6xf32>
    %c0_15 = arith.constant 0 : index
    %c0_16 = arith.constant 0 : index
    %17 = vector.load %arg6[%c0_15, %c0_16] : memref<392x6xf32, #tpu.memory_space<vmem>>, vector<392x6xf32>
    tpu.vector_store %arg6[%c0_15, %c0_16], %16 {strides = array<i32>} : memref<392x6xf32, #tpu.memory_space<vmem>>, vector<392x6xf32>,
    return
  }
}

module attributes {stable_mosaic.version = 11 : i64} {
  func.func @_conv_pool_kernel(%arg0: memref<50x150xbf16, #tpu.memory_space<vmem>>, %arg1: memref<50x150xbf16, #tpu.memory_space<vmem>>, %arg2: memref<50x150xbf16, #tpu.memory_space<vmem>>, %arg3: memref<50x150xbf16, #tpu.memory_space<vmem>>, %arg4: memref<150x16xbf16, #tpu.memory_space<vmem>>, %arg5: memref<1x16xf32, #tpu.memory_space<vmem>>, %arg6: memref<50x16xf32, #tpu.memory_space<vmem>>) attributes {dimension_semantics = [], scalar_prefetch = 0 : i64, scratch_operands = 0 : i64, tpu.core_type = #tpu.core_type<tc>} {
    %c0 = arith.constant 0 : index
    %c0_0 = arith.constant 0 : index
    %0 = vector.load %arg4[%c0, %c0_0] : memref<150x16xbf16, #tpu.memory_space<vmem>>, vector<150x16xbf16>
    %c0_1 = arith.constant 0 : index
    %c0_2 = arith.constant 0 : index
    %1 = vector.load %arg0[%c0_1, %c0_2] : memref<50x150xbf16, #tpu.memory_space<vmem>>, vector<50x150xbf16>
    %cst = arith.constant dense<0.000000e+00> : vector<50x16xf32>
    %2 = tpu.matmul %1, %0, %cst {dimension_numbers = #tpu.dot_dimension_numbers<[1], [0], [0], [1], [0, 0, 1, 1], [], []>} : vector<50x150xbf16>, vector<150x16xbf16>, vector<50x16xf32> -> vector<50x16xf32>
    %c0_3 = arith.constant 0 : index
    %c0_4 = arith.constant 0 : index
    %3 = vector.load %arg1[%c0_3, %c0_4] : memref<50x150xbf16, #tpu.memory_space<vmem>>, vector<50x150xbf16>
    %cst_5 = arith.constant dense<0.000000e+00> : vector<50x16xf32>
    %4 = tpu.matmul %3, %0, %cst_5 {dimension_numbers = #tpu.dot_dimension_numbers<[1], [0], [0], [1], [0, 0, 1, 1], [], []>} : vector<50x150xbf16>, vector<150x16xbf16>, vector<50x16xf32> -> vector<50x16xf32>
    %5 = arith.maximumf %2, %4 : vector<50x16xf32>
    %c0_6 = arith.constant 0 : index
    %c0_7 = arith.constant 0 : index
    %6 = vector.load %arg2[%c0_6, %c0_7] : memref<50x150xbf16, #tpu.memory_space<vmem>>, vector<50x150xbf16>
    %cst_8 = arith.constant dense<0.000000e+00> : vector<50x16xf32>
    %7 = tpu.matmul %6, %0, %cst_8 {dimension_numbers = #tpu.dot_dimension_numbers<[1], [0], [0], [1], [0, 0, 1, 1], [], []>} : vector<50x150xbf16>, vector<150x16xbf16>, vector<50x16xf32> -> vector<50x16xf32>
    %c0_9 = arith.constant 0 : index
    %c0_10 = arith.constant 0 : index
    %8 = vector.load %arg3[%c0_9, %c0_10] : memref<50x150xbf16, #tpu.memory_space<vmem>>, vector<50x150xbf16>
    %cst_11 = arith.constant dense<0.000000e+00> : vector<50x16xf32>
    %9 = tpu.matmul %8, %0, %cst_11 {dimension_numbers = #tpu.dot_dimension_numbers<[1], [0], [0], [1], [0, 0, 1, 1], [], []>} : vector<50x150xbf16>, vector<150x16xbf16>, vector<50x16xf32> -> vector<50x16xf32>
    %10 = arith.maximumf %7, %9 : vector<50x16xf32>
    %11 = arith.maximumf %5, %10 : vector<50x16xf32>
    %c0_12 = arith.constant 0 : index
    %c0_13 = arith.constant 0 : index
    %12 = vector.load %arg5[%c0_12, %c0_13] : memref<1x16xf32, #tpu.memory_space<vmem>>, vector<1x16xf32>
    %13 = vector.broadcast %12 : vector<1x16xf32> to vector<50x16xf32>
    %14 = arith.addf %11, %13 : vector<50x16xf32>
    %cst_14 = arith.constant 0.000000e+00 : f32
    %15 = vector.broadcast %cst_14 : f32 to vector<50x16xf32>
    %16 = arith.maximumf %14, %15 : vector<50x16xf32>
    %c0_15 = arith.constant 0 : index
    %c0_16 = arith.constant 0 : index
    %17 = vector.load %arg6[%c0_15, %c0_16] : memref<50x16xf32, #tpu.memory_space<vmem>>, vector<50x16xf32>
    tpu.vector_store %arg6[%c0_15, %c0_16], %16 {strides = array<i32>} : memref<50x16xf32, #tpu.memory_space<vmem>>, vector<50x16xf32>,
    return
  }
}

module attributes {stable_mosaic.version = 11 : i64} {
  func.func @_fc_head_kernel(%arg0: memref<2x400xf32, #tpu.memory_space<vmem>>, %arg1: memref<400x120xf32, #tpu.memory_space<vmem>>, %arg2: memref<1x120xf32, #tpu.memory_space<vmem>>, %arg3: memref<120x84xf32, #tpu.memory_space<vmem>>, %arg4: memref<1x84xf32, #tpu.memory_space<vmem>>, %arg5: memref<84x10xf32, #tpu.memory_space<vmem>>, %arg6: memref<1x10xf32, #tpu.memory_space<vmem>>, %arg7: memref<2x10xf32, #tpu.memory_space<vmem>>) attributes {dimension_semantics = [], scalar_prefetch = 0 : i64, scratch_operands = 0 : i64, tpu.core_type = #tpu.core_type<tc>} {
    %c0 = arith.constant 0 : index
    %c0_0 = arith.constant 0 : index
    %0 = vector.load %arg0[%c0, %c0_0] : memref<2x400xf32, #tpu.memory_space<vmem>>, vector<2x400xf32>
    %c0_1 = arith.constant 0 : index
    %c0_2 = arith.constant 0 : index
    %1 = vector.load %arg1[%c0_1, %c0_2] : memref<400x120xf32, #tpu.memory_space<vmem>>, vector<400x120xf32>
    %cst = arith.constant dense<0.000000e+00> : vector<2x120xf32>
    %2 = tpu.matmul %0, %1, %cst {dimension_numbers = #tpu.dot_dimension_numbers<[1], [0], [0], [1], [0, 0, 1, 1], [], []>} : vector<2x400xf32>, vector<400x120xf32>, vector<2x120xf32> -> vector<2x120xf32>
    %c0_3 = arith.constant 0 : index
    %c0_4 = arith.constant 0 : index
    %3 = vector.load %arg2[%c0_3, %c0_4] : memref<1x120xf32, #tpu.memory_space<vmem>>, vector<1x120xf32>
    %4 = vector.broadcast %3 : vector<1x120xf32> to vector<2x120xf32>
    %5 = arith.addf %2, %4 : vector<2x120xf32>
    %cst_5 = arith.constant 0.000000e+00 : f32
    %6 = vector.broadcast %cst_5 : f32 to vector<2x120xf32>
    %7 = arith.maximumf %5, %6 : vector<2x120xf32>
    %c0_6 = arith.constant 0 : index
    %c0_7 = arith.constant 0 : index
    %8 = vector.load %arg3[%c0_6, %c0_7] : memref<120x84xf32, #tpu.memory_space<vmem>>, vector<120x84xf32>
    %cst_8 = arith.constant dense<0.000000e+00> : vector<2x84xf32>
    %9 = tpu.matmul %7, %8, %cst_8 {dimension_numbers = #tpu.dot_dimension_numbers<[1], [0], [0], [1], [0, 0, 1, 1], [], []>} : vector<2x120xf32>, vector<120x84xf32>, vector<2x84xf32> -> vector<2x84xf32>
    %c0_9 = arith.constant 0 : index
    %c0_10 = arith.constant 0 : index
    %10 = vector.load %arg4[%c0_9, %c0_10] : memref<1x84xf32, #tpu.memory_space<vmem>>, vector<1x84xf32>
    %11 = vector.broadcast %10 : vector<1x84xf32> to vector<2x84xf32>
    %12 = arith.addf %9, %11 : vector<2x84xf32>
    %cst_11 = arith.constant 0.000000e+00 : f32
    %13 = vector.broadcast %cst_11 : f32 to vector<2x84xf32>
    %14 = arith.maximumf %12, %13 : vector<2x84xf32>
    %c0_12 = arith.constant 0 : index
    %c0_13 = arith.constant 0 : index
    %15 = vector.load %arg5[%c0_12, %c0_13] : memref<84x10xf32, #tpu.memory_space<vmem>>, vector<84x10xf32>
    %cst_14 = arith.constant dense<0.000000e+00> : vector<2x10xf32>
    %16 = tpu.matmul %14, %15, %cst_14 {dimension_numbers = #tpu.dot_dimension_numbers<[1], [0], [0], [1], [0, 0, 1, 1], [], []>} : vector<2x84xf32>, vector<84x10xf32>, vector<2x10xf32> -> vector<2x10xf32>
    %c0_15 = arith.constant 0 : index
    %c0_16 = arith.constant 0 : index
    %17 = vector.load %arg6[%c0_15, %c0_16] : memref<1x10xf32, #tpu.memory_space<vmem>>, vector<1x10xf32>
    %18 = vector.broadcast %17 : vector<1x10xf32> to vector<2x10xf32>
    %19 = arith.addf %16, %18 : vector<2x10xf32>
    %c0_17 = arith.constant 0 : index
    %c0_18 = arith.constant 0 : index
    %20 = vector.load %arg7[%c0_17, %c0_18] : memref<2x10xf32, #tpu.memory_space<vmem>>, vector<2x10xf32>
    tpu.vector_store %arg7[%c0_17, %c0_18], %19 {strides = array<i32>} : memref<2x10xf32, #tpu.memory_space<vmem>>, vector<2x10xf32>,
    return
  }
}

</mosaic_0001>

<llo_original>
// kernel: net_forward.3
$region0: #{net_forward.3}
  #allocation0 [shape = 'u32[]', space=smem, size = 0x4, offset = 0x4, fixed_abs, tag = 'smem constant byte address 0x4 - core index']
  #allocation1 [shape = 'u32[144,128]{1,0:T(1,128)}', space=vmem, size = 0x12000, scoped, tag = 'internal scratch']
  %s0 = inlined_call_operand.vmem [shape: bf16[392,75], index: 0, kind: input, shape index: {}]
  %s1 = inlined_call_operand.vmem [shape: bf16[392,75], index: 1, kind: input, shape index: {}]
  %s2 = inlined_call_operand.vmem [shape: bf16[392,75], index: 2, kind: input, shape index: {}]
  %s3 = inlined_call_operand.vmem [shape: bf16[392,75], index: 3, kind: input, shape index: {}]
  %s4 = inlined_call_operand.vmem [shape: bf16[75,6], index: 4, kind: input, shape index: {}]
  %s5 = inlined_call_operand.vmem [shape: f32[1,6], index: 5, kind: input, shape index: {}]
  %s6 = inlined_call_operand.vmem [shape: f32[392,6], index: 6, kind: output, shape index: {}]
  %s7 = sld [smem:[#allocation0]]
  $region34: #{net_forward.3} parent=0
    _
  %s9 = ssub.s32 1, %s7
  %s10 = scalar_select 0, %s9, %s7
  // Predicated region
  $region2: #{net_forward.3} parent=0 // pred_check
    _
  $region3: #{net_forward.3} parent=0 // pred_check_branch
    %12 = sbr.rel (0) target = $region5
  $region4: #{net_forward.3} parent=0 // pred_region
    _
  $region5: #{net_forward.3} parent=0 // pred_fallthru
    _
  // Predicated region
  $region6: #{net_forward.3} parent=0 // pred_check
    _
  $region7: #{net_forward.3} parent=0 // pred_check_branch
    %14 = sbr.rel (0) target = $region9
  $region8: #{net_forward.3} parent=0 // pred_region
    _
  $region9: #{net_forward.3} parent=0 // pred_fallthru
    _
  // Predicated region
  $region10: #{net_forward.3} parent=0 // pred_check
    _
  $region11: #{net_forward.3} parent=0 // pred_check_branch
    %16 = sbr.rel (0) target = $region13
  $region12: #{net_forward.3} parent=0 // pred_region
    _
  $region13: #{net_forward.3} parent=0 // pred_fallthru
    _
  // Predicated region
  $region14: #{net_forward.3} parent=0 // pred_check
    _
  $region15: #{net_forward.3} parent=0 // pred_check_branch
    %18 = sbr.rel (0) target = $region17
  $region16: #{net_forward.3} parent=0 // pred_region
    _
  $region17: #{net_forward.3} parent=0 // pred_fallthru
    _
  // Predicated region
  $region18: #{net_forward.3} parent=0 // pred_check
    _
  $region19: #{net_forward.3} parent=0 // pred_check_branch
    %20 = sbr.rel (0) target = $region21
  $region20: #{net_forward.3} parent=0 // pred_region
    _
  $region21: #{net_forward.3} parent=0 // pred_fallthru
    _
  // Predicated region
  $region22: #{net_forward.3} parent=0 // pred_check
    _
  $region23: #{net_forward.3} parent=0 // pred_check_branch
    %22 = sbr.rel (0) target = $region25
  $region24: #{net_forward.3} parent=0 // pred_region
    _
  $region25: #{net_forward.3} parent=0 // pred_fallthru
    _
  %v24 = vld [vmem:[%s4] sm:$0xf]
  %v25 = vld [vmem:[%s4 + $0x4] sm:$0xf]
  %v26 = vld [vmem:[%s4 + $0x8] sm:$0xf]
  %v27 = vld [vmem:[%s4 + $0xc] sm:$0xf]
  %v28 = vld [vmem:[%s4 + $0x10] sm:$0xf]
  %v29 = vld [vmem:[%s4 + $0x14] sm:$0xf]
  %v30 = vld [vmem:[%s4 + $0x18] sm:$0xf]
  %v31 = vld [vmem:[%s4 + $0x1c] sm:$0xf]
  %v32 = vld [vmem:[%s4 + $0x20] sm:$0xf]
  %v33 = vld [vmem:[%s4 + $0x24] sm:$0x3]
  %v34 = vld [vmem:[%s0] sm:$0xf]
  %v35 = vld [vmem:[%s0 + $0x4] sm:$0xf]
  %v36 = vld [vmem:[%s0 + $0x8] sm:$0xf]
  %v37 = vld [vmem:[%s0 + $0xc] sm:$0xf]
  %v38 = vld [vmem:[%s0 + $0x10] sm:$0xf]
  %v39 = vld [vmem:[%s0 + $0x14] sm:$0xf]
  %v40 = vld [vmem:[%s0 + $0x18] sm:$0xf]
  %v41 = vld [vmem:[%s0 + $0x1c] sm:$0xf]
  %v42 = vld [vmem:[%s0 + $0x20] sm:$0xf]
  %v43 = vld [vmem:[%s0 + $0x24] sm:$0xf]
  %v44 = vld [vmem:[%s0 + $0x28] sm:$0xf]
  %v45 = vld [vmem:[%s0 + $0x2c] sm:$0xf]
  %v46 = vld [vmem:[%s0 + $0x30] sm:$0xf]
  %v47 = vld [vmem:[%s0 + $0x34] sm:$0xf]
  %v48 = vld [vmem:[%s0 + $0x38] sm:$0xf]
  %v49 = vld [vmem:[%s0 + $0x3c] sm:$0xf]
  %v50 = vld [vmem:[%s0 + $0x40] sm:$0xf]
  %v51 = vld [vmem:[%s0 + $0x44] sm:$0xf]
  %v52 = vld [vmem:[%s0 + $0x48] sm:$0xf]
  %v53 = vld [vmem:[%s0 + $0x4c] sm:$0xf]
  %v54 = vld [vmem:[%s0 + $0x50] sm:$0xf]
  %v55 = vld [vmem:[%s0 + $0x54] sm:$0xf]
  %v56 = vld [vmem:[%s0 + $0x58] sm:$0xf]
  %v57 = vld [vmem:[%s0 + $0x5c] sm:$0xf]
  %v58 = vld [vmem:[%s0 + $0x60] sm:$0xf]
  %v59 = vld [vmem:[%s0 + $0x64] sm:$0xf]
  %v60 = vld [vmem:[%s0 + $0x68] sm:$0xf]
  %v61 = vld [vmem:[%s0 + $0x6c] sm:$0xf]
  %v62 = vld [vmem:[%s0 + $0x70] sm:$0xf]
  %v63 = vld [vmem:[%s0 + $0x74] sm:$0xf]
  %v64 = vld [vmem:[%s0 + $0x78] sm:$0xf]
  %v65 = vld [vmem:[%s0 + $0x7c] sm:$0xf]
  %v66 = vld [vmem:[%s0 + $0x80] sm:$0xf]
  %v67 = vld [vmem:[%s0 + $0x84] sm:$0xf]
  %v68 = vld [vmem:[%s0 + $0x88] sm:$0xf]
  %v69 = vld [vmem:[%s0 + $0x8c] sm:$0xf]
  %v70 = vld [vmem:[%s0 + $0x90] sm:$0xf]
  %v71 = vld [vmem:[%s0 + $0x94] sm:$0xf]
  %v72 = vld [vmem:[%s0 + $0x98] sm:$0xf]
  %v73 = vld [vmem:[%s0 + $0x9c] sm:$0xf]
  %v74 = vld [vmem:[%s0 + $0xa0] sm:$0xf]
  %v75 = vld [vmem:[%s0 + $0xa4] sm:$0xf]
  %v76 = vld [vmem:[%s0 + $0xa8] sm:$0xf]
  %v77 = vld [vmem:[%s0 + $0xac] sm:$0xf]
  %v78 = vld [vmem:[%s0 + $0xb0] sm:$0xf]
  %v79 = vld [vmem:[%s0 + $0xb4] sm:$0xf]
  %v80 = vld [vmem:[%s0 + $0xb8] sm:$0xf]
  %v81 = vld [vmem:[%s0 + $0xbc] sm:$0xf]
  %v82 = vld [vmem:[%s0 + $0xc0] sm:$0xf]
  %v132 = vunpack.c.l.b16 %v34
  %v133 = vunpack.c.l.b16 %v35
  %v134 = vunpack.c.l.b16 %v36
  %v135 = vunpack.c.l.b16 %v37
  %v136 = vunpack.c.l.b16 %v38
  %v137 = vunpack.c.l.b16 %v39
  %v138 = vunpack.c.l.b16 %v40
  %v139 = vunpack.c.l.b16 %v41
  %v140 = vunpack.c.l.b16 %v42
  %v141 = vunpack.c.l.b16 %v43
  %v142 = vunpack.c.l.b16 %v44
  %v143 = vunpack.c.l.b16 %v45
  %v144 = vunpack.c.l.b16 %v46
  %v145 = vunpack.c.l.b16 %v47
  %v146 = vunpack.c.l.b16 %v48
  %v147 = vunpack.c.l.b16 %v49
  %v148 = vunpack.c.l.b16 %v50
  %v149 = vunpack.c.l.b16 %v51
  %v150 = vunpack.c.l.b16 %v52
  %v151 = vunpack.c.l.b16 %v53
  %v152 = vunpack.c.l.b16 %v54
  %v153 = vunpack.c.l.b16 %v55
  %v154 = vunpack.c.l.b16 %v56
  %v155 = vunpack.c.l.b16 %v57
  %v156 = vunpack.c.l.b16 %v58
  %v157 = vunpack.c.l.b16 %v59
  %v158 = vunpack.c.l.b16 %v60
  %v159 = vunpack.c.l.b16 %v61
  %v160 = vunpack.c.l.b16 %v62
  %v161 = vunpack.c.l.b16 %v63
  %v162 = vunpack.c.l.b16 %v64
  %v163 = vunpack.c.l.b16 %v65
  %v164 = vunpack.c.l.b16 %v66
  %v165 = vunpack.c.l.b16 %v67
  %v166 = vunpack.c.l.b16 %v68
  %v167 = vunpack.c.l.b16 %v69
  %v168 = vunpack.c.l.b16 %v70
  %v169 = vunpack.c.l.b16 %v71
  %v170 = vunpack.c.l.b16 %v72
  %v171 = vunpack.c.l.b16 %v73
  %v172 = vunpack.c.l.b16 %v74
  %v173 = vunpack.c.l.b16 %v75
  %v174 = vunpack.c.l.b16 %v76
  %v175 = vunpack.c.l.b16 %v77
  %v176 = vunpack.c.l.b16 %v78
  %v177 = vunpack.c.l.b16 %v79
  %v178 = vunpack.c.l.b16 %v80
  %v179 = vunpack.c.l.b16 %v81
  %v180 = vunpack.c.l.b16 %v82
  %v181 = vpack.c.b16 %v133, %v132
  %v182 = vpack.c.b16 %v135, %v134
  %v183 = vpack.c.b16 %v137, %v136
  %v184 = vpack.c.b16 %v139, %v138
  %v185 = vpack.c.b16 %v141, %v140
  %v186 = vpack.c.b16 %v143, %v142
  %v187 = vpack.c.b16 %v145, %v144
  %v188 = vpack.c.b16 %v147, %v146
  %v189 = vpack.c.b16 %v149, %v148
  %v190 = vpack.c.b16 %v151, %v150
  %v191 = vpack.c.b16 %v153, %v152
  %v192 = vpack.c.b16 %v155, %v154
  %v193 = vpack.c.b16 %v157, %v156
  %v194 = vpack.c.b16 %v159, %v158
  %v195 = vpack.c.b16 %v161, %v160
  %v196 = vpack.c.b16 %v163, %v162
  %v197 = vpack.c.b16 %v165, %v164
  %v198 = vpack.c.b16 %v167, %v166
  %v199 = vpack.c.b16 %v169, %v168
  %v200 = vpack.c.b16 %v171, %v170
  %v201 = vpack.c.b16 %v173, %v172
  %v202 = vpack.c.b16 %v175, %v174
  %v203 = vpack.c.b16 %v177, %v176
  %v204 = vpack.c.b16 %v179, %v178
  %v205 = vpack.c.b16 %v180, %v180
  %v216 = vunpack.c.l.b16 %v24
  %v217 = vunpack.c.l.b16 %v25
  %v218 = vunpack.c.l.b16 %v26
  %v219 = vunpack.c.l.b16 %v27
  %v220 = vunpack.c.l.b16 %v28
  %v221 = vunpack.c.l.b16 %v29
  %v222 = vunpack.c.l.b16 %v30
  %v223 = vunpack.c.l.b16 %v31
  %v224 = vunpack.c.l.b16 %v32
  %v225 = vunpack.c.l.b16 %v33
  %v226 = vpack.c.b16 %v217, %v216
  %v227 = vpack.c.b16 %v219, %v218
  %v228 = vpack.c.b16 %v221, %v220
  %v229 = vpack.c.b16 %v223, %v222
  %v230 = vpack.c.b16 %v225, %v224
  %vm235 = vcmask 613376
  %v237 = vsel %vm235, %v181, 0
  %v240 = vsel %vm235, %v182, 0
  %v243 = vsel %vm235, %v183, 0
  %v246 = vsel %vm235, %v184, 0
  %v249 = vsel %vm235, %v185, 0
  %v252 = vsel %vm235, %v186, 0
  %v255 = vsel %vm235, %v187, 0
  %v258 = vsel %vm235, %v188, 0
  %v261 = vsel %vm235, %v189, 0
  %v264 = vsel %vm235, %v190, 0
  %v267 = vsel %vm235, %v191, 0
  %v270 = vsel %vm235, %v192, 0
  %v273 = vsel %vm235, %v193, 0
  %v276 = vsel %vm235, %v194, 0
  %v279 = vsel %vm235, %v195, 0
  %v282 = vsel %vm235, %v196, 0
  %v285 = vsel %vm235, %v197, 0
  %v288 = vsel %vm235, %v198, 0
  %v291 = vsel %vm235, %v199, 0
  %v294 = vsel %vm235, %v200, 0
  %v297 = vsel %vm235, %v201, 0
  %v300 = vsel %vm235, %v202, 0
  %v303 = vsel %vm235, %v203, 0
  %v306 = vsel %vm235, %v204, 0
  %v309 = vsel %vm235, %v205, 0
  %vm311 = vcmask 1044480
  %vm312 = vcmask 1045504
  %v313 = vsel %vm311, 4294967295, 65535
  %v314 = vsel %vm312, %v313, 0
  %v316 = vand.u32 %v230, %v314
  %318 = vmatprep.subr.bf16.mxu0 0
  %319 = vmatpush1.bf16.msra.mxu0 0
  %320 = vmatprep.subr.bf16.mxu0 0
  %321 = vmatpush1.bf16.msra.mxu0 0
  %322 = vmatprep.subr.bf16.mxu0 0
  %323 = vmatpush1.bf16.msra.mxu0 0
  %324 = vmatprep.subr.bf16.mxu0 0
  %325 = vmatpush1.bf16.msra.mxu0 %v316
  %326 = vmatprep.subr.bf16.mxu0 0
  %327 = vmatpush1.bf16.msra.mxu0 %v229
  %328 = vmatprep.subr.bf16.mxu0 0
  %329 = vmatpush1.bf16.msra.mxu0 %v228
  %330 = vmatprep.subr.bf16.mxu0 0
  %331 = vmatpush1.bf16.msra.mxu0 %v227
  %332 = vmatprep.subr.bf16.mxu0 0
  %333 = vmatpush1.bf16.msra.mxu0 %v226
  %334 = vmatprep.subr.bf16.mxu0 0
  %335 = vmatpush2.bf16.msra.mxu0 0
  %336 = vmatprep.subr.bf16.mxu0 0
  %337 = vmatpush2.bf16.msra.mxu0 0
  %338 = vmatprep.subr.bf16.mxu0 0
  %339 = vmatpush2.bf16.msra.mxu0 0
  %340 = vmatprep.subr.bf16.mxu0 0
  %341 = vmatpush2.bf16.msra.mxu0 0
  %342 = vmatprep.subr.bf16.mxu0 0
  %343 = vmatpush2.bf16.msra.mxu0 0
  %344 = vmatprep.subr.bf16.mxu0 0
  %345 = vmatpush2.bf16.msra.mxu0 0
  %346 = vmatprep.subr.bf16.mxu0 0
  %347 = vmatpush2.bf16.msra.mxu0 0
  %348 = vmatprep.subr.bf16.mxu0 0
  %349 = vmatpush2.bf16.msra.mxu0 0
  %350 = vmatprep.mubr.bf16.mxu0 0
  %351 = vmatmul.mubr.bf16.gmra.mxu0 %v237
  %v352 = vpop.f32.mrf.mxu0
  %v353 = vadd.f32 0.0, %v352
  %v354 = vpop.f32.mrf.mxu0
  %v355 = vpop.f32.mrf.mxu0
  %v356 = vadd.f32 0.0, %v355
  %v357 = vpop.f32.mrf.mxu0
  %358 = vmatprep.mubr.bf16.mxu0 0
  %359 = vmatmul.mubr.bf16.gmra.mxu0 %v240
  %v360 = vpop.f32.mrf.mxu0
  %v361 = vadd.f32 0.0, %v360
  %v362 = vpop.f32.mrf.mxu0
  %v363 = vpop.f32.mrf.mxu0
  %v364 = vadd.f32 0.0, %v363
  %v365 = vpop.f32.mrf.mxu0
  %366 = vmatprep.mubr.bf16.mxu0 0
  %367 = vmatmul.mubr.bf16.gmra.mxu0 %v243
  %v368 = vpop.f32.mrf.mxu0
  %v369 = vadd.f32 0.0, %v368
  %v370 = vpop.f32.mrf.mxu0
  %v371 = vpop.f32.mrf.mxu0
  %v372 = vadd.f32 0.0, %v371
  %v373 = vpop.f32.mrf.mxu0
  %374 = vmatprep.mubr.bf16.mxu0 0
  %375 = vmatmul.mubr.bf16.gmra.mxu0 %v246
  %v376 = vpop.f32.mrf.mxu0
  %v377 = vadd.f32 0.0, %v376
  %v378 = vpop.f32.mrf.mxu0
  %v379 = vpop.f32.mrf.mxu0
  %v380 = vadd.f32 0.0, %v379
  %v381 = vpop.f32.mrf.mxu0
  %382 = vmatprep.mubr.bf16.mxu0 0
  %383 = vmatmul.mubr.bf16.gmra.mxu0 %v249
  %v384 = vpop.f32.mrf.mxu0
  %v385 = vadd.f32 0.0, %v384
  %v386 = vpop.f32.mrf.mxu0
  %v387 = vpop.f32.mrf.mxu0
  %v388 = vadd.f32 0.0, %v387
  %v389 = vpop.f32.mrf.mxu0
  %390 = vmatprep.mubr.bf16.mxu0 0
  %391 = vmatmul.mubr.bf16.gmra.mxu0 %v252
  %v392 = vpop.f32.mrf.mxu0
  %v393 = vadd.f32 0.0, %v392
  %v394 = vpop.f32.mrf.mxu0
  %v395 = vpop.f32.mrf.mxu0
  %v396 = vadd.f32 0.0, %v395
  %v397 = vpop.f32.mrf.mxu0
  %398 = vmatprep.mubr.bf16.mxu0 0
  %399 = vmatmul.mubr.bf16.gmra.mxu0 %v255
  %v400 = vpop.f32.mrf.mxu0
  %v401 = vadd.f32 0.0, %v400
  %v402 = vpop.f32.mrf.mxu0
  %v403 = vpop.f32.mrf.mxu0
  %v404 = vadd.f32 0.0, %v403
  %v405 = vpop.f32.mrf.mxu0
  %406 = vmatprep.mubr.bf16.mxu0 0
  %407 = vmatmul.mubr.bf16.gmra.mxu0 %v258
  %v408 = vpop.f32.mrf.mxu0
  %v409 = vadd.f32 0.0, %v408
  %v410 = vpop.f32.mrf.mxu0
  %v411 = vpop.f32.mrf.mxu0
  %v412 = vadd.f32 0.0, %v411
  %v413 = vpop.f32.mrf.mxu0
  %414 = vmatprep.mubr.bf16.mxu0 0
  %415 = vmatmul.mubr.bf16.gmra.mxu0 %v261
  %v416 = vpop.f32.mrf.mxu0
  %v417 = vadd.f32 0.0, %v416
  %v418 = vpop.f32.mrf.mxu0
  %v419 = vpop.f32.mrf.mxu0
  %v420 = vadd.f32 0.0, %v419
  %v421 = vpop.f32.mrf.mxu0
  %422 = vmatprep.mubr.bf16.mxu0 0
  %423 = vmatmul.mubr.bf16.gmra.mxu0 %v264
  %v424 = vpop.f32.mrf.mxu0
  %v425 = vadd.f32 0.0, %v424
  %v426 = vpop.f32.mrf.mxu0
  %v427 = vpop.f32.mrf.mxu0
  %v428 = vadd.f32 0.0, %v427
  %v429 = vpop.f32.mrf.mxu0
  %430 = vmatprep.mubr.bf16.mxu0 0
  %431 = vmatmul.mubr.bf16.gmra.mxu0 %v267
  %v432 = vpop.f32.mrf.mxu0
  %v433 = vadd.f32 0.0, %v432
  %v434 = vpop.f32.mrf.mxu0
  %v435 = vpop.f32.mrf.mxu0
  %v436 = vadd.f32 0.0, %v435
  %v437 = vpop.f32.mrf.mxu0
  %438 = vmatprep.mubr.bf16.mxu0 0
  %439 = vmatmul.mubr.bf16.gmra.mxu0 %v270
  %v440 = vpop.f32.mrf.mxu0
  %v441 = vadd.f32 0.0, %v440
  %v442 = vpop.f32.mrf.mxu0
  %v443 = vpop.f32.mrf.mxu0
  %v444 = vadd.f32 0.0, %v443
  %v445 = vpop.f32.mrf.mxu0
  %446 = vmatprep.mubr.bf16.mxu0 0
  %447 = vmatmul.mubr.bf16.gmra.mxu0 %v273
  %v448 = vpop.f32.mrf.mxu0
  %v449 = vadd.f32 0.0, %v448
  %v450 = vpop.f32.mrf.mxu0
  %v451 = vpop.f32.mrf.mxu0
  %v452 = vadd.f32 0.0, %v451
  %v453 = vpop.f32.mrf.mxu0
  %454 = vmatprep.mubr.bf16.mxu0 0
  %455 = vmatmul.mubr.bf16.gmra.mxu0 %v276
  %v456 = vpop.f32.mrf.mxu0
  %v457 = vadd.f32 0.0, %v456
  %v458 = vpop.f32.mrf.mxu0
  %v459 = vpop.f32.mrf.mxu0
  %v460 = vadd.f32 0.0, %v459
  %v461 = vpop.f32.mrf.mxu0
  %462 = vmatprep.mubr.bf16.mxu0 0
  %463 = vmatmul.mubr.bf16.gmra.mxu0 %v279
  %v464 = vpop.f32.mrf.mxu0
  %v465 = vadd.f32 0.0, %v464
  %v466 = vpop.f32.mrf.mxu0
  %v467 = vpop.f32.mrf.mxu0
  %v468 = vadd.f32 0.0, %v467
  %v469 = vpop.f32.mrf.mxu0
  %470 = vmatprep.mubr.bf16.mxu0 0
  %471 = vmatmul.mubr.bf16.gmra.mxu0 %v282
  %v472 = vpop.f32.mrf.mxu0
  %v473 = vadd.f32 0.0, %v472
  %v474 = vpop.f32.mrf.mxu0
  %v475 = vpop.f32.mrf.mxu0
  %v476 = vadd.f32 0.0, %v475
  %v477 = vpop.f32.mrf.mxu0
  %478 = vmatprep.mubr.bf16.mxu0 0
  %479 = vmatmul.mubr.bf16.gmra.mxu0 %v285
  %v480 = vpop.f32.mrf.mxu0
  %v481 = vadd.f32 0.0, %v480
  %v482 = vpop.f32.mrf.mxu0
  %v483 = vpop.f32.mrf.mxu0
  %v484 = vadd.f32 0.0, %v483
  %v485 = vpop.f32.mrf.mxu0
  %486 = vmatprep.mubr.bf16.mxu0 0
  %487 = vmatmul.mubr.bf16.gmra.mxu0 %v288
  %v488 = vpop.f32.mrf.mxu0
  %v489 = vadd.f32 0.0, %v488
  %v490 = vpop.f32.mrf.mxu0
  %v491 = vpop.f32.mrf.mxu0
  %v492 = vadd.f32 0.0, %v491
  %v493 = vpop.f32.mrf.mxu0
  %494 = vmatprep.mubr.bf16.mxu0 0
  %495 = vmatmul.mubr.bf16.gmra.mxu0 %v291
  %v496 = vpop.f32.mrf.mxu0
  %v497 = vadd.f32 0.0, %v496
  %v498 = vpop.f32.mrf.mxu0
  %v499 = vpop.f32.mrf.mxu0
  %v500 = vadd.f32 0.0, %v499
  %v501 = vpop.f32.mrf.mxu0
  %502 = vmatprep.mubr.bf16.mxu0 0
  %503 = vmatmul.mubr.bf16.gmra.mxu0 %v294
  %v504 = vpop.f32.mrf.mxu0
  %v505 = vadd.f32 0.0, %v504
  %v506 = vpop.f32.mrf.mxu0
  %v507 = vpop.f32.mrf.mxu0
  %v508 = vadd.f32 0.0, %v507
  %v509 = vpop.f32.mrf.mxu0
  %510 = vmatprep.mubr.bf16.mxu0 0
  %511 = vmatmul.mubr.bf16.gmra.mxu0 %v297
  %v512 = vpop.f32.mrf.mxu0
  %v513 = vadd.f32 0.0, %v512
  %v514 = vpop.f32.mrf.mxu0
  %v515 = vpop.f32.mrf.mxu0
  %v516 = vadd.f32 0.0, %v515
  %v517 = vpop.f32.mrf.mxu0
  %518 = vmatprep.mubr.bf16.mxu0 0
  %519 = vmatmul.mubr.bf16.gmra.mxu0 %v300
  %v520 = vpop.f32.mrf.mxu0
  %v521 = vadd.f32 0.0, %v520
  %v522 = vpop.f32.mrf.mxu0
  %v523 = vpop.f32.mrf.mxu0
  %v524 = vadd.f32 0.0, %v523
  %v525 = vpop.f32.mrf.mxu0
  %526 = vmatprep.mubr.bf16.mxu0 0
  %527 = vmatmul.mubr.bf16.gmra.mxu0 %v303
  %v528 = vpop.f32.mrf.mxu0
  %v529 = vadd.f32 0.0, %v528
  %v530 = vpop.f32.mrf.mxu0
  %v531 = vpop.f32.mrf.mxu0
  %v532 = vadd.f32 0.0, %v531
  %v533 = vpop.f32.mrf.mxu0
  %534 = vmatprep.mubr.bf16.mxu0 0
  %535 = vmatmul.mubr.bf16.gmra.mxu0 %v306
  %v536 = vpop.f32.mrf.mxu0
  %v537 = vadd.f32 0.0, %v536
  %v538 = vpop.f32.mrf.mxu0
  %v539 = vpop.f32.mrf.mxu0
  %v540 = vadd.f32 0.0, %v539
  %v541 = vpop.f32.mrf.mxu0
  %542 = vmatprep.mubr.bf16.mxu0 0
  %543 = vmatmul.mubr.bf16.gmra.mxu0 %v309
  %v544 = vpop.f32.mrf.mxu0
  %v545 = vadd.f32 0.0, %v544
  %v546 = vpop.f32.mrf.mxu0
  %v547 = vpop.f32.mrf.mxu0
  %v548 = vpop.f32.mrf.mxu0
  %549 = vdwg.mxu0
  %v550 = vld [vmem:[%s1] sm:$0xf]
  %v551 = vld [vmem:[%s1 + $0x4] sm:$0xf]
  %v552 = vld [vmem:[%s1 + $0x8] sm:$0xf]
  %v553 = vld [vmem:[%s1 + $0xc] sm:$0xf]
  %v554 = vld [vmem:[%s1 + $0x10] sm:$0xf]
  %v555 = vld [vmem:[%s1 + $0x14] sm:$0xf]
  %v556 = vld [vmem:[%s1 + $0x18] sm:$0xf]
  %v557 = vld [vmem:[%s1 + $0x1c] sm:$0xf]
  %v558 = vld [vmem:[%s1 + $0x20] sm:$0xf]
  %v559 = vld [vmem:[%s1 + $0x24] sm:$0xf]
  %v560 = vld [vmem:[%s1 + $0x28] sm:$0xf]
  %v561 = vld [vmem:[%s1 + $0x2c] sm:$0xf]
  %v562 = vld [vmem:[%s1 + $0x30] sm:$0xf]
  %v563 = vld [vmem:[%s1 + $0x34] sm:$0xf]
  %v564 = vld [vmem:[%s1 + $0x38] sm:$0xf]
  %v565 = vld [vmem:[%s1 + $0x3c] sm:$0xf]
  %v566 = vld [vmem:[%s1 + $0x40] sm:$0xf]
  %v567 = vld [vmem:[%s1 + $0x44] sm:$0xf]
  %v568 = vld [vmem:[%s1 + $0x48] sm:$0xf]
  %v569 = vld [vmem:[%s1 + $0x4c] sm:$0xf]
  %v570 = vld [vmem:[%s1 + $0x50] sm:$0xf]
  %v571 = vld [vmem:[%s1 + $0x54] sm:$0xf]
  %v572 = vld [vmem:[%s1 + $0x58] sm:$0xf]
  %v573 = vld [vmem:[%s1 + $0x5c] sm:$0xf]
  %v574 = vld [vmem:[%s1 + $0x60] sm:$0xf]
  %v575 = vld [vmem:[%s1 + $0x64] sm:$0xf]
  %v576 = vld [vmem:[%s1 + $0x68] sm:$0xf]
  %v577 = vld [vmem:[%s1 + $0x6c] sm:$0xf]
  %v578 = vld [vmem:[%s1 + $0x70] sm:$0xf]
  %v579 = vld [vmem:[%s1 + $0x74] sm:$0xf]
  %v580 = vld [vmem:[%s1 + $0x78] sm:$0xf]
  %v581 = vld [vmem:[%s1 + $0x7c] sm:$0xf]
  %v582 = vld [vmem:[%s1 + $0x80] sm:$0xf]
  %v583 = vld [vmem:[%s1 + $0x84] sm:$0xf]
  %v584 = vld [vmem:[%s1 + $0x88] sm:$0xf]
  %v585 = vld [vmem:[%s1 + $0x8c] sm:$0xf]
  %v586 = vld [vmem:[%s1 + $0x90] sm:$0xf]
  %v587 = vld [vmem:[%s1 + $0x94] sm:$0xf]
  %v588 = vld [vmem:[%s1 + $0x98] sm:$0xf]
  %v589 = vld [vmem:[%s1 + $0x9c] sm:$0xf]
  %v590 = vld [vmem:[%s1 + $0xa0] sm:$0xf]
  %v591 = vld [vmem:[%s1 + $0xa4] sm:$0xf]
  %v592 = vld [vmem:[%s1 + $0xa8] sm:$0xf]
  %v593 = vld [vmem:[%s1 + $0xac] sm:$0xf]
  %v594 = vld [vmem:[%s1 + $0xb0] sm:$0xf]
  %v595 = vld [vmem:[%s1 + $0xb4] sm:$0xf]
  %v596 = vld [vmem:[%s1 + $0xb8] sm:$0xf]
  %v597 = vld [vmem:[%s1 + $0xbc] sm:$0xf]
  %v598 = vld [vmem:[%s1 + $0xc0] sm:$0xf]
  %v648 = vunpack.c.l.b16 %v550
  %v649 = vunpack.c.l.b16 %v551
  %v650 = vunpack.c.l.b16 %v552
  %v651 = vunpack.c.l.b16 %v553
  %v652 = vunpack.c.l.b16 %v554
  %v653 = vunpack.c.l.b16 %v555
  %v654 = vunpack.c.l.b16 %v556
  %v655 = vunpack.c.l.b16 %v557
  %v656 = vunpack.c.l.b16 %v558
  %v657 = vunpack.c.l.b16 %v559
  %v658 = vunpack.c.l.b16 %v560
  %v659 = vunpack.c.l.b16 %v561
  %v660 = vunpack.c.l.b16 %v562
  %v661 = vunpack.c.l.b16 %v563
  %v662 = vunpack.c.l.b16 %v564
  %v663 = vunpack.c.l.b16 %v565
  %v664 = vunpack.c.l.b16 %v566
  %v665 = vunpack.c.l.b16 %v567
  %v666 = vunpack.c.l.b16 %v568
  %v667 = vunpack.c.l.b16 %v569
  %v668 = vunpack.c.l.b16 %v570
  %v669 = vunpack.c.l.b16 %v571
  %v670 = vunpack.c.l.b16 %v572
  %v671 = vunpack.c.l.b16 %v573
  %v672 = vunpack.c.l.b16 %v574
  %v673 = vunpack.c.l.b16 %v575
  %v674 = vunpack.c.l.b16 %v576
  %v675 = vunpack.c.l.b16 %v577
  %v676 = vunpack.c.l.b16 %v578
  %v677 = vunpack.c.l.b16 %v579
  %v678 = vunpack.c.l.b16 %v580
  %v679 = vunpack.c.l.b16 %v581
  %v680 = vunpack.c.l.b16 %v582
  %v681 = vunpack.c.l.b16 %v583
  %v682 = vunpack.c.l.b16 %v584
  %v683 = vunpack.c.l.b16 %v585
  %v684 = vunpack.c.l.b16 %v586
  %v685 = vunpack.c.l.b16 %v587
  %v686 = vunpack.c.l.b16 %v588
  %v687 = vunpack.c.l.b16 %v589
  %v688 = vunpack.c.l.b16 %v590
  %v689 = vunpack.c.l.b16 %v591
  %v690 = vunpack.c.l.b16 %v592
  %v691 = vunpack.c.l.b16 %v593
  %v692 = vunpack.c.l.b16 %v594
  %v693 = vunpack.c.l.b16 %v595
  %v694 = vunpack.c.l.b16 %v596
  %v695 = vunpack.c.l.b16 %v597
  %v696 = vunpack.c.l.b16 %v598
  %v697 = vpack.c.b16 %v649, %v648
  %v698 = vpack.c.b16 %v651, %v650
  %v699 = vpack.c.b16 %v653, %v652
  %v700 = vpack.c.b16 %v655, %v654
  %v701 = vpack.c.b16 %v657, %v656
  %v702 = vpack.c.b16 %v659, %v658
  %v703 = vpack.c.b16 %v661, %v660
  %v704 = vpack.c.b16 %v663, %v662
  %v705 = vpack.c.b16 %v665, %v664
  %v706 = vpack.c.b16 %v667, %v666
  %v707 = vpack.c.b16 %v669, %v668
  %v708 = vpack.c.b16 %v671, %v670
  %v709 = vpack.c.b16 %v673, %v672
  %v710 = vpack.c.b16 %v675, %v674
  %v711 = vpack.c.b16 %v677, %v676
  %v712 = vpack.c.b16 %v679, %v678
  %v713 = vpack.c.b16 %v681, %v680
  %v714 = vpack.c.b16 %v683, %v682
  %v715 = vpack.c.b16 %v685, %v684
  %v716 = vpack.c.b16 %v687, %v686
  %v717 = vpack.c.b16 %v689, %v688
  %v718 = vpack.c.b16 %v691, %v690
  %v719 = vpack.c.b16 %v693, %v692
  %v720 = vpack.c.b16 %v695, %v694
  %v721 = vpack.c.b16 %v696, %v696
  %v723 = vsel %vm235, %v697, 0
  %v726 = vsel %vm235, %v698, 0
  %v729 = vsel %vm235, %v699, 0
  %v732 = vsel %vm235, %v700, 0
  %v735 = vsel %vm235, %v701, 0
  %v738 = vsel %vm235, %v702, 0
  %v741 = vsel %vm235, %v703, 0
  %v744 = vsel %vm235, %v704, 0
  %v747 = vsel %vm235, %v705, 0
  %v750 = vsel %vm235, %v706, 0
  %v753 = vsel %vm235, %v707, 0
  %v756 = vsel %vm235, %v708, 0
  %v759 = vsel %vm235, %v709, 0
  %v762 = vsel %vm235, %v710, 0
  %v765 = vsel %vm235, %v711, 0
  %v768 = vsel %vm235, %v712, 0
  %v771 = vsel %vm235, %v713, 0
  %v774 = vsel %vm235, %v714, 0
  %v777 = vsel %vm235, %v715, 0
  %v780 = vsel %vm235, %v716, 0
  %v783 = vsel %vm235, %v717, 0
  %v786 = vsel %vm235, %v718, 0
  %v789 = vsel %vm235, %v719, 0
  %v792 = vsel %vm235, %v720, 0
  %v795 = vsel %vm235, %v721, 0
  %797 = vmatprep.subr.bf16.mxu0 0
  %798 = vmatpush1.bf16.msra.mxu0 0
  %799 = vmatprep.subr.bf16.mxu0 0
  %800 = vmatpush1.bf16.msra.mxu0 0
  %801 = vmatprep.subr.bf16.mxu0 0
  %802 = vmatpush1.bf16.msra.mxu0 0
  %803 = vmatprep.subr.bf16.mxu0 0
  %804 = vmatpush1.bf16.msra.mxu0 %v316
  %805 = vmatprep.subr.bf16.mxu0 0
  %806 = vmatpush1.bf16.msra.mxu0 %v229
  %807 = vmatprep.subr.bf16.mxu0 0
  %808 = vmatpush1.bf16.msra.mxu0 %v228
  %809 = vmatprep.subr.bf16.mxu0 0
  %810 = vmatpush1.bf16.msra.mxu0 %v227
  %811 = vmatprep.subr.bf16.mxu0 0
  %812 = vmatpush1.bf16.msra.mxu0 %v226
  %813 = vmatprep.subr.bf16.mxu0 0
  %814 = vmatpush2.bf16.msra.mxu0 0
  %815 = vmatprep.subr.bf16.mxu0 0
  %816 = vmatpush2.bf16.msra.mxu0 0
  %817 = vmatprep.subr.bf16.mxu0 0
  %818 = vmatpush2.bf16.msra.mxu0 0
  %819 = vmatprep.subr.bf16.mxu0 0
  %820 = vmatpush2.bf16.msra.mxu0 0
  %821 = vmatprep.subr.bf16.mxu0 0
  %822 = vmatpush2.bf16.msra.mxu0 0
  %823 = vmatprep.subr.bf16.mxu0 0
  %824 = vmatpush2.bf16.msra.mxu0 0
  %825 = vmatprep.subr.bf16.mxu0 0
  %826 = vmatpush2.bf16.msra.mxu0 0
  %827 = vmatprep.subr.bf16.mxu0 0
  %828 = vmatpush2.bf16.msra.mxu0 0
  %829 = vmatprep.mubr.bf16.mxu0 0
  %830 = vmatmul.mubr.bf16.gmra.mxu0 %v723
  %v831 = vpop.f32.mrf.mxu0
  %v832 = vadd.f32 0.0, %v831
  %v833 = vpop.f32.mrf.mxu0
  %v834 = vpop.f32.mrf.mxu0
  %v835 = vadd.f32 0.0, %v834
  %v836 = vpop.f32.mrf.mxu0
  %837 = vmatprep.mubr.bf16.mxu0 0
  %838 = vmatmul.mubr.bf16.gmra.mxu0 %v726
  %v839 = vpop.f32.mrf.mxu0
  %v840 = vadd.f32 0.0, %v839
  %v841 = vpop.f32.mrf.mxu0
  %v842 = vpop.f32.mrf.mxu0
  %v843 = vadd.f32 0.0, %v842
  %v844 = vpop.f32.mrf.mxu0
  %845 = vmatprep.mubr.bf16.mxu0 0
  %846 = vmatmul.mubr.bf16.gmra.mxu0 %v729
  %v847 = vpop.f32.mrf.mxu0
  %v848 = vadd.f32 0.0, %v847
  %v849 = vpop.f32.mrf.mxu0
  %v850 = vpop.f32.mrf.mxu0
  %v851 = vadd.f32 0.0, %v850
  %v852 = vpop.f32.mrf.mxu0
  %853 = vmatprep.mubr.bf16.mxu0 0
  %854 = vmatmul.mubr.bf16.gmra.mxu0 %v732
  %v855 = vpop.f32.mrf.mxu0
  %v856 = vadd.f32 0.0, %v855
  %v857 = vpop.f32.mrf.mxu0
  %v858 = vpop.f32.mrf.mxu0
  %v859 = vadd.f32 0.0, %v858
  %v860 = vpop.f32.mrf.mxu0
  %861 = vmatprep.mubr.bf16.mxu0 0
  %862 = vmatmul.mubr.bf16.gmra.mxu0 %v735
  %v863 = vpop.f32.mrf.mxu0
  %v864 = vadd.f32 0.0, %v863
  %v865 = vpop.f32.mrf.mxu0
  %v866 = vpop.f32.mrf.mxu0
  %v867 = vadd.f32 0.0, %v866
  %v868 = vpop.f32.mrf.mxu0
  %869 = vmatprep.mubr.bf16.mxu0 0
  %870 = vmatmul.mubr.bf16.gmra.mxu0 %v738
  %v871 = vpop.f32.mrf.mxu0
  %v872 = vadd.f32 0.0, %v871
  %v873 = vpop.f32.mrf.mxu0
  %v874 = vpop.f32.mrf.mxu0
  %v875 = vadd.f32 0.0, %v874
  %v876 = vpop.f32.mrf.mxu0
  %877 = vmatprep.mubr.bf16.mxu0 0
  %878 = vmatmul.mubr.bf16.gmra.mxu0 %v741
  %v879 = vpop.f32.mrf.mxu0
  %v880 = vadd.f32 0.0, %v879
  %v881 = vpop.f32.mrf.mxu0
  %v882 = vpop.f32.mrf.mxu0
  %v883 = vadd.f32 0.0, %v882
  %v884 = vpop.f32.mrf.mxu0
  %885 = vmatprep.mubr.bf16.mxu0 0
  %886 = vmatmul.mubr.bf16.gmra.mxu0 %v744
  %v887 = vpop.f32.mrf.mxu0
  %v888 = vadd.f32 0.0, %v887
  %v889 = vpop.f32.mrf.mxu0
  %v890 = vpop.f32.mrf.mxu0
  %v891 = vadd.f32 0.0, %v890
  %v892 = vpop.f32.mrf.mxu0
  %893 = vmatprep.mubr.bf16.mxu0 0
  %894 = vmatmul.mubr.bf16.gmra.mxu0 %v747
  %v895 = vpop.f32.mrf.mxu0
  %v896 = vadd.f32 0.0, %v895
  %v897 = vpop.f32.mrf.mxu0
  %v898 = vpop.f32.mrf.mxu0
  %v899 = vadd.f32 0.0, %v898
  %v900 = vpop.f32.mrf.mxu0
  %901 = vmatprep.mubr.bf16.mxu0 0
  %902 = vmatmul.mubr.bf16.gmra.mxu0 %v750
  %v903 = vpop.f32.mrf.mxu0
  %v904 = vadd.f32 0.0, %v903
  %v905 = vpop.f32.mrf.mxu0
  %v906 = vpop.f32.mrf.mxu0
  %v907 = vadd.f32 0.0, %v906
  %v908 = vpop.f32.mrf.mxu0
  %909 = vmatprep.mubr.bf16.mxu0 0
  %910 = vmatmul.mubr.bf16.gmra.mxu0 %v753
  %v911 = vpop.f32.mrf.mxu0
  %v912 = vadd.f32 0.0, %v911
  %v913 = vpop.f32.mrf.mxu0
  %v914 = vpop.f32.mrf.mxu0
  %v915 = vadd.f32 0.0, %v914
  %v916 = vpop.f32.mrf.mxu0
  %917 = vmatprep.mubr.bf16.mxu0 0
  %918 = vmatmul.mubr.bf16.gmra.mxu0 %v756
  %v919 = vpop.f32.mrf.mxu0
  %v920 = vadd.f32 0.0, %v919
  %v921 = vpop.f32.mrf.mxu0
  %v922 = vpop.f32.mrf.mxu0
  %v923 = vadd.f32 0.0, %v922
  %v924 = vpop.f32.mrf.mxu0
  %925 = vmatprep.mubr.bf16.mxu0 0
  %926 = vmatmul.mubr.bf16.gmra.mxu0 %v759
  %v927 = vpop.f32.mrf.mxu0
  %v928 = vadd.f32 0.0, %v927
  %v929 = vpop.f32.mrf.mxu0
  %v930 = vpop.f32.mrf.mxu0
  %v931 = vadd.f32 0.0, %v930
  %v932 = vpop.f32.mrf.mxu0
  %933 = vmatprep.mubr.bf16.mxu0 0
  %934 = vmatmul.mubr.bf16.gmra.mxu0 %v762
  %v935 = vpop.f32.mrf.mxu0
  %v936 = vadd.f32 0.0, %v935
  %v937 = vpop.f32.mrf.mxu0
  %v938 = vpop.f32.mrf.mxu0
  %v939 = vadd.f32 0.0, %v938
  %v940 = vpop.f32.mrf.mxu0
  %941 = vmatprep.mubr.bf16.mxu0 0
  %942 = vmatmul.mubr.bf16.gmra.mxu0 %v765
  %v943 = vpop.f32.mrf.mxu0
  %v944 = vadd.f32 0.0, %v943
  %v945 = vpop.f32.mrf.mxu0
  %v946 = vpop.f32.mrf.mxu0
  %v947 = vadd.f32 0.0, %v946
  %v948 = vpop.f32.mrf.mxu0
  %949 = vmatprep.mubr.bf16.mxu0 0
  %950 = vmatmul.mubr.bf16.gmra.mxu0 %v768
  %v951 = vpop.f32.mrf.mxu0
  %v952 = vadd.f32 0.0, %v951
  %v953 = vpop.f32.mrf.mxu0
  %v954 = vpop.f32.mrf.mxu0
  %v955 = vadd.f32 0.0, %v954
  %v956 = vpop.f32.mrf.mxu0
  %957 = vmatprep.mubr.bf16.mxu0 0
  %958 = vmatmul.mubr.bf16.gmra.mxu0 %v771
  %v959 = vpop.f32.mrf.mxu0
  %v960 = vadd.f32 0.0, %v959
  %v961 = vpop.f32.mrf.mxu0
  %v962 = vpop.f32.mrf.mxu0
  %v963 = vadd.f32 0.0, %v962
  %v964 = vpop.f32.mrf.mxu0
  %965 = vmatprep.mubr.bf16.mxu0 0
  %966 = vmatmul.mubr.bf16.gmra.mxu0 %v774
  %v967 = vpop.f32.mrf.mxu0
  %v968 = vadd.f32 0.0, %v967
  %v969 = vpop.f32.mrf.mxu0
  %v970 = vpop.f32.mrf.mxu0
  %v971 = vadd.f32 0.0, %v970
  %v972 = vpop.f32.mrf.mxu0
  %973 = vmatprep.mubr.bf16.mxu0 0
  %974 = vmatmul.mubr.bf16.gmra.mxu0 %v777
  %v975 = vpop.f32.mrf.mxu0
  %v976 = vadd.f32 0.0, %v975
  %v977 = vpop.f32.mrf.mxu0
  %v978 = vpop.f32.mrf.mxu0
  %v979 = vadd.f32 0.0, %v978
  %v980 = vpop.f32.mrf.mxu0
  %981 = vmatprep.mubr.bf16.mxu0 0
  %982 = vmatmul.mubr.bf16.gmra.mxu0 %v780
  %v983 = vpop.f32.mrf.mxu0
  %v984 = vadd.f32 0.0, %v983
  %v985 = vpop.f32.mrf.mxu0
  %v986 = vpop.f32.mrf.mxu0
  %v987 = vadd.f32 0.0, %v986
  %v988 = vpop.f32.mrf.mxu0
  %989 = vmatprep.mubr.bf16.mxu0 0
  %990 = vmatmul.mubr.bf16.gmra.mxu0 %v783
  %v991 = vpop.f32.mrf.mxu0
  %v992 = vadd.f32 0.0, %v991
  %v993 = vpop.f32.mrf.mxu0
  %v994 = vpop.f32.mrf.mxu0
  %v995 = vadd.f32 0.0, %v994
  %v996 = vpop.f32.mrf.mxu0
  %997 = vmatprep.mubr.bf16.mxu0 0
  %998 = vmatmul.mubr.bf16.gmra.mxu0 %v786
  %v999 = vpop.f32.mrf.mxu0
  %v1000 = vadd.f32 0.0, %v999
  %v1001 = vpop.f32.mrf.mxu0
  %v1002 = vpop.f32.mrf.mxu0
  %v1003 = vadd.f32 0.0, %v1002
  %v1004 = vpop.f32.mrf.mxu0
  %1005 = vmatprep.mubr.bf16.mxu0 0
  %1006 = vmatmul.mubr.bf16.gmra.mxu0 %v789
  %v1007 = vpop.f32.mrf.mxu0
  %v1008 = vadd.f32 0.0, %v1007
  %v1009 = vpop.f32.mrf.mxu0
  %v1010 = vpop.f32.mrf.mxu0
  %v1011 = vadd.f32 0.0, %v1010
  %v1012 = vpop.f32.mrf.mxu0
  %1013 = vmatprep.mubr.bf16.mxu0 0
  %1014 = vmatmul.mubr.bf16.gmra.mxu0 %v792
  %v1015 = vpop.f32.mrf.mxu0
  %v1016 = vadd.f32 0.0, %v1015
  %v1017 = vpop.f32.mrf.mxu0
  %v1018 = vpop.f32.mrf.mxu0
  %v1019 = vadd.f32 0.0, %v1018
  %v1020 = vpop.f32.mrf.mxu0
  %1021 = vmatprep.mubr.bf16.mxu0 0
  %1022 = vmatmul.mubr.bf16.gmra.mxu0 %v795
  %v1023 = vpop.f32.mrf.mxu0
  %v1024 = vadd.f32 0.0, %v1023
  %v1025 = vpop.f32.mrf.mxu0
  %v1026 = vpop.f32.mrf.mxu0
  %v1027 = vpop.f32.mrf.mxu0
  %1028 = vdwg.mxu0
  %v1029 = vmax.f32 %v353, %v832
  %v1030 = vmax.f32 %v356, %v835
  %v1031 = vmax.f32 %v361, %v840
  %v1032 = vmax.f32 %v364, %v843
  %v1033 = vmax.f32 %v369, %v848
  %v1034 = vmax.f32 %v372, %v851
  %v1035 = vmax.f32 %v377, %v856
  %v1036 = vmax.f32 %v380, %v859
  %v1037 = vmax.f32 %v385, %v864
  %v1038 = vmax.f32 %v388, %v867
  %v1039 = vmax.f32 %v393, %v872
  %v1040 = vmax.f32 %v396, %v875
  %v1041 = vmax.f32 %v401, %v880
  %v1042 = vmax.f32 %v404, %v883
  %v1043 = vmax.f32 %v409, %v888
  %v1044 = vmax.f32 %v412, %v891
  %v1045 = vmax.f32 %v417, %v896
  %v1046 = vmax.f32 %v420, %v899
  %v1047 = vmax.f32 %v425, %v904
  %v1048 = vmax.f32 %v428, %v907
  %v1049 = vmax.f32 %v433, %v912
  %v1050 = vmax.f32 %v436, %v915
  %v1051 = vmax.f32 %v441, %v920
  %v1052 = vmax.f32 %v444, %v923
  %v1053 = vmax.f32 %v449, %v928
  %v1054 = vmax.f32 %v452, %v931
  %v1055 = vmax.f32 %v457, %v936
  %v1056 = vmax.f32 %v460, %v939
  %v1057 = vmax.f32 %v465, %v944
  %v1058 = vmax.f32 %v468, %v947
  %v1059 = vmax.f32 %v473, %v952
  %v1060 = vmax.f32 %v476, %v955
  %v1061 = vmax.f32 %v481, %v960
  %v1062 = vmax.f32 %v484, %v963
  %v1063 = vmax.f32 %v489, %v968
  %v1064 = vmax.f32 %v492, %v971
  %v1065 = vmax.f32 %v497, %v976
  %v1066 = vmax.f32 %v500, %v979
  %v1067 = vmax.f32 %v505, %v984
  %v1068 = vmax.f32 %v508, %v987
  %v1069 = vmax.f32 %v513, %v992
  %v1070 = vmax.f32 %v516, %v995
  %v1071 = vmax.f32 %v521, %v1000
  %v1072 = vmax.f32 %v524, %v1003
  %v1073 = vmax.f32 %v529, %v1008
  %v1074 = vmax.f32 %v532, %v1011
  %v1075 = vmax.f32 %v537, %v1016
  %v1076 = vmax.f32 %v540, %v1019
  %v1077 = vmax.f32 %v545, %v1024
  %v1078 = vld [vmem:[%s2] sm:$0xf]
  %v1079 = vld [vmem:[%s2 + $0x4] sm:$0xf]
  %v1080 = vld [vmem:[%s2 + $0x8] sm:$0xf]
  %v1081 = vld [vmem:[%s2 + $0xc] sm:$0xf]
  %v1082 = vld [vmem:[%s2 + $0x10] sm:$0xf]
  %v1083 = vld [vmem:[%s2 + $0x14] sm:$0xf]
  %v1084 = vld [vmem:[%s2 + $0x18] sm:$0xf]
  %v1085 = vld [vmem:[%s2 + $0x1c] sm:$0xf]
  %v1086 = vld [vmem:[%s2 + $0x20] sm:$0xf]
  %v1087 = vld [vmem:[%s2 + $0x24] sm:$0xf]
  %v1088 = vld [vmem:[%s2 + $0x28] sm:$0xf]
  %v1089 = vld [vmem:[%s2 + $0x2c] sm:$0xf]
  %v1090 = vld [vmem:[%s2 + $0x30] sm:$0xf]
  %v1091 = vld [vmem:[%s2 + $0x34] sm:$0xf]
  %v1092 = vld [vmem:[%s2 + $0x38] sm:$0xf]
  %v1093 = vld [vmem:[%s2 + $0x3c] sm:$0xf]
  %v1094 = vld [vmem:[%s2 + $0x40] sm:$0xf]
  %v1095 = vld [vmem:[%s2 + $0x44] sm:$0xf]
  %v1096 = vld [vmem:[%s2 + $0x48] sm:$0xf]
  %v1097 = vld [vmem:[%s2 + $0x4c] sm:$0xf]
  %v1098 = vld [vmem:[%s2 + $0x50] sm:$0xf]
  %v1099 = vld [vmem:[%s2 + $0x54] sm:$0xf]
  %v1100 = vld [vmem:[%s2 + $0x58] sm:$0xf]
  %v1101 = vld [vmem:[%s2 + $0x5c] sm:$0xf]
  %v1102 = vld [vmem:[%s2 + $0x60] sm:$0xf]
  %v1103 = vld [vmem:[%s2 + $0x64] sm:$0xf]
  %v1104 = vld [vmem:[%s2 + $0x68] sm:$0xf]
  %v1105 = vld [vmem:[%s2 + $0x6c] sm:$0xf]
  %v1106 = vld [vmem:[%s2 + $0x70] sm:$0xf]
  %v1107 = vld [vmem:[%s2 + $0x74] sm:$0xf]
  %v1108 = vld [vmem:[%s2 + $0x78] sm:$0xf]
  %v1109 = vld [vmem:[%s2 + $0x7c] sm:$0xf]
  %v1110 = vld [vmem:[%s2 + $0x80] sm:$0xf]
  %v1111 = vld [vmem:[%s2 + $0x84] sm:$0xf]
  %v1112 = vld [vmem:[%s2 + $0x88] sm:$0xf]
  %v1113 = vld [vmem:[%s2 + $0x8c] sm:$0xf]
  %v1114 = vld [vmem:[%s2 + $0x90] sm:$0xf]
  %v1115 = vld [vmem:[%s2 + $0x94] sm:$0xf]
  %v1116 = vld [vmem:[%s2 + $0x98] sm:$0xf]
  %v1117 = vld [vmem:[%s2 + $0x9c] sm:$0xf]
  %v1118 = vld [vmem:[%s2 + $0xa0] sm:$0xf]
  %v1119 = vld [vmem:[%s2 + $0xa4] sm:$0xf]
  %v1120 = vld [vmem:[%s2 + $0xa8] sm:$0xf]
  %v1121 = vld [vmem:[%s2 + $0xac] sm:$0xf]
  %v1122 = vld [vmem:[%s2 + $0xb0] sm:$0xf]
  %v1123 = vld [vmem:[%s2 + $0xb4] sm:$0xf]
  %v1124 = vld [vmem:[%s2 + $0xb8] sm:$0xf]
  %v1125 = vld [vmem:[%s2 + $0xbc] sm:$0xf]
  %v1126 = vld [vmem:[%s2 + $0xc0] sm:$0xf]
  %v1176 = vunpack.c.l.b16 %v1078
  %v1177 = vunpack.c.l.b16 %v1079
  %v1178 = vunpack.c.l.b16 %v1080
  %v1179 = vunpack.c.l.b16 %v1081
  %v1180 = vunpack.c.l.b16 %v1082
  %v1181 = vunpack.c.l.b16 %v1083
  %v1182 = vunpack.c.l.b16 %v1084
  %v1183 = vunpack.c.l.b16 %v1085
  %v1184 = vunpack.c.l.b16 %v1086
  %v1185 = vunpack.c.l.b16 %v1087
  %v1186 = vunpack.c.l.b16 %v1088
  %v1187 = vunpack.c.l.b16 %v1089
  %v1188 = vunpack.c.l.b16 %v1090
  %v1189 = vunpack.c.l.b16 %v1091
  %v1190 = vunpack.c.l.b16 %v1092
  %v1191 = vunpack.c.l.b16 %v1093
  %v1192 = vunpack.c.l.b16 %v1094
  %v1193 = vunpack.c.l.b16 %v1095
  %v1194 = vunpack.c.l.b16 %v1096
  %v1195 = vunpack.c.l.b16 %v1097
  %v1196 = vunpack.c.l.b16 %v1098
  %v1197 = vunpack.c.l.b16 %v1099
  %v1198 = vunpack.c.l.b16 %v1100
  %v1199 = vunpack.c.l.b16 %v1101
  %v1200 = vunpack.c.l.b16 %v1102
  %v1201 = vunpack.c.l.b16 %v1103
  %v1202 = vunpack.c.l.b16 %v1104
  %v1203 = vunpack.c.l.b16 %v1105
  %v1204 = vunpack.c.l.b16 %v1106
  %v1205 = vunpack.c.l.b16 %v1107
  %v1206 = vunpack.c.l.b16 %v1108
  %v1207 = vunpack.c.l.b16 %v1109
  %v1208 = vunpack.c.l.b16 %v1110
  %v1209 = vunpack.c.l.b16 %v1111
  %v1210 = vunpack.c.l.b16 %v1112
  %v1211 = vunpack.c.l.b16 %v1113
  %v1212 = vunpack.c.l.b16 %v1114
  %v1213 = vunpack.c.l.b16 %v1115
  %v1214 = vunpack.c.l.b16 %v1116
  %v1215 = vunpack.c.l.b16 %v1117
  %v1216 = vunpack.c.l.b16 %v1118
  %v1217 = vunpack.c.l.b16 %v1119
  %v1218 = vunpack.c.l.b16 %v1120
  %v1219 = vunpack.c.l.b16 %v1121
  %v1220 = vunpack.c.l.b16 %v1122
  %v1221 = vunpack.c.l.b16 %v1123
  %v1222 = vunpack.c.l.b16 %v1124
  %v1223 = vunpack.c.l.b16 %v1125
  %v1224 = vunpack.c.l.b16 %v1126
  %v1225 = vpack.c.b16 %v1177, %v1176
  %v1226 = vpack.c.b16 %v1179, %v1178
  %v1227 = vpack.c.b16 %v1181, %v1180
  %v1228 = vpack.c.b16 %v1183, %v1182
  %v1229 = vpack.c.b16 %v1185, %v1184
  %v1230 = vpack.c.b16 %v1187, %v1186
  %v1231 = vpack.c.b16 %v1189, %v1188
  %v1232 = vpack.c.b16 %v1191, %v1190
  %v1233 = vpack.c.b16 %v1193, %v1192
  %v1234 = vpack.c.b16 %v1195, %v1194
  %v1235 = vpack.c.b16 %v1197, %v1196
  %v1236 = vpack.c.b16 %v1199, %v1198
  %v1237 = vpack.c.b16 %v1201, %v1200
  %v1238 = vpack.c.b16 %v1203, %v1202
  %v1239 = vpack.c.b16 %v1205, %v1204
  %v1240 = vpack.c.b16 %v1207, %v1206
  %v1241 = vpack.c.b16 %v1209, %v1208
  %v1242 = vpack.c.b16 %v1211, %v1210
  %v1243 = vpack.c.b16 %v1213, %v1212
  %v1244 = vpack.c.b16 %v1215, %v1214
  %v1245 = vpack.c.b16 %v1217, %v1216
  %v1246 = vpack.c.b16 %v1219, %v1218
  %v1247 = vpack.c.b16 %v1221, %v1220
  %v1248 = vpack.c.b16 %v1223, %v1222
  %v1249 = vpack.c.b16 %v1224, %v1224
  %v1251 = vsel %vm235, %v1225, 0
  %v1254 = vsel %vm235, %v1226, 0
  %v1257 = vsel %vm235, %v1227, 0
  %v1260 = vsel %vm235, %v1228, 0
  %v1263 = vsel %vm235, %v1229, 0
  %v1266 = vsel %vm235, %v1230, 0
  %v1269 = vsel %vm235, %v1231, 0
  %v1272 = vsel %vm235, %v1232, 0
  %v1275 = vsel %vm235, %v1233, 0
  %v1278 = vsel %vm235, %v1234, 0
  %v1281 = vsel %vm235, %v1235, 0
  %v1284 = vsel %vm235, %v1236, 0
  %v1287 = vsel %vm235, %v1237, 0
  %v1290 = vsel %vm235, %v1238, 0
  %v1293 = vsel %vm235, %v1239, 0
  %v1296 = vsel %vm235, %v1240, 0
  %v1299 = vsel %vm235, %v1241, 0
  %v1302 = vsel %vm235, %v1242, 0
  %v1305 = vsel %vm235, %v1243, 0
  %v1308 = vsel %vm235, %v1244, 0
  %v1311 = vsel %vm235, %v1245, 0
  %v1314 = vsel %vm235, %v1246, 0
  %v1317 = vsel %vm235, %v1247, 0
  %v1320 = vsel %vm235, %v1248, 0
  %v1323 = vsel %vm235, %v1249, 0
  %1325 = vmatprep.subr.bf16.mxu0 0
  %1326 = vmatpush1.bf16.msra.mxu0 0
  %1327 = vmatprep.subr.bf16.mxu0 0
  %1328 = vmatpush1.bf16.msra.mxu0 0
  %1329 = vmatprep.subr.bf16.mxu0 0
  %1330 = vmatpush1.bf16.msra.mxu0 0
  %1331 = vmatprep.subr.bf16.mxu0 0
  %1332 = vmatpush1.bf16.msra.mxu0 %v316
  %1333 = vmatprep.subr.bf16.mxu0 0
  %1334 = vmatpush1.bf16.msra.mxu0 %v229
  %1335 = vmatprep.subr.bf16.mxu0 0
  %1336 = vmatpush1.bf16.msra.mxu0 %v228
  %1337 = vmatprep.subr.bf16.mxu0 0
  %1338 = vmatpush1.bf16.msra.mxu0 %v227
  %1339 = vmatprep.subr.bf16.mxu0 0
  %1340 = vmatpush1.bf16.msra.mxu0 %v226
  %1341 = vmatprep.subr.bf16.mxu0 0
  %1342 = vmatpush2.bf16.msra.mxu0 0
  %1343 = vmatprep.subr.bf16.mxu0 0
  %1344 = vmatpush2.bf16.msra.mxu0 0
  %1345 = vmatprep.subr.bf16.mxu0 0
  %1346 = vmatpush2.bf16.msra.mxu0 0
  %1347 = vmatprep.subr.bf16.mxu0 0
  %1348 = vmatpush2.bf16.msra.mxu0 0
  %1349 = vmatprep.subr.bf16.mxu0 0
  %1350 = vmatpush2.bf16.msra.mxu0 0
  %1351 = vmatprep.subr.bf16.mxu0 0
  %1352 = vmatpush2.bf16.msra.mxu0 0
  %1353 = vmatprep.subr.bf16.mxu0 0
  %1354 = vmatpush2.bf16.msra.mxu0 0
  %1355 = vmatprep.subr.bf16.mxu0 0
  %1356 = vmatpush2.bf16.msra.mxu0 0
  %1357 = vmatprep.mubr.bf16.mxu0 0
  %1358 = vmatmul.mubr.bf16.gmra.mxu0 %v1251
  %v1359 = vpop.f32.mrf.mxu0
  %v1360 = vadd.f32 0.0, %v1359
  %v1361 = vpop.f32.mrf.mxu0
  %v1362 = vpop.f32.mrf.mxu0
  %v1363 = vadd.f32 0.0, %v1362
  %v1364 = vpop.f32.mrf.mxu0
  %1365 = vmatprep.mubr.bf16.mxu0 0
  %1366 = vmatmul.mubr.bf16.gmra.mxu0 %v1254
  %v1367 = vpop.f32.mrf.mxu0
  %v1368 = vadd.f32 0.0, %v1367
  %v1369 = vpop.f32.mrf.mxu0
  %v1370 = vpop.f32.mrf.mxu0
  %v1371 = vadd.f32 0.0, %v1370
  %v1372 = vpop.f32.mrf.mxu0
  %1373 = vmatprep.mubr.bf16.mxu0 0
  %1374 = vmatmul.mubr.bf16.gmra.mxu0 %v1257
  %v1375 = vpop.f32.mrf.mxu0
  %v1376 = vadd.f32 0.0, %v1375
  %v1377 = vpop.f32.mrf.mxu0
  %v1378 = vpop.f32.mrf.mxu0
  %v1379 = vadd.f32 0.0, %v1378
  %v1380 = vpop.f32.mrf.mxu0
  %1381 = vmatprep.mubr.bf16.mxu0 0
  %1382 = vmatmul.mubr.bf16.gmra.mxu0 %v1260
  %v1383 = vpop.f32.mrf.mxu0
  %v1384 = vadd.f32 0.0, %v1383
  %v1385 = vpop.f32.mrf.mxu0
  %v1386 = vpop.f32.mrf.mxu0
  %v1387 = vadd.f32 0.0, %v1386
  %v1388 = vpop.f32.mrf.mxu0
  %1389 = vmatprep.mubr.bf16.mxu0 0
  %1390 = vmatmul.mubr.bf16.gmra.mxu0 %v1263
  %v1391 = vpop.f32.mrf.mxu0
  %v1392 = vadd.f32 0.0, %v1391
  %v1393 = vpop.f32.mrf.mxu0
  %v1394 = vpop.f32.mrf.mxu0
  %v1395 = vadd.f32 0.0, %v1394
  %v1396 = vpop.f32.mrf.mxu0
  %1397 = vmatprep.mubr.bf16.mxu0 0
  %1398 = vmatmul.mubr.bf16.gmra.mxu0 %v1266
  %v1399 = vpop.f32.mrf.mxu0
  %v1400 = vadd.f32 0.0, %v1399
  %v1401 = vpop.f32.mrf.mxu0
  %v1402 = vpop.f32.mrf.mxu0
  %v1403 = vadd.f32 0.0, %v1402
  %v1404 = vpop.f32.mrf.mxu0
  %1405 = vmatprep.mubr.bf16.mxu0 0
  %1406 = vmatmul.mubr.bf16.gmra.mxu0 %v1269
  %v1407 = vpop.f32.mrf.mxu0
  %v1408 = vadd.f32 0.0, %v1407
  %v1409 = vpop.f32.mrf.mxu0
  %v1410 = vpop.f32.mrf.mxu0
  %v1411 = vadd.f32 0.0, %v1410
  %v1412 = vpop.f32.mrf.mxu0
  %1413 = vmatprep.mubr.bf16.mxu0 0
  %1414 = vmatmul.mubr.bf16.gmra.mxu0 %v1272
  %v1415 = vpop.f32.mrf.mxu0
  %v1416 = vadd.f32 0.0, %v1415
  %v1417 = vpop.f32.mrf.mxu0
  %v1418 = vpop.f32.mrf.mxu0
  %v1419 = vadd.f32 0.0, %v1418
  %v1420 = vpop.f32.mrf.mxu0
  %1421 = vmatprep.mubr.bf16.mxu0 0
  %1422 = vmatmul.mubr.bf16.gmra.mxu0 %v1275
  %v1423 = vpop.f32.mrf.mxu0
  %v1424 = vadd.f32 0.0, %v1423
  %v1425 = vpop.f32.mrf.mxu0
  %v1426 = vpop.f32.mrf.mxu0
  %v1427 = vadd.f32 0.0, %v1426
  %v1428 = vpop.f32.mrf.mxu0
  %1429 = vmatprep.mubr.bf16.mxu0 0
  %1430 = vmatmul.mubr.bf16.gmra.mxu0 %v1278
  %v1431 = vpop.f32.mrf.mxu0
  %v1432 = vadd.f32 0.0, %v1431
  %v1433 = vpop.f32.mrf.mxu0
  %v1434 = vpop.f32.mrf.mxu0
  %v1435 = vadd.f32 0.0, %v1434
  %v1436 = vpop.f32.mrf.mxu0
  %1437 = vmatprep.mubr.bf16.mxu0 0
  %1438 = vmatmul.mubr.bf16.gmra.mxu0 %v1281
  %v1439 = vpop.f32.mrf.mxu0
  %v1440 = vadd.f32 0.0, %v1439
  %v1441 = vpop.f32.mrf.mxu0
  %v1442 = vpop.f32.mrf.mxu0
  %v1443 = vadd.f32 0.0, %v1442
  %v1444 = vpop.f32.mrf.mxu0
  %1445 = vmatprep.mubr.bf16.mxu0 0
  %1446 = vmatmul.mubr.bf16.gmra.mxu0 %v1284
  %v1447 = vpop.f32.mrf.mxu0
  %v1448 = vadd.f32 0.0, %v1447
  %v1449 = vpop.f32.mrf.mxu0
  %v1450 = vpop.f32.mrf.mxu0
  %v1451 = vadd.f32 0.0, %v1450
  %v1452 = vpop.f32.mrf.mxu0
  %1453 = vmatprep.mubr.bf16.mxu0 0
  %1454 = vmatmul.mubr.bf16.gmra.mxu0 %v1287
  %v1455 = vpop.f32.mrf.mxu0
  %v1456 = vadd.f32 0.0, %v1455
  %v1457 = vpop.f32.mrf.mxu0
  %v1458 = vpop.f32.mrf.mxu0
  %v1459 = vadd.f32 0.0, %v1458
  %v1460 = vpop.f32.mrf.mxu0
  %1461 = vmatprep.mubr.bf16.mxu0 0
  %1462 = vmatmul.mubr.bf16.gmra.mxu0 %v1290
  %v1463 = vpop.f32.mrf.mxu0
  %v1464 = vadd.f32 0.0, %v1463
  %v1465 = vpop.f32.mrf.mxu0
  %v1466 = vpop.f32.mrf.mxu0
  %v1467 = vadd.f32 0.0, %v1466
  %v1468 = vpop.f32.mrf.mxu0
  %1469 = vmatprep.mubr.bf16.mxu0 0
  %1470 = vmatmul.mubr.bf16.gmra.mxu0 %v1293
  %v1471 = vpop.f32.mrf.mxu0
  %v1472 = vadd.f32 0.0, %v1471
  %v1473 = vpop.f32.mrf.mxu0
  %v1474 = vpop.f32.mrf.mxu0
  %v1475 = vadd.f32 0.0, %v1474
  %v1476 = vpop.f32.mrf.mxu0
  %1477 = vmatprep.mubr.bf16.mxu0 0
  %1478 = vmatmul.mubr.bf16.gmra.mxu0 %v1296
  %v1479 = vpop.f32.mrf.mxu0
  %v1480 = vadd.f32 0.0, %v1479
  %v1481 = vpop.f32.mrf.mxu0
  %v1482 = vpop.f32.mrf.mxu0
  %v1483 = vadd.f32 0.0, %v1482
  %v1484 = vpop.f32.mrf.mxu0
  %1485 = vmatprep.mubr.bf16.mxu0 0
  %1486 = vmatmul.mubr.bf16.gmra.mxu0 %v1299
  %v1487 = vpop.f32.mrf.mxu0
  %v1488 = vadd.f32 0.0, %v1487
  %v1489 = vpop.f32.mrf.mxu0
  %v1490 = vpop.f32.mrf.mxu0
  %v1491 = vadd.f32 0.0, %v1490
  %v1492 = vpop.f32.mrf.mxu0
  %1493 = vmatprep.mubr.bf16.mxu0 0
  %1494 = vmatmul.mubr.bf16.gmra.mxu0 %v1302
  %v1495 = vpop.f32.mrf.mxu0
  %v1496 = vadd.f32 0.0, %v1495
  %v1497 = vpop.f32.mrf.mxu0
  %v1498 = vpop.f32.mrf.mxu0
  %v1499 = vadd.f32 0.0, %v1498
  %v1500 = vpop.f32.mrf.mxu0
  %1501 = vmatprep.mubr.bf16.mxu0 0
  %1502 = vmatmul.mubr.bf16.gmra.mxu0 %v1305
  %v1503 = vpop.f32.mrf.mxu0
  %v1504 = vadd.f32 0.0, %v1503
  %v1505 = vpop.f32.mrf.mxu0
  %v1506 = vpop.f32.mrf.mxu0
  %v1507 = vadd.f32 0.0, %v1506
  %v1508 = vpop.f32.mrf.mxu0
  %1509 = vmatprep.mubr.bf16.mxu0 0
  %1510 = vmatmul.mubr.bf16.gmra.mxu0 %v1308
  %v1511 = vpop.f32.mrf.mxu0
  %v1512 = vadd.f32 0.0, %v1511
  %v1513 = vpop.f32.mrf.mxu0
  %v1514 = vpop.f32.mrf.mxu0
  %v1515 = vadd.f32 0.0, %v1514
  %v1516 = vpop.f32.mrf.mxu0
  %1517 = vmatprep.mubr.bf16.mxu0 0
  %1518 = vmatmul.mubr.bf16.gmra.mxu0 %v1311
  %v1519 = vpop.f32.mrf.mxu0
  %v1520 = vadd.f32 0.0, %v1519
  %v1521 = vpop.f32.mrf.mxu0
  %v1522 = vpop.f32.mrf.mxu0
  %v1523 = vadd.f32 0.0, %v1522
  %v1524 = vpop.f32.mrf.mxu0
  %1525 = vmatprep.mubr.bf16.mxu0 0
  %1526 = vmatmul.mubr.bf16.gmra.mxu0 %v1314
  %v1527 = vpop.f32.mrf.mxu0
  %v1528 = vadd.f32 0.0, %v1527
  %v1529 = vpop.f32.mrf.mxu0
  %v1530 = vpop.f32.mrf.mxu0
  %v1531 = vadd.f32 0.0, %v1530
  %v1532 = vpop.f32.mrf.mxu0
  %1533 = vmatprep.mubr.bf16.mxu0 0
  %1534 = vmatmul.mubr.bf16.gmra.mxu0 %v1317
  %v1535 = vpop.f32.mrf.mxu0
  %v1536 = vadd.f32 0.0, %v1535
  %v1537 = vpop.f32.mrf.mxu0
  %v1538 = vpop.f32.mrf.mxu0
  %v1539 = vadd.f32 0.0, %v1538
  %v1540 = vpop.f32.mrf.mxu0
  %1541 = vmatprep.mubr.bf16.mxu0 0
  %1542 = vmatmul.mubr.bf16.gmra.mxu0 %v1320
  %v1543 = vpop.f32.mrf.mxu0
  %v1544 = vadd.f32 0.0, %v1543
  %v1545 = vpop.f32.mrf.mxu0
  %v1546 = vpop.f32.mrf.mxu0
  %v1547 = vadd.f32 0.0, %v1546
  %v1548 = vpop.f32.mrf.mxu0
  %1549 = vmatprep.mubr.bf16.mxu0 0
  %1550 = vmatmul.mubr.bf16.gmra.mxu0 %v1323
  %v1551 = vpop.f32.mrf.mxu0
  %v1552 = vadd.f32 0.0, %v1551
  %v1553 = vpop.f32.mrf.mxu0
  %v1554 = vpop.f32.mrf.mxu0
  %v1555 = vpop.f32.mrf.mxu0
  %1556 = vdwg.mxu0
  %v1557 = vld [vmem:[%s3] sm:$0xf]
  %v1558 = vld [vmem:[%s3 + $0x4] sm:$0xf]
  %v1559 = vld [vmem:[%s3 + $0x8] sm:$0xf]
  %v1560 = vld [vmem:[%s3 + $0xc] sm:$0xf]
  %v1561 = vld [vmem:[%s3 + $0x10] sm:$0xf]
  %v1562 = vld [vmem:[%s3 + $0x14] sm:$0xf]
  %v1563 = vld [vmem:[%s3 + $0x18] sm:$0xf]
  %v1564 = vld [vmem:[%s3 + $0x1c] sm:$0xf]
  %v1565 = vld [vmem:[%s3 + $0x20] sm:$0xf]
  %v1566 = vld [vmem:[%s3 + $0x24] sm:$0xf]
  %v1567 = vld [vmem:[%s3 + $0x28] sm:$0xf]
  %v1568 = vld [vmem:[%s3 + $0x2c] sm:$0xf]
  %v1569 = vld [vmem:[%s3 + $0x30] sm:$0xf]
  %v1570 = vld [vmem:[%s3 + $0x34] sm:$0xf]
  %v1571 = vld [vmem:[%s3 + $0x38] sm:$0xf]
  %v1572 = vld [vmem:[%s3 + $0x3c] sm:$0xf]
  %v1573 = vld [vmem:[%s3 + $0x40] sm:$0xf]
  %v1574 = vld [vmem:[%s3 + $0x44] sm:$0xf]
  %v1575 = vld [vmem:[%s3 + $0x48] sm:$0xf]
  %v1576 = vld [vmem:[%s3 + $0x4c] sm:$0xf]
  %v1577 = vld [vmem:[%s3 + $0x50] sm:$0xf]
  %v1578 = vld [vmem:[%s3 + $0x54] sm:$0xf]
  %v1579 = vld [vmem:[%s3 + $0x58] sm:$0xf]
  %v1580 = vld [vmem:[%s3 + $0x5c] sm:$0xf]
  %v1581 = vld [vmem:[%s3 + $0x60] sm:$0xf]
  %v1582 = vld [vmem:[%s3 + $0x64] sm:$0xf]
  %v1583 = vld [vmem:[%s3 + $0x68] sm:$0xf]
  %v1584 = vld [vmem:[%s3 + $0x6c] sm:$0xf]
  %v1585 = vld [vmem:[%s3 + $0x70] sm:$0xf]
  %v1586 = vld [vmem:[%s3 + $0x74] sm:$0xf]
  %v1587 = vld [vmem:[%s3 + $0x78] sm:$0xf]
  %v1588 = vld [vmem:[%s3 + $0x7c] sm:$0xf]
  %v1589 = vld [vmem:[%s3 + $0x80] sm:$0xf]
  %v1590 = vld [vmem:[%s3 + $0x84] sm:$0xf]
  %v1591 = vld [vmem:[%s3 + $0x88] sm:$0xf]
  %v1592 = vld [vmem:[%s3 + $0x8c] sm:$0xf]
  %v1593 = vld [vmem:[%s3 + $0x90] sm:$0xf]
  %v1594 = vld [vmem:[%s3 + $0x94] sm:$0xf]
  %v1595 = vld [vmem:[%s3 + $0x98] sm:$0xf]
  %v1596 = vld [vmem:[%s3 + $0x9c] sm:$0xf]
  %v1597 = vld [vmem:[%s3 + $0xa0] sm:$0xf]
  %v1598 = vld [vmem:[%s3 + $0xa4] sm:$0xf]
  %v1599 = vld [vmem:[%s3 + $0xa8] sm:$0xf]
  %v1600 = vld [vmem:[%s3 + $0xac] sm:$0xf]
  %v1601 = vld [vmem:[%s3 + $0xb0] sm:$0xf]
  %v1602 = vld [vmem:[%s3 + $0xb4] sm:$0xf]
  %v1603 = vld [vmem:[%s3 + $0xb8] sm:$0xf]
  %v1604 = vld [vmem:[%s3 + $0xbc] sm:$0xf]
  %v1605 = vld [vmem:[%s3 + $0xc0] sm:$0xf]
  %v1655 = vunpack.c.l.b16 %v1557
  %v1656 = vunpack.c.l.b16 %v1558
  %v1657 = vunpack.c.l.b16 %v1559
  %v1658 = vunpack.c.l.b16 %v1560
  %v1659 = vunpack.c.l.b16 %v1561
  %v1660 = vunpack.c.l.b16 %v1562
  %v1661 = vunpack.c.l.b16 %v1563
  %v1662 = vunpack.c.l.b16 %v1564
  %v1663 = vunpack.c.l.b16 %v1565
  %v1664 = vunpack.c.l.b16 %v1566
  %v1665 = vunpack.c.l.b16 %v1567
  %v1666 = vunpack.c.l.b16 %v1568
  %v1667 = vunpack.c.l.b16 %v1569
  %v1668 = vunpack.c.l.b16 %v1570
  %v1669 = vunpack.c.l.b16 %v1571
  %v1670 = vunpack.c.l.b16 %v1572
  %v1671 = vunpack.c.l.b16 %v1573
  %v1672 = vunpack.c.l.b16 %v1574
  %v1673 = vunpack.c.l.b16 %v1575
  %v1674 = vunpack.c.l.b16 %v1576
  %v1675 = vunpack.c.l.b16 %v1577
  %v1676 = vunpack.c.l.b16 %v1578
  %v1677 = vunpack.c.l.b16 %v1579
  %v1678 = vunpack.c.l.b16 %v1580
  %v1679 = vunpack.c.l.b16 %v1581
  %v1680 = vunpack.c.l.b16 %v1582
  %v1681 = vunpack.c.l.b16 %v1583
  %v1682 = vunpack.c.l.b16 %v1584
  %v1683 = vunpack.c.l.b16 %v1585
  %v1684 = vunpack.c.l.b16 %v1586
  %v1685 = vunpack.c.l.b16 %v1587
  %v1686 = vunpack.c.l.b16 %v1588
  %v1687 = vunpack.c.l.b16 %v1589
  %v1688 = vunpack.c.l.b16 %v1590
  %v1689 = vunpack.c.l.b16 %v1591
  %v1690 = vunpack.c.l.b16 %v1592
  %v1691 = vunpack.c.l.b16 %v1593
  %v1692 = vunpack.c.l.b16 %v1594
  %v1693 = vunpack.c.l.b16 %v1595
  %v1694 = vunpack.c.l.b16 %v1596
  %v1695 = vunpack.c.l.b16 %v1597
  %v1696 = vunpack.c.l.b16 %v1598
  %v1697 = vunpack.c.l.b16 %v1599
  %v1698 = vunpack.c.l.b16 %v1600
  %v1699 = vunpack.c.l.b16 %v1601
  %v1700 = vunpack.c.l.b16 %v1602
  %v1701 = vunpack.c.l.b16 %v1603
  %v1702 = vunpack.c.l.b16 %v1604
  %v1703 = vunpack.c.l.b16 %v1605
  %v1704 = vpack.c.b16 %v1656, %v1655
  %v1705 = vpack.c.b16 %v1658, %v1657
  %v1706 = vpack.c.b16 %v1660, %v1659
  %v1707 = vpack.c.b16 %v1662, %v1661
  %v1708 = vpack.c.b16 %v1664, %v1663
  %v1709 = vpack.c.b16 %v1666, %v1665
  %v1710 = vpack.c.b16 %v1668, %v1667
  %v1711 = vpack.c.b16 %v1670, %v1669
  %v1712 = vpack.c.b16 %v1672, %v1671
  %v1713 = vpack.c.b16 %v1674, %v1673
  %v1714 = vpack.c.b16 %v1676, %v1675
  %v1715 = vpack.c.b16 %v1678, %v1677
  %v1716 = vpack.c.b16 %v1680, %v1679
  %v1717 = vpack.c.b16 %v1682, %v1681
  %v1718 = vpack.c.b16 %v1684, %v1683
  %v1719 = vpack.c.b16 %v1686, %v1685
  %v1720 = vpack.c.b16 %v1688, %v1687
  %v1721 = vpack.c.b16 %v1690, %v1689
  %v1722 = vpack.c.b16 %v1692, %v1691
  %v1723 = vpack.c.b16 %v1694, %v1693
  %v1724 = vpack.c.b16 %v1696, %v1695
  %v1725 = vpack.c.b16 %v1698, %v1697
  %v1726 = vpack.c.b16 %v1700, %v1699
  %v1727 = vpack.c.b16 %v1702, %v1701
  %v1728 = vpack.c.b16 %v1703, %v1703
  %v1730 = vsel %vm235, %v1704, 0
  %v1733 = vsel %vm235, %v1705, 0
  %v1736 = vsel %vm235, %v1706, 0
  %v1739 = vsel %vm235, %v1707, 0
  %v1742 = vsel %vm235, %v1708, 0
  %v1745 = vsel %vm235, %v1709, 0
  %v1748 = vsel %vm235, %v1710, 0
  %v1751 = vsel %vm235, %v1711, 0
  %v1754 = vsel %vm235, %v1712, 0
  %v1757 = vsel %vm235, %v1713, 0
  %v1760 = vsel %vm235, %v1714, 0
  %v1763 = vsel %vm235, %v1715, 0
  %v1766 = vsel %vm235, %v1716, 0
  %v1769 = vsel %vm235, %v1717, 0
  %v1772 = vsel %vm235, %v1718, 0
  %v1775 = vsel %vm235, %v1719, 0
  %v1778 = vsel %vm235, %v1720, 0
  %v1781 = vsel %vm235, %v1721, 0
  %v1784 = vsel %vm235, %v1722, 0
  %v1787 = vsel %vm235, %v1723, 0
  %v1790 = vsel %vm235, %v1724, 0
  %v1793 = vsel %vm235, %v1725, 0
  %v1796 = vsel %vm235, %v1726, 0
  %v1799 = vsel %vm235, %v1727, 0
  %v1802 = vsel %vm235, %v1728, 0
  %1804 = vmatprep.subr.bf16.mxu0 0
  %1805 = vmatpush1.bf16.msra.mxu0 0
  %1806 = vmatprep.subr.bf16.mxu0 0
  %1807 = vmatpush1.bf16.msra.mxu0 0
  %1808 = vmatprep.subr.bf16.mxu0 0
  %1809 = vmatpush1.bf16.msra.mxu0 0
  %1810 = vmatprep.subr.bf16.mxu0 0
  %1811 = vmatpush1.bf16.msra.mxu0 %v316
  %1812 = vmatprep.subr.bf16.mxu0 0
  %1813 = vmatpush1.bf16.msra.mxu0 %v229
  %1814 = vmatprep.subr.bf16.mxu0 0
  %1815 = vmatpush1.bf16.msra.mxu0 %v228
  %1816 = vmatprep.subr.bf16.mxu0 0
  %1817 = vmatpush1.bf16.msra.mxu0 %v227
  %1818 = vmatprep.subr.bf16.mxu0 0
  %1819 = vmatpush1.bf16.msra.mxu0 %v226
  %1820 = vmatprep.subr.bf16.mxu0 0
  %1821 = vmatpush2.bf16.msra.mxu0 0
  %1822 = vmatprep.subr.bf16.mxu0 0
  %1823 = vmatpush2.bf16.msra.mxu0 0
  %1824 = vmatprep.subr.bf16.mxu0 0
  %1825 = vmatpush2.bf16.msra.mxu0 0
  %1826 = vmatprep.subr.bf16.mxu0 0
  %1827 = vmatpush2.bf16.msra.mxu0 0
  %1828 = vmatprep.subr.bf16.mxu0 0
  %1829 = vmatpush2.bf16.msra.mxu0 0
  %1830 = vmatprep.subr.bf16.mxu0 0
  %1831 = vmatpush2.bf16.msra.mxu0 0
  %1832 = vmatprep.subr.bf16.mxu0 0
  %1833 = vmatpush2.bf16.msra.mxu0 0
  %1834 = vmatprep.subr.bf16.mxu0 0
  %1835 = vmatpush2.bf16.msra.mxu0 0
  %1836 = vmatprep.mubr.bf16.mxu0 0
  %1837 = vmatmul.mubr.bf16.gmra.mxu0 %v1730
  %v1838 = vpop.f32.mrf.mxu0
  %v1839 = vadd.f32 0.0, %v1838
  %v1840 = vpop.f32.mrf.mxu0
  %v1841 = vpop.f32.mrf.mxu0
  %v1842 = vadd.f32 0.0, %v1841
  %v1843 = vpop.f32.mrf.mxu0
  %1844 = vmatprep.mubr.bf16.mxu0 0
  %1845 = vmatmul.mubr.bf16.gmra.mxu0 %v1733
  %v1846 = vpop.f32.mrf.mxu0
  %v1847 = vadd.f32 0.0, %v1846
  %v1848 = vpop.f32.mrf.mxu0
  %v1849 = vpop.f32.mrf.mxu0
  %v1850 = vadd.f32 0.0, %v1849
  %v1851 = vpop.f32.mrf.mxu0
  %1852 = vmatprep.mubr.bf16.mxu0 0
  %1853 = vmatmul.mubr.bf16.gmra.mxu0 %v1736
  %v1854 = vpop.f32.mrf.mxu0
  %v1855 = vadd.f32 0.0, %v1854
  %v1856 = vpop.f32.mrf.mxu0
  %v1857 = vpop.f32.mrf.mxu0
  %v1858 = vadd.f32 0.0, %v1857
  %v1859 = vpop.f32.mrf.mxu0
  %1860 = vmatprep.mubr.bf16.mxu0 0
  %1861 = vmatmul.mubr.bf16.gmra.mxu0 %v1739
  %v1862 = vpop.f32.mrf.mxu0
  %v1863 = vadd.f32 0.0, %v1862
  %v1864 = vpop.f32.mrf.mxu0
  %v1865 = vpop.f32.mrf.mxu0
  %v1866 = vadd.f32 0.0, %v1865
  %v1867 = vpop.f32.mrf.mxu0
  %1868 = vmatprep.mubr.bf16.mxu0 0
  %1869 = vmatmul.mubr.bf16.gmra.mxu0 %v1742
  %v1870 = vpop.f32.mrf.mxu0
  %v1871 = vadd.f32 0.0, %v1870
  %v1872 = vpop.f32.mrf.mxu0
  %v1873 = vpop.f32.mrf.mxu0
  %v1874 = vadd.f32 0.0, %v1873
  %v1875 = vpop.f32.mrf.mxu0
  %1876 = vmatprep.mubr.bf16.mxu0 0
  %1877 = vmatmul.mubr.bf16.gmra.mxu0 %v1745
  %v1878 = vpop.f32.mrf.mxu0
  %v1879 = vadd.f32 0.0, %v1878
  %v1880 = vpop.f32.mrf.mxu0
  %v1881 = vpop.f32.mrf.mxu0
  %v1882 = vadd.f32 0.0, %v1881
  %v1883 = vpop.f32.mrf.mxu0
  %1884 = vmatprep.mubr.bf16.mxu0 0
  %1885 = vmatmul.mubr.bf16.gmra.mxu0 %v1748
  %v1886 = vpop.f32.mrf.mxu0
  %v1887 = vadd.f32 0.0, %v1886
  %v1888 = vpop.f32.mrf.mxu0
  %v1889 = vpop.f32.mrf.mxu0
  %v1890 = vadd.f32 0.0, %v1889
  %v1891 = vpop.f32.mrf.mxu0
  %1892 = vmatprep.mubr.bf16.mxu0 0
  %1893 = vmatmul.mubr.bf16.gmra.mxu0 %v1751
  %v1894 = vpop.f32.mrf.mxu0
  %v1895 = vadd.f32 0.0, %v1894
  %v1896 = vpop.f32.mrf.mxu0
  %v1897 = vpop.f32.mrf.mxu0
  %v1898 = vadd.f32 0.0, %v1897
  %v1899 = vpop.f32.mrf.mxu0
  %1900 = vmatprep.mubr.bf16.mxu0 0
  %1901 = vmatmul.mubr.bf16.gmra.mxu0 %v1754
  %v1902 = vpop.f32.mrf.mxu0
  %v1903 = vadd.f32 0.0, %v1902
  %v1904 = vpop.f32.mrf.mxu0
  %v1905 = vpop.f32.mrf.mxu0
  %v1906 = vadd.f32 0.0, %v1905
  %v1907 = vpop.f32.mrf.mxu0
  %1908 = vmatprep.mubr.bf16.mxu0 0
  %1909 = vmatmul.mubr.bf16.gmra.mxu0 %v1757
  %v1910 = vpop.f32.mrf.mxu0
  %v1911 = vadd.f32 0.0, %v1910
  %v1912 = vpop.f32.mrf.mxu0
  %v1913 = vpop.f32.mrf.mxu0
  %v1914 = vadd.f32 0.0, %v1913
  %v1915 = vpop.f32.mrf.mxu0
  %1916 = vmatprep.mubr.bf16.mxu0 0
  %1917 = vmatmul.mubr.bf16.gmra.mxu0 %v1760
  %v1918 = vpop.f32.mrf.mxu0
  %v1919 = vadd.f32 0.0, %v1918
  %v1920 = vpop.f32.mrf.mxu0
  %v1921 = vpop.f32.mrf.mxu0
  %v1922 = vadd.f32 0.0, %v1921
  %v1923 = vpop.f32.mrf.mxu0
  %1924 = vmatprep.mubr.bf16.mxu0 0
  %1925 = vmatmul.mubr.bf16.gmra.mxu0 %v1763
  %v1926 = vpop.f32.mrf.mxu0
  %v1927 = vadd.f32 0.0, %v1926
  %v1928 = vpop.f32.mrf.mxu0
  %v1929 = vpop.f32.mrf.mxu0
  %v1930 = vadd.f32 0.0, %v1929
  %v1931 = vpop.f32.mrf.mxu0
  %1932 = vmatprep.mubr.bf16.mxu0 0
  %1933 = vmatmul.mubr.bf16.gmra.mxu0 %v1766
  %v1934 = vpop.f32.mrf.mxu0
  %v1935 = vadd.f32 0.0, %v1934
  %v1936 = vpop.f32.mrf.mxu0
  %v1937 = vpop.f32.mrf.mxu0
  %v1938 = vadd.f32 0.0, %v1937
  %v1939 = vpop.f32.mrf.mxu0
  %1940 = vmatprep.mubr.bf16.mxu0 0
  %1941 = vmatmul.mubr.bf16.gmra.mxu0 %v1769
  %v1942 = vpop.f32.mrf.mxu0
  %v1943 = vadd.f32 0.0, %v1942
  %v1944 = vpop.f32.mrf.mxu0
  %v1945 = vpop.f32.mrf.mxu0
  %v1946 = vadd.f32 0.0, %v1945
  %v1947 = vpop.f32.mrf.mxu0
  %1948 = vmatprep.mubr.bf16.mxu0 0
  %1949 = vmatmul.mubr.bf16.gmra.mxu0 %v1772
  %v1950 = vpop.f32.mrf.mxu0
  %v1951 = vadd.f32 0.0, %v1950
  %v1952 = vpop.f32.mrf.mxu0
  %v1953 = vpop.f32.mrf.mxu0
  %v1954 = vadd.f32 0.0, %v1953
  %v1955 = vpop.f32.mrf.mxu0
  %1956 = vmatprep.mubr.bf16.mxu0 0
  %1957 = vmatmul.mubr.bf16.gmra.mxu0 %v1775
  %v1958 = vpop.f32.mrf.mxu0
  %v1959 = vadd.f32 0.0, %v1958
  %v1960 = vpop.f32.mrf.mxu0
  %v1961 = vpop.f32.mrf.mxu0
  %v1962 = vadd.f32 0.0, %v1961
  %v1963 = vpop.f32.mrf.mxu0
  %1964 = vmatprep.mubr.bf16.mxu0 0
  %1965 = vmatmul.mubr.bf16.gmra.mxu0 %v1778
  %v1966 = vpop.f32.mrf.mxu0
  %v1967 = vadd.f32 0.0, %v1966
  %v1968 = vpop.f32.mrf.mxu0
  %v1969 = vpop.f32.mrf.mxu0
  %v1970 = vadd.f32 0.0, %v1969
  %v1971 = vpop.f32.mrf.mxu0
  %1972 = vmatprep.mubr.bf16.mxu0 0
  %1973 = vmatmul.mubr.bf16.gmra.mxu0 %v1781
  %v1974 = vpop.f32.mrf.mxu0
  %v1975 = vadd.f32 0.0, %v1974
  %v1976 = vpop.f32.mrf.mxu0
  %v1977 = vpop.f32.mrf.mxu0
  %v1978 = vadd.f32 0.0, %v1977
  %v1979 = vpop.f32.mrf.mxu0
  %1980 = vmatprep.mubr.bf16.mxu0 0
  %1981 = vmatmul.mubr.bf16.gmra.mxu0 %v1784
  %v1982 = vpop.f32.mrf.mxu0
  %v1983 = vadd.f32 0.0, %v1982
  %v1984 = vpop.f32.mrf.mxu0
  %v1985 = vpop.f32.mrf.mxu0
  %v1986 = vadd.f32 0.0, %v1985
  %v1987 = vpop.f32.mrf.mxu0
  %1988 = vmatprep.mubr.bf16.mxu0 0
  %1989 = vmatmul.mubr.bf16.gmra.mxu0 %v1787
  %v1990 = vpop.f32.mrf.mxu0
  %v1991 = vadd.f32 0.0, %v1990
  %v1992 = vpop.f32.mrf.mxu0
  %v1993 = vpop.f32.mrf.mxu0
  %v1994 = vadd.f32 0.0, %v1993
  %v1995 = vpop.f32.mrf.mxu0
  %1996 = vmatprep.mubr.bf16.mxu0 0
  %1997 = vmatmul.mubr.bf16.gmra.mxu0 %v1790
  %v1998 = vpop.f32.mrf.mxu0
  %v1999 = vadd.f32 0.0, %v1998
  %v2000 = vpop.f32.mrf.mxu0
  %v2001 = vpop.f32.mrf.mxu0
  %v2002 = vadd.f32 0.0, %v2001
  %v2003 = vpop.f32.mrf.mxu0
  %2004 = vmatprep.mubr.bf16.mxu0 0
  %2005 = vmatmul.mubr.bf16.gmra.mxu0 %v1793
  %v2006 = vpop.f32.mrf.mxu0
  %v2007 = vadd.f32 0.0, %v2006
  %v2008 = vpop.f32.mrf.mxu0
  %v2009 = vpop.f32.mrf.mxu0
  %v2010 = vadd.f32 0.0, %v2009
  %v2011 = vpop.f32.mrf.mxu0
  %2012 = vmatprep.mubr.bf16.mxu0 0
  %2013 = vmatmul.mubr.bf16.gmra.mxu0 %v1796
  %v2014 = vpop.f32.mrf.mxu0
  %v2015 = vadd.f32 0.0, %v2014
  %v2016 = vpop.f32.mrf.mxu0
  %v2017 = vpop.f32.mrf.mxu0
  %v2018 = vadd.f32 0.0, %v2017
  %v2019 = vpop.f32.mrf.mxu0
  %2020 = vmatprep.mubr.bf16.mxu0 0
  %2021 = vmatmul.mubr.bf16.gmra.mxu0 %v1799
  %v2022 = vpop.f32.mrf.mxu0
  %v2023 = vadd.f32 0.0, %v2022
  %v2024 = vpop.f32.mrf.mxu0
  %v2025 = vpop.f32.mrf.mxu0
  %v2026 = vadd.f32 0.0, %v2025
  %v2027 = vpop.f32.mrf.mxu0
  %2028 = vmatprep.mubr.bf16.mxu0 0
  %2029 = vmatmul.mubr.bf16.gmra.mxu0 %v1802
  %v2030 = vpop.f32.mrf.mxu0
  %v2031 = vadd.f32 0.0, %v2030
  %v2032 = vpop.f32.mrf.mxu0
  %v2033 = vpop.f32.mrf.mxu0
  %v2034 = vpop.f32.mrf.mxu0
  %2035 = vdwg.mxu0
  %v2036 = vmax.f32 %v1360, %v1839
  %v2037 = vmax.f32 %v1363, %v1842
  %v2038 = vmax.f32 %v1368, %v1847
  %v2039 = vmax.f32 %v1371, %v1850
  %v2040 = vmax.f32 %v1376, %v1855
  %v2041 = vmax.f32 %v1379, %v1858
  %v2042 = vmax.f32 %v1384, %v1863
  %v2043 = vmax.f32 %v1387, %v1866
  %v2044 = vmax.f32 %v1392, %v1871
  %v2045 = vmax.f32 %v1395, %v1874
  %v2046 = vmax.f32 %v1400, %v1879
  %v2047 = vmax.f32 %v1403, %v1882
  %v2048 = vmax.f32 %v1408, %v1887
  %v2049 = vmax.f32 %v1411, %v1890
  %v2050 = vmax.f32 %v1416, %v1895
  %v2051 = vmax.f32 %v1419, %v1898
  %v2052 = vmax.f32 %v1424, %v1903
  %v2053 = vmax.f32 %v1427, %v1906
  %v2054 = vmax.f32 %v1432, %v1911
  %v2055 = vmax.f32 %v1435, %v1914
  %v2056 = vmax.f32 %v1440, %v1919
  %v2057 = vmax.f32 %v1443, %v1922
  %v2058 = vmax.f32 %v1448, %v1927
  %v2059 = vmax.f32 %v1451, %v1930
  %v2060 = vmax.f32 %v1456, %v1935
  %v2061 = vmax.f32 %v1459, %v1938
  %v2062 = vmax.f32 %v1464, %v1943
  %v2063 = vmax.f32 %v1467, %v1946
  %v2064 = vmax.f32 %v1472, %v1951
  %v2065 = vmax.f32 %v1475, %v1954
  %v2066 = vmax.f32 %v1480, %v1959
  %v2067 = vmax.f32 %v1483, %v1962
  %v2068 = vmax.f32 %v1488, %v1967
  %v2069 = vmax.f32 %v1491, %v1970
  %v2070 = vmax.f32 %v1496, %v1975
  %v2071 = vmax.f32 %v1499, %v1978
  %v2072 = vmax.f32 %v1504, %v1983
  %v2073 = vmax.f32 %v1507, %v1986
  %v2074 = vmax.f32 %v1512, %v1991
  %v2075 = vmax.f32 %v1515, %v1994
  %v2076 = vmax.f32 %v1520, %v1999
  %v2077 = vmax.f32 %v1523, %v2002
  %v2078 = vmax.f32 %v1528, %v2007
  %v2079 = vmax.f32 %v1531, %v2010
  %v2080 = vmax.f32 %v1536, %v2015
  %v2081 = vmax.f32 %v1539, %v2018
  %v2082 = vmax.f32 %v1544, %v2023
  %v2083 = vmax.f32 %v1547, %v2026
  %v2084 = vmax.f32 %v1552, %v2031
  %v2085 = vmax.f32 %v1029, %v2036
  %v2086 = vmax.f32 %v1030, %v2037
  %v2087 = vmax.f32 %v1031, %v2038
  %v2088 = vmax.f32 %v1032, %v2039
  %v2089 = vmax.f32 %v1033, %v2040
  %v2090 = vmax.f32 %v1034, %v2041
  %v2091 = vmax.f32 %v1035, %v2042
  %v2092 = vmax.f32 %v1036, %v2043
  %v2093 = vmax.f32 %v1037, %v2044
  %v2094 = vmax.f32 %v1038, %v2045
  %v2095 = vmax.f32 %v1039, %v2046
  %v2096 = vmax.f32 %v1040, %v2047
  %v2097 = vmax.f32 %v1041, %v2048
  %v2098 = vmax.f32 %v1042, %v2049
  %v2099 = vmax.f32 %v1043, %v2050
  %v2100 = vmax.f32 %v1044, %v2051
  %v2101 = vmax.f32 %v1045, %v2052
  %v2102 = vmax.f32 %v1046, %v2053
  %v2103 = vmax.f32 %v1047, %v2054
  %v2104 = vmax.f32 %v1048, %v2055
  %v2105 = vmax.f32 %v1049, %v2056
  %v2106 = vmax.f32 %v1050, %v2057
  %v2107 = vmax.f32 %v1051, %v2058
  %v2108 = vmax.f32 %v1052, %v2059
  %v2109 = vmax.f32 %v1053, %v2060
  %v2110 = vmax.f32 %v1054, %v2061
  %v2111 = vmax.f32 %v1055, %v2062
  %v2112 = vmax.f32 %v1056, %v2063
  %v2113 = vmax.f32 %v1057, %v2064
  %v2114 = vmax.f32 %v1058, %v2065
  %v2115 = vmax.f32 %v1059, %v2066
  %v2116 = vmax.f32 %v1060, %v2067
  %v2117 = vmax.f32 %v1061, %v2068
  %v2118 = vmax.f32 %v1062, %v2069
  %v2119 = vmax.f32 %v1063, %v2070
  %v2120 = vmax.f32 %v1064, %v2071
  %v2121 = vmax.f32 %v1065, %v2072
  %v2122 = vmax.f32 %v1066, %v2073
  %v2123 = vmax.f32 %v1067, %v2074
  %v2124 = vmax.f32 %v1068, %v2075
  %v2125 = vmax.f32 %v1069, %v2076
  %v2126 = vmax.f32 %v1070, %v2077
  %v2127 = vmax.f32 %v1071, %v2078
  %v2128 = vmax.f32 %v1072, %v2079
  %v2129 = vmax.f32 %v1073, %v2080
  %v2130 = vmax.f32 %v1074, %v2081
  %v2131 = vmax.f32 %v1075, %v2082
  %v2132 = vmax.f32 %v1076, %v2083
  %v2133 = vmax.f32 %v1077, %v2084
  %v2134 = vld [vmem:[%s5] sm:$0x1]
  %v2136 = vlaneseq
  %v2137 = vshrl.u32 %v2136, 7
  %v2138 = vsub.s32 0, %v2137
  %v2139 = vrot.slane %v2134, %v2138
  %v2141 = vadd.f32 %v2085, %v2139
  %v2142 = vadd.f32 %v2086, %v2139
  %v2143 = vadd.f32 %v2087, %v2139
  %v2144 = vadd.f32 %v2088, %v2139
  %v2145 = vadd.f32 %v2089, %v2139
  %v2146 = vadd.f32 %v2090, %v2139
  %v2147 = vadd.f32 %v2091, %v2139
  %v2148 = vadd.f32 %v2092, %v2139
  %v2149 = vadd.f32 %v2093, %v2139
  %v2150 = vadd.f32 %v2094, %v2139
  %v2151 = vadd.f32 %v2095, %v2139
  %v2152 = vadd.f32 %v2096, %v2139
  %v2153 = vadd.f32 %v2097, %v2139
  %v2154 = vadd.f32 %v2098, %v2139
  %v2155 = vadd.f32 %v2099, %v2139
  %v2156 = vadd.f32 %v2100, %v2139
  %v2157 = vadd.f32 %v2101, %v2139
  %v2158 = vadd.f32 %v2102, %v2139
  %v2159 = vadd.f32 %v2103, %v2139
  %v2160 = vadd.f32 %v2104, %v2139
  %v2161 = vadd.f32 %v2105, %v2139
  %v2162 = vadd.f32 %v2106, %v2139
  %v2163 = vadd.f32 %v2107, %v2139
  %v2164 = vadd.f32 %v2108, %v2139
  %v2165 = vadd.f32 %v2109, %v2139
  %v2166 = vadd.f32 %v2110, %v2139
  %v2167 = vadd.f32 %v2111, %v2139
  %v2168 = vadd.f32 %v2112, %v2139
  %v2169 = vadd.f32 %v2113, %v2139
  %v2170 = vadd.f32 %v2114, %v2139
  %v2171 = vadd.f32 %v2115, %v2139
  %v2172 = vadd.f32 %v2116, %v2139
  %v2173 = vadd.f32 %v2117, %v2139
  %v2174 = vadd.f32 %v2118, %v2139
  %v2175 = vadd.f32 %v2119, %v2139
  %v2176 = vadd.f32 %v2120, %v2139
  %v2177 = vadd.f32 %v2121, %v2139
  %v2178 = vadd.f32 %v2122, %v2139
  %v2179 = vadd.f32 %v2123, %v2139
  %v2180 = vadd.f32 %v2124, %v2139
  %v2181 = vadd.f32 %v2125, %v2139
  %v2182 = vadd.f32 %v2126, %v2139
  %v2183 = vadd.f32 %v2127, %v2139
  %v2184 = vadd.f32 %v2128, %v2139
  %v2185 = vadd.f32 %v2129, %v2139
  %v2186 = vadd.f32 %v2130, %v2139
  %v2187 = vadd.f32 %v2131, %v2139
  %v2188 = vadd.f32 %v2132, %v2139
  %v2189 = vadd.f32 %v2133, %v2139
  %v2190 = vmax.f32 %v2141, 0.0
  %v2191 = vmax.f32 %v2142, 0.0
  %v2192 = vmax.f32 %v2143, 0.0
  %v2193 = vmax.f32 %v2144, 0.0
  %v2194 = vmax.f32 %v2145, 0.0
  %v2195 = vmax.f32 %v2146, 0.0
  %v2196 = vmax.f32 %v2147, 0.0
  %v2197 = vmax.f32 %v2148, 0.0
  %v2198 = vmax.f32 %v2149, 0.0
  %v2199 = vmax.f32 %v2150, 0.0
  %v2200 = vmax.f32 %v2151, 0.0
  %v2201 = vmax.f32 %v2152, 0.0
  %v2202 = vmax.f32 %v2153, 0.0
  %v2203 = vmax.f32 %v2154, 0.0
  %v2204 = vmax.f32 %v2155, 0.0
  %v2205 = vmax.f32 %v2156, 0.0
  %v2206 = vmax.f32 %v2157, 0.0
  %v2207 = vmax.f32 %v2158, 0.0
  %v2208 = vmax.f32 %v2159, 0.0
  %v2209 = vmax.f32 %v2160, 0.0
  %v2210 = vmax.f32 %v2161, 0.0
  %v2211 = vmax.f32 %v2162, 0.0
  %v2212 = vmax.f32 %v2163, 0.0
  %v2213 = vmax.f32 %v2164, 0.0
  %v2214 = vmax.f32 %v2165, 0.0
  %v2215 = vmax.f32 %v2166, 0.0
  %v2216 = vmax.f32 %v2167, 0.0
  %v2217 = vmax.f32 %v2168, 0.0
  %v2218 = vmax.f32 %v2169, 0.0
  %v2219 = vmax.f32 %v2170, 0.0
  %v2220 = vmax.f32 %v2171, 0.0
  %v2221 = vmax.f32 %v2172, 0.0
  %v2222 = vmax.f32 %v2173, 0.0
  %v2223 = vmax.f32 %v2174, 0.0
  %v2224 = vmax.f32 %v2175, 0.0
  %v2225 = vmax.f32 %v2176, 0.0
  %v2226 = vmax.f32 %v2177, 0.0
  %v2227 = vmax.f32 %v2178, 0.0
  %v2228 = vmax.f32 %v2179, 0.0
  %v2229 = vmax.f32 %v2180, 0.0
  %v2230 = vmax.f32 %v2181, 0.0
  %v2231 = vmax.f32 %v2182, 0.0
  %v2232 = vmax.f32 %v2183, 0.0
  %v2233 = vmax.f32 %v2184, 0.0
  %v2234 = vmax.f32 %v2185, 0.0
  %v2235 = vmax.f32 %v2186, 0.0
  %v2236 = vmax.f32 %v2187, 0.0
  %v2237 = vmax.f32 %v2188, 0.0
  %v2238 = vmax.f32 %v2189, 0.0
  %vm2239 = vcmask 48128
  %2240 = vst.msk [vmem:[%s6] sm:$0xff] %vm2239, %v2190
  %2241 = vst.msk [vmem:[%s6 + $0x8] sm:$0xff] %vm2239, %v2191
  %2242 = vst.msk [vmem:[%s6 + $0x10] sm:$0xff] %vm2239, %v2192
  %2243 = vst.msk [vmem:[%s6 + $0x18] sm:$0xff] %vm2239, %v2193
  %2244 = vst.msk [vmem:[%s6 + $0x20] sm:$0xff] %vm2239, %v2194
  %2245 = vst.msk [vmem:[%s6 + $0x28] sm:$0xff] %vm2239, %v2195
  %2246 = vst.msk [vmem:[%s6 + $0x30] sm:$0xff] %vm2239, %v2196
  %2247 = vst.msk [vmem:[%s6 + $0x38] sm:$0xff] %vm2239, %v2197
  %2248 = vst.msk [vmem:[%s6 + $0x40] sm:$0xff] %vm2239, %v2198
  %2249 = vst.msk [vmem:[%s6 + $0x48] sm:$0xff] %vm2239, %v2199
  %2250 = vst.msk [vmem:[%s6 + $0x50] sm:$0xff] %vm2239, %v2200
  %2251 = vst.msk [vmem:[%s6 + $0x58] sm:$0xff] %vm2239, %v2201
  %2252 = vst.msk [vmem:[%s6 + $0x60] sm:$0xff] %vm2239, %v2202
  %2253 = vst.msk [vmem:[%s6 + $0x68] sm:$0xff] %vm2239, %v2203
  %2254 = vst.msk [vmem:[%s6 + $0x70] sm:$0xff] %vm2239, %v2204
  %2255 = vst.msk [vmem:[%s6 + $0x78] sm:$0xff] %vm2239, %v2205
  %2256 = vst.msk [vmem:[%s6 + $0x80] sm:$0xff] %vm2239, %v2206
  %2257 = vst.msk [vmem:[%s6 + $0x88] sm:$0xff] %vm2239, %v2207
  %2258 = vst.msk [vmem:[%s6 + $0x90] sm:$0xff] %vm2239, %v2208
  %2259 = vst.msk [vmem:[%s6 + $0x98] sm:$0xff] %vm2239, %v2209
  %2260 = vst.msk [vmem:[%s6 + $0xa0] sm:$0xff] %vm2239, %v2210
  %2261 = vst.msk [vmem:[%s6 + $0xa8] sm:$0xff] %vm2239, %v2211
  %2262 = vst.msk [vmem:[%s6 + $0xb0] sm:$0xff] %vm2239, %v2212
  %2263 = vst.msk [vmem:[%s6 + $0xb8] sm:$0xff] %vm2239, %v2213
  %2264 = vst.msk [vmem:[%s6 + $0xc0] sm:$0xff] %vm2239, %v2214
  %2265 = vst.msk [vmem:[%s6 + $0xc8] sm:$0xff] %vm2239, %v2215
  %2266 = vst.msk [vmem:[%s6 + $0xd0] sm:$0xff] %vm2239, %v2216
  %2267 = vst.msk [vmem:[%s6 + $0xd8] sm:$0xff] %vm2239, %v2217
  %2268 = vst.msk [vmem:[%s6 + $0xe0] sm:$0xff] %vm2239, %v2218
  %2269 = vst.msk [vmem:[%s6 + $0xe8] sm:$0xff] %vm2239, %v2219
  %2270 = vst.msk [vmem:[%s6 + $0xf0] sm:$0xff] %vm2239, %v2220
  %2271 = vst.msk [vmem:[%s6 + $0xf8] sm:$0xff] %vm2239, %v2221
  %2272 = vst.msk [vmem:[%s6 + $0x100] sm:$0xff] %vm2239, %v2222
  %2273 = vst.msk [vmem:[%s6 + $0x108] sm:$0xff] %vm2239, %v2223
  %2274 = vst.msk [vmem:[%s6 + $0x110] sm:$0xff] %vm2239, %v2224
  %2275 = vst.msk [vmem:[%s6 + $0x118] sm:$0xff] %vm2239, %v2225
  %2276 = vst.msk [vmem:[%s6 + $0x120] sm:$0xff] %vm2239, %v2226
  %2277 = vst.msk [vmem:[%s6 + $0x128] sm:$0xff] %vm2239, %v2227
  %2278 = vst.msk [vmem:[%s6 + $0x130] sm:$0xff] %vm2239, %v2228
  %2279 = vst.msk [vmem:[%s6 + $0x138] sm:$0xff] %vm2239, %v2229
  %2280 = vst.msk [vmem:[%s6 + $0x140] sm:$0xff] %vm2239, %v2230
  %2281 = vst.msk [vmem:[%s6 + $0x148] sm:$0xff] %vm2239, %v2231
  %2282 = vst.msk [vmem:[%s6 + $0x150] sm:$0xff] %vm2239, %v2232
  %2283 = vst.msk [vmem:[%s6 + $0x158] sm:$0xff] %vm2239, %v2233
  %2284 = vst.msk [vmem:[%s6 + $0x160] sm:$0xff] %vm2239, %v2234
  %2285 = vst.msk [vmem:[%s6 + $0x168] sm:$0xff] %vm2239, %v2235
  %2286 = vst.msk [vmem:[%s6 + $0x170] sm:$0xff] %vm2239, %v2236
  %2287 = vst.msk [vmem:[%s6 + $0x178] sm:$0xff] %vm2239, %v2237
  %2288 = vst.msk [vmem:[%s6 + $0x180] sm:$0xff] %vm2239, %v2238
  // Predicated region
  $region26: #{net_forward.3} parent=0 // pred_check
    _
  $region27: #{net_forward.3} parent=0 // pred_check_branch
    %2290 = sbr.rel (0) target = $region29
  $region28: #{net_forward.3} parent=0 // pred_region
    _
  $region29: #{net_forward.3} parent=0 // pred_fallthru
    _
  // Predicated region
  $region30: #{net_forward.3} parent=0 // pred_check
    _
  $region31: #{net_forward.3} parent=0 // pred_check_branch
    %2292 = sbr.rel (0) target = $region33
  $region32: #{net_forward.3} parent=0 // pred_region
    _
  $region33: #{net_forward.3} parent=0 // pred_fallthru
    _

// kernel: net_forward.4
$region0: #{net_forward.4}
  #allocation0 [shape = 'u32[]', space=smem, size = 0x4, offset = 0x4, fixed_abs, tag = 'smem constant byte address 0x4 - core index']
  #allocation1 [shape = 'u32[144,128]{1,0:T(1,128)}', space=vmem, size = 0x12000, scoped, tag = 'internal scratch']
  %s0 = inlined_call_operand.vmem [shape: bf16[50,150], index: 0, kind: input, shape index: {}]
  %s1 = inlined_call_operand.vmem [shape: bf16[50,150], index: 1, kind: input, shape index: {}]
  %s2 = inlined_call_operand.vmem [shape: bf16[50,150], index: 2, kind: input, shape index: {}]
  %s3 = inlined_call_operand.vmem [shape: bf16[50,150], index: 3, kind: input, shape index: {}]
  %s4 = inlined_call_operand.vmem [shape: bf16[150,16], index: 4, kind: input, shape index: {}]
  %s5 = inlined_call_operand.vmem [shape: f32[1,16], index: 5, kind: input, shape index: {}]
  %s6 = inlined_call_operand.vmem [shape: f32[50,16], index: 6, kind: output, shape index: {}]
  %s7 = sld [smem:[#allocation0]]
  $region34: #{net_forward.4} parent=0
    _
  %s9 = ssub.s32 1, %s7
  %s10 = scalar_select 0, %s9, %s7
  // Predicated region
  $region2: #{net_forward.4} parent=0 // pred_check
    _
  $region3: #{net_forward.4} parent=0 // pred_check_branch
    %12 = sbr.rel (0) target = $region5
  $region4: #{net_forward.4} parent=0 // pred_region
    _
  $region5: #{net_forward.4} parent=0 // pred_fallthru
    _
  // Predicated region
  $region6: #{net_forward.4} parent=0 // pred_check
    _
  $region7: #{net_forward.4} parent=0 // pred_check_branch
    %14 = sbr.rel (0) target = $region9
  $region8: #{net_forward.4} parent=0 // pred_region
    _
  $region9: #{net_forward.4} parent=0 // pred_fallthru
    _
  // Predicated region
  $region10: #{net_forward.4} parent=0 // pred_check
    _
  $region11: #{net_forward.4} parent=0 // pred_check_branch
    %16 = sbr.rel (0) target = $region13
  $region12: #{net_forward.4} parent=0 // pred_region
    _
  $region13: #{net_forward.4} parent=0 // pred_fallthru
    _
  // Predicated region
  $region14: #{net_forward.4} parent=0 // pred_check
    _
  $region15: #{net_forward.4} parent=0 // pred_check_branch
    %18 = sbr.rel (0) target = $region17
  $region16: #{net_forward.4} parent=0 // pred_region
    _
  $region17: #{net_forward.4} parent=0 // pred_fallthru
    _
  // Predicated region
  $region18: #{net_forward.4} parent=0 // pred_check
    _
  $region19: #{net_forward.4} parent=0 // pred_check_branch
    %20 = sbr.rel (0) target = $region21
  $region20: #{net_forward.4} parent=0 // pred_region
    _
  $region21: #{net_forward.4} parent=0 // pred_fallthru
    _
  // Predicated region
  $region22: #{net_forward.4} parent=0 // pred_check
    _
  $region23: #{net_forward.4} parent=0 // pred_check_branch
    %22 = sbr.rel (0) target = $region25
  $region24: #{net_forward.4} parent=0 // pred_region
    _
  $region25: #{net_forward.4} parent=0 // pred_fallthru
    _
  %v24 = vld [vmem:[%s4] sm:$0xf]
  %v25 = vld [vmem:[%s4 + $0x4] sm:$0xf]
  %v26 = vld [vmem:[%s4 + $0x8] sm:$0xf]
  %v27 = vld [vmem:[%s4 + $0xc] sm:$0xf]
  %v28 = vld [vmem:[%s4 + $0x10] sm:$0xf]
  %v29 = vld [vmem:[%s4 + $0x14] sm:$0xf]
  %v30 = vld [vmem:[%s4 + $0x18] sm:$0xf]
  %v31 = vld [vmem:[%s4 + $0x1c] sm:$0xf]
  %v32 = vld [vmem:[%s4 + $0x20] sm:$0xf]
  %v33 = vld [vmem:[%s4 + $0x24] sm:$0xf]
  %v34 = vld [vmem:[%s4 + $0x28] sm:$0xf]
  %v35 = vld [vmem:[%s4 + $0x2c] sm:$0xf]
  %v36 = vld [vmem:[%s4 + $0x30] sm:$0xf]
  %v37 = vld [vmem:[%s4 + $0x34] sm:$0xf]
  %v38 = vld [vmem:[%s4 + $0x38] sm:$0xf]
  %v39 = vld [vmem:[%s4 + $0x3c] sm:$0xf]
  %v40 = vld [vmem:[%s4 + $0x40] sm:$0xf]
  %v41 = vld [vmem:[%s4 + $0x44] sm:$0xf]
  %v42 = vld [vmem:[%s4 + $0x48] sm:$0x7]
  %v43 = vld [vmem:[%s0] sm:$0xff]
  %v44 = vld [vmem:[%s0 + $0x8] sm:$0xff]
  %v45 = vld [vmem:[%s0 + $0x10] sm:$0xff]
  %v46 = vld [vmem:[%s0 + $0x18] sm:$0xff]
  %v47 = vld [vmem:[%s0 + $0x20] sm:$0xff]
  %v48 = vld [vmem:[%s0 + $0x28] sm:$0xff]
  %v49 = vld [vmem:[%s0 + $0x30] sm:$0x11]
  %v57 = vunpack.c.l.b16 %v43
  %v58 = vunpack.c.h.b16 %v43
  %v59 = vunpack.c.l.b16 %v44
  %v60 = vunpack.c.h.b16 %v44
  %v61 = vunpack.c.l.b16 %v45
  %v62 = vunpack.c.h.b16 %v45
  %v63 = vunpack.c.l.b16 %v46
  %v64 = vunpack.c.h.b16 %v46
  %v65 = vunpack.c.l.b16 %v47
  %v66 = vunpack.c.h.b16 %v47
  %v67 = vunpack.c.l.b16 %v48
  %v68 = vunpack.c.h.b16 %v48
  %v69 = vunpack.c.l.b16 %v49
  %v70 = vunpack.c.h.b16 %v49
  %v71 = vpack.c.b16 %v59, %v57
  %v72 = vpack.c.b16 %v60, %v58
  %v73 = vpack.c.b16 %v63, %v61
  %v74 = vpack.c.b16 %v64, %v62
  %v75 = vpack.c.b16 %v67, %v65
  %v76 = vpack.c.b16 %v68, %v66
  %v77 = vpack.c.b16 %v69, %v69
  %v78 = vpack.c.b16 %v70, %v70
  %v102 = vunpack.c.l.b16 %v24
  %v103 = vunpack.c.l.b16 %v25
  %v104 = vunpack.c.l.b16 %v26
  %v105 = vunpack.c.l.b16 %v27
  %v106 = vunpack.c.l.b16 %v28
  %v107 = vunpack.c.l.b16 %v29
  %v108 = vunpack.c.l.b16 %v30
  %v109 = vunpack.c.l.b16 %v31
  %v110 = vunpack.c.l.b16 %v32
  %v111 = vunpack.c.l.b16 %v33
  %v112 = vunpack.c.l.b16 %v34
  %v113 = vunpack.c.l.b16 %v35
  %v114 = vunpack.c.l.b16 %v36
  %v115 = vunpack.c.l.b16 %v37
  %v116 = vunpack.c.l.b16 %v38
  %v117 = vunpack.c.l.b16 %v39
  %v118 = vunpack.c.l.b16 %v40
  %v119 = vunpack.c.l.b16 %v41
  %v120 = vunpack.c.l.b16 %v42
  %v121 = vpack.c.b16 %v103, %v102
  %v122 = vpack.c.b16 %v105, %v104
  %v123 = vpack.c.b16 %v107, %v106
  %v124 = vpack.c.b16 %v109, %v108
  %v125 = vpack.c.b16 %v111, %v110
  %v126 = vpack.c.b16 %v113, %v112
  %v127 = vpack.c.b16 %v115, %v114
  %v128 = vpack.c.b16 %v117, %v116
  %v129 = vpack.c.b16 %v119, %v118
  %v130 = vpack.c.b16 %v120, %v120
  %vm140 = vcmask 179200
  %v142 = vsel %vm140, %v72, 0
  %v145 = vsel %vm140, %v74, 0
  %v148 = vsel %vm140, %v76, 0
  %v151 = vsel %vm140, %v78, 0
  %vm153 = vcmask 1042432
  %v155 = vsel %vm153, %v130, 0
  %157 = vmatprep.subr.bf16.mxu0 0
  %158 = vmatpush1.bf16.msra.mxu0 %v128
  %159 = vmatprep.subr.bf16.mxu0 0
  %160 = vmatpush1.bf16.msra.mxu0 %v127
  %161 = vmatprep.subr.bf16.mxu0 0
  %162 = vmatpush1.bf16.msra.mxu0 %v126
  %163 = vmatprep.subr.bf16.mxu0 0
  %164 = vmatpush1.bf16.msra.mxu0 %v125
  %165 = vmatprep.subr.bf16.mxu0 0
  %166 = vmatpush1.bf16.msra.mxu0 %v124
  %167 = vmatprep.subr.bf16.mxu0 0
  %168 = vmatpush1.bf16.msra.mxu0 %v123
  %169 = vmatprep.subr.bf16.mxu0 0
  %170 = vmatpush1.bf16.msra.mxu0 %v122
  %171 = vmatprep.subr.bf16.mxu0 0
  %172 = vmatpush1.bf16.msra.mxu0 %v121
  %173 = vmatprep.subr.bf16.mxu0 0
  %174 = vmatpush2.bf16.msra.mxu0 0
  %175 = vmatprep.subr.bf16.mxu0 0
  %176 = vmatpush2.bf16.msra.mxu0 0
  %177 = vmatprep.subr.bf16.mxu0 0
  %178 = vmatpush2.bf16.msra.mxu0 0
  %179 = vmatprep.subr.bf16.mxu0 0
  %180 = vmatpush2.bf16.msra.mxu0 0
  %181 = vmatprep.subr.bf16.mxu0 0
  %182 = vmatpush2.bf16.msra.mxu0 0
  %183 = vmatprep.subr.bf16.mxu0 0
  %184 = vmatpush2.bf16.msra.mxu0 0
  %185 = vmatprep.subr.bf16.mxu0 0
  %186 = vmatpush2.bf16.msra.mxu0 %v155
  %187 = vmatprep.subr.bf16.mxu0 0
  %188 = vmatpush2.bf16.msra.mxu0 %v129
  %189 = vmatprep.mubr.bf16.mxu0 %v142
  %190 = vmatmul.mubr.bf16.gmra.mxu0 %v71
  %v191 = vpop.f32.mrf.mxu0
  %v192 = vadd.f32 0.0, %v191
  %v193 = vpop.f32.mrf.mxu0
  %v194 = vpop.f32.mrf.mxu0
  %v195 = vadd.f32 0.0, %v194
  %v196 = vpop.f32.mrf.mxu0
  %197 = vmatprep.mubr.bf16.mxu0 %v145
  %198 = vmatmul.mubr.bf16.gmra.mxu0 %v73
  %v199 = vpop.f32.mrf.mxu0
  %v200 = vadd.f32 0.0, %v199
  %v201 = vpop.f32.mrf.mxu0
  %v202 = vpop.f32.mrf.mxu0
  %v203 = vadd.f32 0.0, %v202
  %v204 = vpop.f32.mrf.mxu0
  %205 = vmatprep.mubr.bf16.mxu0 %v148
  %206 = vmatmul.mubr.bf16.gmra.mxu0 %v75
  %v207 = vpop.f32.mrf.mxu0
  %v208 = vadd.f32 0.0, %v207
  %v209 = vpop.f32.mrf.mxu0
  %v210 = vpop.f32.mrf.mxu0
  %v211 = vadd.f32 0.0, %v210
  %v212 = vpop.f32.mrf.mxu0
  %213 = vmatprep.mubr.bf16.mxu0 %v151
  %214 = vmatmul.mubr.bf16.gmra.mxu0 %v77
  %v215 = vpop.f32.mrf.mxu0
  %v216 = vadd.f32 0.0, %v215
  %v217 = vpop.f32.mrf.mxu0
  %v218 = vpop.f32.mrf.mxu0
  %v219 = vpop.f32.mrf.mxu0
  %220 = vdwg.mxu0
  %v221 = vld [vmem:[%s1] sm:$0xff]
  %v222 = vld [vmem:[%s1 + $0x8] sm:$0xff]
  %v223 = vld [vmem:[%s1 + $0x10] sm:$0xff]
  %v224 = vld [vmem:[%s1 + $0x18] sm:$0xff]
  %v225 = vld [vmem:[%s1 + $0x20] sm:$0xff]
  %v226 = vld [vmem:[%s1 + $0x28] sm:$0xff]
  %v227 = vld [vmem:[%s1 + $0x30] sm:$0x11]
  %v235 = vunpack.c.l.b16 %v221
  %v236 = vunpack.c.h.b16 %v221
  %v237 = vunpack.c.l.b16 %v222
  %v238 = vunpack.c.h.b16 %v222
  %v239 = vunpack.c.l.b16 %v223
  %v240 = vunpack.c.h.b16 %v223
  %v241 = vunpack.c.l.b16 %v224
  %v242 = vunpack.c.h.b16 %v224
  %v243 = vunpack.c.l.b16 %v225
  %v244 = vunpack.c.h.b16 %v225
  %v245 = vunpack.c.l.b16 %v226
  %v246 = vunpack.c.h.b16 %v226
  %v247 = vunpack.c.l.b16 %v227
  %v248 = vunpack.c.h.b16 %v227
  %v249 = vpack.c.b16 %v237, %v235
  %v250 = vpack.c.b16 %v238, %v236
  %v251 = vpack.c.b16 %v241, %v239
  %v252 = vpack.c.b16 %v242, %v240
  %v253 = vpack.c.b16 %v245, %v243
  %v254 = vpack.c.b16 %v246, %v244
  %v255 = vpack.c.b16 %v247, %v247
  %v256 = vpack.c.b16 %v248, %v248
  %v262 = vsel %vm140, %v250, 0
  %v265 = vsel %vm140, %v252, 0
  %v268 = vsel %vm140, %v254, 0
  %v271 = vsel %vm140, %v256, 0
  %273 = vmatprep.subr.bf16.mxu0 0
  %274 = vmatpush1.bf16.msra.mxu0 %v128
  %275 = vmatprep.subr.bf16.mxu0 0
  %276 = vmatpush1.bf16.msra.mxu0 %v127
  %277 = vmatprep.subr.bf16.mxu0 0
  %278 = vmatpush1.bf16.msra.mxu0 %v126
  %279 = vmatprep.subr.bf16.mxu0 0
  %280 = vmatpush1.bf16.msra.mxu0 %v125
  %281 = vmatprep.subr.bf16.mxu0 0
  %282 = vmatpush1.bf16.msra.mxu0 %v124
  %283 = vmatprep.subr.bf16.mxu0 0
  %284 = vmatpush1.bf16.msra.mxu0 %v123
  %285 = vmatprep.subr.bf16.mxu0 0
  %286 = vmatpush1.bf16.msra.mxu0 %v122
  %287 = vmatprep.subr.bf16.mxu0 0
  %288 = vmatpush1.bf16.msra.mxu0 %v121
  %289 = vmatprep.subr.bf16.mxu0 0
  %290 = vmatpush2.bf16.msra.mxu0 0
  %291 = vmatprep.subr.bf16.mxu0 0
  %292 = vmatpush2.bf16.msra.mxu0 0
  %293 = vmatprep.subr.bf16.mxu0 0
  %294 = vmatpush2.bf16.msra.mxu0 0
  %295 = vmatprep.subr.bf16.mxu0 0
  %296 = vmatpush2.bf16.msra.mxu0 0
  %297 = vmatprep.subr.bf16.mxu0 0
  %298 = vmatpush2.bf16.msra.mxu0 0
  %299 = vmatprep.subr.bf16.mxu0 0
  %300 = vmatpush2.bf16.msra.mxu0 0
  %301 = vmatprep.subr.bf16.mxu0 0
  %302 = vmatpush2.bf16.msra.mxu0 %v155
  %303 = vmatprep.subr.bf16.mxu0 0
  %304 = vmatpush2.bf16.msra.mxu0 %v129
  %305 = vmatprep.mubr.bf16.mxu0 %v262
  %306 = vmatmul.mubr.bf16.gmra.mxu0 %v249
  %v307 = vpop.f32.mrf.mxu0
  %v308 = vadd.f32 0.0, %v307
  %v309 = vpop.f32.mrf.mxu0
  %v310 = vpop.f32.mrf.mxu0
  %v311 = vadd.f32 0.0, %v310
  %v312 = vpop.f32.mrf.mxu0
  %313 = vmatprep.mubr.bf16.mxu0 %v265
  %314 = vmatmul.mubr.bf16.gmra.mxu0 %v251
  %v315 = vpop.f32.mrf.mxu0
  %v316 = vadd.f32 0.0, %v315
  %v317 = vpop.f32.mrf.mxu0
  %v318 = vpop.f32.mrf.mxu0
  %v319 = vadd.f32 0.0, %v318
  %v320 = vpop.f32.mrf.mxu0
  %321 = vmatprep.mubr.bf16.mxu0 %v268
  %322 = vmatmul.mubr.bf16.gmra.mxu0 %v253
  %v323 = vpop.f32.mrf.mxu0
  %v324 = vadd.f32 0.0, %v323
  %v325 = vpop.f32.mrf.mxu0
  %v326 = vpop.f32.mrf.mxu0
  %v327 = vadd.f32 0.0, %v326
  %v328 = vpop.f32.mrf.mxu0
  %329 = vmatprep.mubr.bf16.mxu0 %v271
  %330 = vmatmul.mubr.bf16.gmra.mxu0 %v255
  %v331 = vpop.f32.mrf.mxu0
  %v332 = vadd.f32 0.0, %v331
  %v333 = vpop.f32.mrf.mxu0
  %v334 = vpop.f32.mrf.mxu0
  %v335 = vpop.f32.mrf.mxu0
  %336 = vdwg.mxu0
  %v337 = vmax.f32 %v192, %v308
  %v338 = vmax.f32 %v195, %v311
  %v339 = vmax.f32 %v200, %v316
  %v340 = vmax.f32 %v203, %v319
  %v341 = vmax.f32 %v208, %v324
  %v342 = vmax.f32 %v211, %v327
  %v343 = vmax.f32 %v216, %v332
  %v344 = vld [vmem:[%s2] sm:$0xff]
  %v345 = vld [vmem:[%s2 + $0x8] sm:$0xff]
  %v346 = vld [vmem:[%s2 + $0x10] sm:$0xff]
  %v347 = vld [vmem:[%s2 + $0x18] sm:$0xff]
  %v348 = vld [vmem:[%s2 + $0x20] sm:$0xff]
  %v349 = vld [vmem:[%s2 + $0x28] sm:$0xff]
  %v350 = vld [vmem:[%s2 + $0x30] sm:$0x11]
  %v358 = vunpack.c.l.b16 %v344
  %v359 = vunpack.c.h.b16 %v344
  %v360 = vunpack.c.l.b16 %v345
  %v361 = vunpack.c.h.b16 %v345
  %v362 = vunpack.c.l.b16 %v346
  %v363 = vunpack.c.h.b16 %v346
  %v364 = vunpack.c.l.b16 %v347
  %v365 = vunpack.c.h.b16 %v347
  %v366 = vunpack.c.l.b16 %v348
  %v367 = vunpack.c.h.b16 %v348
  %v368 = vunpack.c.l.b16 %v349
  %v369 = vunpack.c.h.b16 %v349
  %v370 = vunpack.c.l.b16 %v350
  %v371 = vunpack.c.h.b16 %v350
  %v372 = vpack.c.b16 %v360, %v358
  %v373 = vpack.c.b16 %v361, %v359
  %v374 = vpack.c.b16 %v364, %v362
  %v375 = vpack.c.b16 %v365, %v363
  %v376 = vpack.c.b16 %v368, %v366
  %v377 = vpack.c.b16 %v369, %v367
  %v378 = vpack.c.b16 %v370, %v370
  %v379 = vpack.c.b16 %v371, %v371
  %v385 = vsel %vm140, %v373, 0
  %v388 = vsel %vm140, %v375, 0
  %v391 = vsel %vm140, %v377, 0
  %v394 = vsel %vm140, %v379, 0
  %396 = vmatprep.subr.bf16.mxu0 0
  %397 = vmatpush1.bf16.msra.mxu0 %v128
  %398 = vmatprep.subr.bf16.mxu0 0
  %399 = vmatpush1.bf16.msra.mxu0 %v127
  %400 = vmatprep.subr.bf16.mxu0 0
  %401 = vmatpush1.bf16.msra.mxu0 %v126
  %402 = vmatprep.subr.bf16.mxu0 0
  %403 = vmatpush1.bf16.msra.mxu0 %v125
  %404 = vmatprep.subr.bf16.mxu0 0
  %405 = vmatpush1.bf16.msra.mxu0 %v124
  %406 = vmatprep.subr.bf16.mxu0 0
  %407 = vmatpush1.bf16.msra.mxu0 %v123
  %408 = vmatprep.subr.bf16.mxu0 0
  %409 = vmatpush1.bf16.msra.mxu0 %v122
  %410 = vmatprep.subr.bf16.mxu0 0
  %411 = vmatpush1.bf16.msra.mxu0 %v121
  %412 = vmatprep.subr.bf16.mxu0 0
  %413 = vmatpush2.bf16.msra.mxu0 0
  %414 = vmatprep.subr.bf16.mxu0 0
  %415 = vmatpush2.bf16.msra.mxu0 0
  %416 = vmatprep.subr.bf16.mxu0 0
  %417 = vmatpush2.bf16.msra.mxu0 0
  %418 = vmatprep.subr.bf16.mxu0 0
  %419 = vmatpush2.bf16.msra.mxu0 0
  %420 = vmatprep.subr.bf16.mxu0 0
  %421 = vmatpush2.bf16.msra.mxu0 0
  %422 = vmatprep.subr.bf16.mxu0 0
  %423 = vmatpush2.bf16.msra.mxu0 0
  %424 = vmatprep.subr.bf16.mxu0 0
  %425 = vmatpush2.bf16.msra.mxu0 %v155
  %426 = vmatprep.subr.bf16.mxu0 0
  %427 = vmatpush2.bf16.msra.mxu0 %v129
  %428 = vmatprep.mubr.bf16.mxu0 %v385
  %429 = vmatmul.mubr.bf16.gmra.mxu0 %v372
  %v430 = vpop.f32.mrf.mxu0
  %v431 = vadd.f32 0.0, %v430
  %v432 = vpop.f32.mrf.mxu0
  %v433 = vpop.f32.mrf.mxu0
  %v434 = vadd.f32 0.0, %v433
  %v435 = vpop.f32.mrf.mxu0
  %436 = vmatprep.mubr.bf16.mxu0 %v388
  %437 = vmatmul.mubr.bf16.gmra.mxu0 %v374
  %v438 = vpop.f32.mrf.mxu0
  %v439 = vadd.f32 0.0, %v438
  %v440 = vpop.f32.mrf.mxu0
  %v441 = vpop.f32.mrf.mxu0
  %v442 = vadd.f32 0.0, %v441
  %v443 = vpop.f32.mrf.mxu0
  %444 = vmatprep.mubr.bf16.mxu0 %v391
  %445 = vmatmul.mubr.bf16.gmra.mxu0 %v376
  %v446 = vpop.f32.mrf.mxu0
  %v447 = vadd.f32 0.0, %v446
  %v448 = vpop.f32.mrf.mxu0
  %v449 = vpop.f32.mrf.mxu0
  %v450 = vadd.f32 0.0, %v449
  %v451 = vpop.f32.mrf.mxu0
  %452 = vmatprep.mubr.bf16.mxu0 %v394
  %453 = vmatmul.mubr.bf16.gmra.mxu0 %v378
  %v454 = vpop.f32.mrf.mxu0
  %v455 = vadd.f32 0.0, %v454
  %v456 = vpop.f32.mrf.mxu0
  %v457 = vpop.f32.mrf.mxu0
  %v458 = vpop.f32.mrf.mxu0
  %459 = vdwg.mxu0
  %v460 = vld [vmem:[%s3] sm:$0xff]
  %v461 = vld [vmem:[%s3 + $0x8] sm:$0xff]
  %v462 = vld [vmem:[%s3 + $0x10] sm:$0xff]
  %v463 = vld [vmem:[%s3 + $0x18] sm:$0xff]
  %v464 = vld [vmem:[%s3 + $0x20] sm:$0xff]
  %v465 = vld [vmem:[%s3 + $0x28] sm:$0xff]
  %v466 = vld [vmem:[%s3 + $0x30] sm:$0x11]
  %v474 = vunpack.c.l.b16 %v460
  %v475 = vunpack.c.h.b16 %v460
  %v476 = vunpack.c.l.b16 %v461
  %v477 = vunpack.c.h.b16 %v461
  %v478 = vunpack.c.l.b16 %v462
  %v479 = vunpack.c.h.b16 %v462
  %v480 = vunpack.c.l.b16 %v463
  %v481 = vunpack.c.h.b16 %v463
  %v482 = vunpack.c.l.b16 %v464
  %v483 = vunpack.c.h.b16 %v464
  %v484 = vunpack.c.l.b16 %v465
  %v485 = vunpack.c.h.b16 %v465
  %v486 = vunpack.c.l.b16 %v466
  %v487 = vunpack.c.h.b16 %v466
  %v488 = vpack.c.b16 %v476, %v474
  %v489 = vpack.c.b16 %v477, %v475
  %v490 = vpack.c.b16 %v480, %v478
  %v491 = vpack.c.b16 %v481, %v479
  %v492 = vpack.c.b16 %v484, %v482
  %v493 = vpack.c.b16 %v485, %v483
  %v494 = vpack.c.b16 %v486, %v486
  %v495 = vpack.c.b16 %v487, %v487
  %v501 = vsel %vm140, %v489, 0
  %v504 = vsel %vm140, %v491, 0
  %v507 = vsel %vm140, %v493, 0
  %v510 = vsel %vm140, %v495, 0
  %512 = vmatprep.subr.bf16.mxu0 0
  %513 = vmatpush1.bf16.msra.mxu0 %v128
  %514 = vmatprep.subr.bf16.mxu0 0
  %515 = vmatpush1.bf16.msra.mxu0 %v127
  %516 = vmatprep.subr.bf16.mxu0 0
  %517 = vmatpush1.bf16.msra.mxu0 %v126
  %518 = vmatprep.subr.bf16.mxu0 0
  %519 = vmatpush1.bf16.msra.mxu0 %v125
  %520 = vmatprep.subr.bf16.mxu0 0
  %521 = vmatpush1.bf16.msra.mxu0 %v124
  %522 = vmatprep.subr.bf16.mxu0 0
  %523 = vmatpush1.bf16.msra.mxu0 %v123
  %524 = vmatprep.subr.bf16.mxu0 0
  %525 = vmatpush1.bf16.msra.mxu0 %v122
  %526 = vmatprep.subr.bf16.mxu0 0
  %527 = vmatpush1.bf16.msra.mxu0 %v121
  %528 = vmatprep.subr.bf16.mxu0 0
  %529 = vmatpush2.bf16.msra.mxu0 0
  %530 = vmatprep.subr.bf16.mxu0 0
  %531 = vmatpush2.bf16.msra.mxu0 0
  %532 = vmatprep.subr.bf16.mxu0 0
  %533 = vmatpush2.bf16.msra.mxu0 0
  %534 = vmatprep.subr.bf16.mxu0 0
  %535 = vmatpush2.bf16.msra.mxu0 0
  %536 = vmatprep.subr.bf16.mxu0 0
  %537 = vmatpush2.bf16.msra.mxu0 0
  %538 = vmatprep.subr.bf16.mxu0 0
  %539 = vmatpush2.bf16.msra.mxu0 0
  %540 = vmatprep.subr.bf16.mxu0 0
  %541 = vmatpush2.bf16.msra.mxu0 %v155
  %542 = vmatprep.subr.bf16.mxu0 0
  %543 = vmatpush2.bf16.msra.mxu0 %v129
  %544 = vmatprep.mubr.bf16.mxu0 %v501
  %545 = vmatmul.mubr.bf16.gmra.mxu0 %v488
  %v546 = vpop.f32.mrf.mxu0
  %v547 = vadd.f32 0.0, %v546
  %v548 = vpop.f32.mrf.mxu0
  %v549 = vpop.f32.mrf.mxu0
  %v550 = vadd.f32 0.0, %v549
  %v551 = vpop.f32.mrf.mxu0
  %552 = vmatprep.mubr.bf16.mxu0 %v504
  %553 = vmatmul.mubr.bf16.gmra.mxu0 %v490
  %v554 = vpop.f32.mrf.mxu0
  %v555 = vadd.f32 0.0, %v554
  %v556 = vpop.f32.mrf.mxu0
  %v557 = vpop.f32.mrf.mxu0
  %v558 = vadd.f32 0.0, %v557
  %v559 = vpop.f32.mrf.mxu0
  %560 = vmatprep.mubr.bf16.mxu0 %v507
  %561 = vmatmul.mubr.bf16.gmra.mxu0 %v492
  %v562 = vpop.f32.mrf.mxu0
  %v563 = vadd.f32 0.0, %v562
  %v564 = vpop.f32.mrf.mxu0
  %v565 = vpop.f32.mrf.mxu0
  %v566 = vadd.f32 0.0, %v565
  %v567 = vpop.f32.mrf.mxu0
  %568 = vmatprep.mubr.bf16.mxu0 %v510
  %569 = vmatmul.mubr.bf16.gmra.mxu0 %v494
  %v570 = vpop.f32.mrf.mxu0
  %v571 = vadd.f32 0.0, %v570
  %v572 = vpop.f32.mrf.mxu0
  %v573 = vpop.f32.mrf.mxu0
  %v574 = vpop.f32.mrf.mxu0
  %575 = vdwg.mxu0
  %v576 = vmax.f32 %v431, %v547
  %v577 = vmax.f32 %v434, %v550
  %v578 = vmax.f32 %v439, %v555
  %v579 = vmax.f32 %v442, %v558
  %v580 = vmax.f32 %v447, %v563
  %v581 = vmax.f32 %v450, %v566
  %v582 = vmax.f32 %v455, %v571
  %v583 = vmax.f32 %v337, %v576
  %v584 = vmax.f32 %v338, %v577
  %v585 = vmax.f32 %v339, %v578
  %v586 = vmax.f32 %v340, %v579
  %v587 = vmax.f32 %v341, %v580
  %v588 = vmax.f32 %v342, %v581
  %v589 = vmax.f32 %v343, %v582
  %v590 = vld [vmem:[%s5] sm:$0x1]
  %v592 = vlaneseq
  %v593 = vshrl.u32 %v592, 7
  %v594 = vsub.s32 0, %v593
  %v595 = vrot.slane %v590, %v594
  %v597 = vadd.f32 %v583, %v595
  %v598 = vadd.f32 %v584, %v595
  %v599 = vadd.f32 %v585, %v595
  %v600 = vadd.f32 %v586, %v595
  %v601 = vadd.f32 %v587, %v595
  %v602 = vadd.f32 %v588, %v595
  %v603 = vadd.f32 %v589, %v595
  %v604 = vmax.f32 %v597, 0.0
  %v605 = vmax.f32 %v598, 0.0
  %v606 = vmax.f32 %v599, 0.0
  %v607 = vmax.f32 %v600, 0.0
  %v608 = vmax.f32 %v601, 0.0
  %v609 = vmax.f32 %v602, 0.0
  %v610 = vmax.f32 %v603, 0.0
  %vm611 = vcmask 130048
  %612 = vst.msk [vmem:[%s6] sm:$0xff] %vm611, %v604
  %613 = vst.msk [vmem:[%s6 + $0x8] sm:$0xff] %vm611, %v605
  %614 = vst.msk [vmem:[%s6 + $0x10] sm:$0xff] %vm611, %v606
  %615 = vst.msk [vmem:[%s6 + $0x18] sm:$0xff] %vm611, %v607
  %616 = vst.msk [vmem:[%s6 + $0x20] sm:$0xff] %vm611, %v608
  %617 = vst.msk [vmem:[%s6 + $0x28] sm:$0xff] %vm611, %v609
  %vm618 = vcmask 123904
  %619 = vst.msk [vmem:[%s6 + $0x30] sm:$0x3] %vm618, %v610
  // Predicated region
  $region26: #{net_forward.4} parent=0 // pred_check
    _
  $region27: #{net_forward.4} parent=0 // pred_check_branch
    %621 = sbr.rel (0) target = $region29
  $region28: #{net_forward.4} parent=0 // pred_region
    _
  $region29: #{net_forward.4} parent=0 // pred_fallthru
    _
  // Predicated region
  $region30: #{net_forward.4} parent=0 // pred_check
    _
  $region31: #{net_forward.4} parent=0 // pred_check_branch
    %623 = sbr.rel (0) target = $region33
  $region32: #{net_forward.4} parent=0 // pred_region
    _
  $region33: #{net_forward.4} parent=0 // pred_fallthru
    _

// kernel: net_forward.5
$region0: #{net_forward.5}
  #allocation0 [shape = 'u32[]', space=smem, size = 0x4, offset = 0x4, fixed_abs, tag = 'smem constant byte address 0x4 - core index']
  #allocation1 [shape = 'u32[144,128]{1,0:T(1,128)}', space=vmem, size = 0x12000, scoped, tag = 'internal scratch']
  %s0 = inlined_call_operand.vmem [shape: f32[2,400], index: 0, kind: input, shape index: {}]
  %s1 = inlined_call_operand.vmem [shape: f32[400,120], index: 1, kind: input, shape index: {}]
  %s2 = inlined_call_operand.vmem [shape: f32[1,120], index: 2, kind: input, shape index: {}]
  %s3 = inlined_call_operand.vmem [shape: f32[120,84], index: 3, kind: input, shape index: {}]
  %s4 = inlined_call_operand.vmem [shape: f32[1,84], index: 4, kind: input, shape index: {}]
  %s5 = inlined_call_operand.vmem [shape: f32[84,10], index: 5, kind: input, shape index: {}]
  %s6 = inlined_call_operand.vmem [shape: f32[1,10], index: 6, kind: input, shape index: {}]
  %s7 = inlined_call_operand.hbm [shape: f32[2,10], index: 7, kind: output, shape index: {}]
  %s8 = sld [smem:[#allocation0]]
  $region38: #{net_forward.5} parent=0
    _
  %s10 = ssub.s32 1, %s8
  %s11 = scalar_select 0, %s10, %s8
  $region1: #{net_forward.5} parent=0
    #allocation2 [shape = 'u8[1024]{0}', space=vmem, size = 0x400, scoped, tag = 'output window, operand 0, single buffered']
    #allocation3 [shape = 's32[1]{0}', space=sflag, size = 0x4, scoped, tag = 'scoped memory for net_forward.5']
    %12 = vsyncpa [#allocation3], 0
    // Predicated region
    $region2: #{net_forward.5} parent=1 // pred_check
      _
    $region3: #{net_forward.5} parent=1 // pred_check_branch
      %14 = sbr.rel (0) target = $region5
    $region4: #{net_forward.5} parent=1 // pred_region
      _
    $region5: #{net_forward.5} parent=1 // pred_fallthru
      _
    // Predicated region
    $region6: #{net_forward.5} parent=1 // pred_check
      _
    $region7: #{net_forward.5} parent=1 // pred_check_branch
      %16 = sbr.rel (0) target = $region9
    $region8: #{net_forward.5} parent=1 // pred_region
      _
    $region9: #{net_forward.5} parent=1 // pred_fallthru
      _
    // Predicated region
    $region10: #{net_forward.5} parent=1 // pred_check
      _
    $region11: #{net_forward.5} parent=1 // pred_check_branch
      %18 = sbr.rel (0) target = $region13
    $region12: #{net_forward.5} parent=1 // pred_region
      _
    $region13: #{net_forward.5} parent=1 // pred_fallthru
      _
    // Predicated region
    $region14: #{net_forward.5} parent=1 // pred_check
      _
    $region15: #{net_forward.5} parent=1 // pred_check_branch
      %20 = sbr.rel (0) target = $region17
    $region16: #{net_forward.5} parent=1 // pred_region
      _
    $region17: #{net_forward.5} parent=1 // pred_fallthru
      _
    // Predicated region
    $region18: #{net_forward.5} parent=1 // pred_check
      _
    $region19: #{net_forward.5} parent=1 // pred_check_branch
      %22 = sbr.rel (0) target = $region21
    $region20: #{net_forward.5} parent=1 // pred_region
      _
    $region21: #{net_forward.5} parent=1 // pred_fallthru
      _
    // Predicated region
    $region22: #{net_forward.5} parent=1 // pred_check
      _
    $region23: #{net_forward.5} parent=1 // pred_check_branch
      %24 = sbr.rel (0) target = $region25
    $region24: #{net_forward.5} parent=1 // pred_region
      _
    $region25: #{net_forward.5} parent=1 // pred_fallthru
      _
    // Predicated region
    $region26: #{net_forward.5} parent=1 // pred_check
      _
    $region27: #{net_forward.5} parent=1 // pred_check_branch
      %26 = sbr.rel (0) target = $region29
    $region28: #{net_forward.5} parent=1 // pred_region
      _
    $region29: #{net_forward.5} parent=1 // pred_fallthru
      _
    %v27 = vld [vmem:[%s0] sm:$0xff]
    %v28 = vld [vmem:[%s1] sm:$0xff]
    %v29 = vld [vmem:[%s1 + $0x8] sm:$0xff]
    %v30 = vld [vmem:[%s1 + $0x10] sm:$0xff]
    %v31 = vld [vmem:[%s1 + $0x18] sm:$0xff]
    %v32 = vld [vmem:[%s1 + $0x20] sm:$0xff]
    %v33 = vld [vmem:[%s1 + $0x28] sm:$0xff]
    %v34 = vld [vmem:[%s1 + $0x30] sm:$0xff]
    %v35 = vld [vmem:[%s1 + $0x38] sm:$0xff]
    %v36 = vld [vmem:[%s1 + $0x40] sm:$0xff]
    %v37 = vld [vmem:[%s1 + $0x48] sm:$0xff]
    %v38 = vld [vmem:[%s1 + $0x50] sm:$0xff]
    %v39 = vld [vmem:[%s1 + $0x58] sm:$0xff]
    %v40 = vld [vmem:[%s1 + $0x60] sm:$0xff]
    %v41 = vld [vmem:[%s1 + $0x68] sm:$0xff]
    %v42 = vld [vmem:[%s1 + $0x70] sm:$0xff]
    %v43 = vld [vmem:[%s1 + $0x78] sm:$0xff]
    %v44 = vld [vmem:[%s1 + $0x80] sm:$0xff]
    %v45 = vld [vmem:[%s1 + $0x88] sm:$0xff]
    %v46 = vld [vmem:[%s1 + $0x90] sm:$0xff]
    %v47 = vld [vmem:[%s1 + $0x98] sm:$0xff]
    %v48 = vld [vmem:[%s1 + $0xa0] sm:$0xff]
    %v49 = vld [vmem:[%s1 + $0xa8] sm:$0xff]
    %v50 = vld [vmem:[%s1 + $0xb0] sm:$0xff]
    %v51 = vld [vmem:[%s1 + $0xb8] sm:$0xff]
    %v52 = vld [vmem:[%s1 + $0xc0] sm:$0xff]
    %v53 = vld [vmem:[%s1 + $0xc8] sm:$0xff]
    %v54 = vld [vmem:[%s1 + $0xd0] sm:$0xff]
    %v55 = vld [vmem:[%s1 + $0xd8] sm:$0xff]
    %v56 = vld [vmem:[%s1 + $0xe0] sm:$0xff]
    %v57 = vld [vmem:[%s1 + $0xe8] sm:$0xff]
    %v58 = vld [vmem:[%s1 + $0xf0] sm:$0xff]
    %v59 = vld [vmem:[%s1 + $0xf8] sm:$0xff]
    %v60 = vld [vmem:[%s1 + $0x100] sm:$0xff]
    %v61 = vld [vmem:[%s1 + $0x108] sm:$0xff]
    %v62 = vld [vmem:[%s1 + $0x110] sm:$0xff]
    %v63 = vld [vmem:[%s1 + $0x118] sm:$0xff]
    %v64 = vld [vmem:[%s1 + $0x120] sm:$0xff]
    %v65 = vld [vmem:[%s1 + $0x128] sm:$0xff]
    %v66 = vld [vmem:[%s1 + $0x130] sm:$0xff]
    %v67 = vld [vmem:[%s1 + $0x138] sm:$0xff]
    %v68 = vld [vmem:[%s1 + $0x140] sm:$0xff]
    %v69 = vld [vmem:[%s1 + $0x148] sm:$0xff]
    %v70 = vld [vmem:[%s1 + $0x150] sm:$0xff]
    %v71 = vld [vmem:[%s1 + $0x158] sm:$0xff]
    %v72 = vld [vmem:[%s1 + $0x160] sm:$0xff]
    %v73 = vld [vmem:[%s1 + $0x168] sm:$0xff]
    %v74 = vld [vmem:[%s1 + $0x170] sm:$0xff]
    %v75 = vld [vmem:[%s1 + $0x178] sm:$0xff]
    %v76 = vld [vmem:[%s1 + $0x180] sm:$0xff]
    %v77 = vld [vmem:[%s1 + $0x188] sm:$0xff]
    %v78 = vld [vmem:[%s2] sm:$0x1]
    %v80 = vlaneseq
    %v81 = vshrl.u32 %v80, 7
    %v82 = vsub.s32 0, %v81
    %v83 = vrot.slane %v78, %v82
    %v86 = vcombine.high %v27, %v27
    %v88 = vunpack.c.l.s4 1983009808
    %v89 = vunpack.c.0.s8 %v88
    %v90 = vlaneseq
    %v91 = vshrl.u32 %v90, 7
    %v92 = vsub.s32 %v89, %v91
    %v93 = vrot.slane %v27, %v92
    %v95 = vunpack.c.l.s4 1983009808
    %v96 = vunpack.c.0.s8 %v95
    %v97 = vlaneseq
    %v98 = vshrl.u32 %v97, 7
    %v99 = vsub.s32 %v96, %v98
    %v100 = vrot.slane %v86, %v99
    %v101 = vcombine.high %v93, %v93
    %v102 = vcombine.high %v100, %v100
    %vm106 = vcmask 130048
    %v107 = vsel %vm106, %v102, 0
    %109 = vmatprep.subr.mxu0 0.0
    %110 = vmatpush1.msra.mxu0 %v43
    %111 = vmatprep.subr.mxu0 0.0
    %112 = vmatpush1.msra.mxu0 %v42
    %113 = vmatprep.subr.mxu0 0.0
    %114 = vmatpush1.msra.mxu0 %v41
    %115 = vmatprep.subr.mxu0 0.0
    %116 = vmatpush1.msra.mxu0 %v40
    %117 = vmatprep.subr.mxu0 0.0
    %118 = vmatpush1.msra.mxu0 %v39
    %119 = vmatprep.subr.mxu0 0.0
    %120 = vmatpush1.msra.mxu0 %v38
    %121 = vmatprep.subr.mxu0 0.0
    %122 = vmatpush1.msra.mxu0 %v37
    %123 = vmatprep.subr.mxu0 0.0
    %124 = vmatpush1.msra.mxu0 %v36
    %125 = vmatprep.subr.mxu0 0.0
    %126 = vmatpush1.msra.mxu0 %v35
    %127 = vmatprep.subr.mxu0 0.0
    %128 = vmatpush1.msra.mxu0 %v34
    %129 = vmatprep.subr.mxu0 0.0
    %130 = vmatpush1.msra.mxu0 %v33
    %131 = vmatprep.subr.mxu0 0.0
    %132 = vmatpush1.msra.mxu0 %v32
    %133 = vmatprep.subr.mxu0 0.0
    %134 = vmatpush1.msra.mxu0 %v31
    %135 = vmatprep.subr.mxu0 0.0
    %136 = vmatpush1.msra.mxu0 %v30
    %137 = vmatprep.subr.mxu0 0.0
    %138 = vmatpush1.msra.mxu0 %v29
    %139 = vmatprep.subr.mxu0 0.0
    %140 = vmatpush1.msra.mxu0 %v28
    %141 = vmatprep.subr.mxu0 0.0
    %142 = vmatpush2.msra.mxu0 %v59
    %143 = vmatprep.subr.mxu0 0.0
    %144 = vmatpush2.msra.mxu0 %v58
    %145 = vmatprep.subr.mxu0 0.0
    %146 = vmatpush2.msra.mxu0 %v57
    %147 = vmatprep.subr.mxu0 0.0
    %148 = vmatpush2.msra.mxu0 %v56
    %149 = vmatprep.subr.mxu0 0.0
    %150 = vmatpush2.msra.mxu0 %v55
    %151 = vmatprep.subr.mxu0 0.0
    %152 = vmatpush2.msra.mxu0 %v54
    %153 = vmatprep.subr.mxu0 0.0
    %154 = vmatpush2.msra.mxu0 %v53
    %155 = vmatprep.subr.mxu0 0.0
    %156 = vmatpush2.msra.mxu0 %v52
    %157 = vmatprep.subr.mxu0 0.0
    %158 = vmatpush2.msra.mxu0 %v51
    %159 = vmatprep.subr.mxu0 0.0
    %160 = vmatpush2.msra.mxu0 %v50
    %161 = vmatprep.subr.mxu0 0.0
    %162 = vmatpush2.msra.mxu0 %v49
    %163 = vmatprep.subr.mxu0 0.0
    %164 = vmatpush2.msra.mxu0 %v48
    %165 = vmatprep.subr.mxu0 0.0
    %166 = vmatpush2.msra.mxu0 %v47
    %167 = vmatprep.subr.mxu0 0.0
    %168 = vmatpush2.msra.mxu0 %v46
    %169 = vmatprep.subr.mxu0 0.0
    %170 = vmatpush2.msra.mxu0 %v45
    %171 = vmatprep.subr.mxu0 0.0
    %172 = vmatpush2.msra.mxu0 %v44
    %173 = vmatprep.mubr.f32.mxu0 %v101
    %174 = vmatmul.mubr.f32.gmra.mxu0 %v93
    %v175 = vpop.f32.mrf.mxu0
    %v176 = vadd.f32 %v83, %v175
    %v177 = vpop.f32.mrf.mxu0
    %178 = vdwg.mxu0
    %179 = vmatprep.subr.mxu0 0.0
    %180 = vmatpush1.msra.mxu0 %v75
    %181 = vmatprep.subr.mxu0 0.0
    %182 = vmatpush1.msra.mxu0 %v74
    %183 = vmatprep.subr.mxu0 0.0
    %184 = vmatpush1.msra.mxu0 %v73
    %185 = vmatprep.subr.mxu0 0.0
    %186 = vmatpush1.msra.mxu0 %v72
    %187 = vmatprep.subr.mxu0 0.0
    %188 = vmatpush1.msra.mxu0 %v71
    %189 = vmatprep.subr.mxu0 0.0
    %190 = vmatpush1.msra.mxu0 %v70
    %191 = vmatprep.subr.mxu0 0.0
    %192 = vmatpush1.msra.mxu0 %v69
    %193 = vmatprep.subr.mxu0 0.0
    %194 = vmatpush1.msra.mxu0 %v68
    %195 = vmatprep.subr.mxu0 0.0
    %196 = vmatpush1.msra.mxu0 %v67
    %197 = vmatprep.subr.mxu0 0.0
    %198 = vmatpush1.msra.mxu0 %v66
    %199 = vmatprep.subr.mxu0 0.0
    %200 = vmatpush1.msra.mxu0 %v65
    %201 = vmatprep.subr.mxu0 0.0
    %202 = vmatpush1.msra.mxu0 %v64
    %203 = vmatprep.subr.mxu0 0.0
    %204 = vmatpush1.msra.mxu0 %v63
    %205 = vmatprep.subr.mxu0 0.0
    %206 = vmatpush1.msra.mxu0 %v62
    %207 = vmatprep.subr.mxu0 0.0
    %208 = vmatpush1.msra.mxu0 %v61
    %209 = vmatprep.subr.mxu0 0.0
    %210 = vmatpush1.msra.mxu0 %v60
    %211 = vmatprep.subr.mxu0 0.0
    %212 = vmatpush2.msra.mxu0 0.0
    %213 = vmatprep.subr.mxu0 0.0
    %214 = vmatpush2.msra.mxu0 0.0
    %215 = vmatprep.subr.mxu0 0.0
    %216 = vmatpush2.msra.mxu0 0.0
    %217 = vmatprep.subr.mxu0 0.0
    %218 = vmatpush2.msra.mxu0 0.0
    %219 = vmatprep.subr.mxu0 0.0
    %220 = vmatpush2.msra.mxu0 0.0
    %221 = vmatprep.subr.mxu0 0.0
    %222 = vmatpush2.msra.mxu0 0.0
    %223 = vmatprep.subr.mxu0 0.0
    %224 = vmatpush2.msra.mxu0 0.0
    %225 = vmatprep.subr.mxu0 0.0
    %226 = vmatpush2.msra.mxu0 0.0
    %227 = vmatprep.subr.mxu0 0.0
    %228 = vmatpush2.msra.mxu0 0.0
    %229 = vmatprep.subr.mxu0 0.0
    %230 = vmatpush2.msra.mxu0 0.0
    %231 = vmatprep.subr.mxu0 0.0
    %232 = vmatpush2.msra.mxu0 0.0
    %233 = vmatprep.subr.mxu0 0.0
    %234 = vmatpush2.msra.mxu0 0.0
    %235 = vmatprep.subr.mxu0 0.0
    %236 = vmatpush2.msra.mxu0 0.0
    %237 = vmatprep.subr.mxu0 0.0
    %238 = vmatpush2.msra.mxu0 0.0
    %239 = vmatprep.subr.mxu0 0.0
    %240 = vmatpush2.msra.mxu0 %v77
    %241 = vmatprep.subr.mxu0 0.0
    %242 = vmatpush2.msra.mxu0 %v76
    %243 = vmatprep.mubr.f32.mxu0 %v107
    %244 = vmatmul.mubr.f32.gmra.mxu0 %v100
    %v245 = vpop.f32.mrf.mxu0
    %v246 = vadd.f32 %v176, %v245
    %v247 = vpop.f32.mrf.mxu0
    %248 = vdwg.mxu0
    %v249 = vmax.f32 %v246, 0.0
    %v250 = vld [vmem:[%s3] sm:$0xff]
    %v251 = vld [vmem:[%s3 + $0x8] sm:$0xff]
    %v252 = vld [vmem:[%s3 + $0x10] sm:$0xff]
    %v253 = vld [vmem:[%s3 + $0x18] sm:$0xff]
    %v254 = vld [vmem:[%s3 + $0x20] sm:$0xff]
    %v255 = vld [vmem:[%s3 + $0x28] sm:$0xff]
    %v256 = vld [vmem:[%s3 + $0x30] sm:$0xff]
    %v257 = vld [vmem:[%s3 + $0x38] sm:$0xff]
    %v258 = vld [vmem:[%s3 + $0x40] sm:$0xff]
    %v259 = vld [vmem:[%s3 + $0x48] sm:$0xff]
    %v260 = vld [vmem:[%s3 + $0x50] sm:$0xff]
    %v261 = vld [vmem:[%s3 + $0x58] sm:$0xff]
    %v262 = vld [vmem:[%s3 + $0x60] sm:$0xff]
    %v263 = vld [vmem:[%s3 + $0x68] sm:$0xff]
    %v264 = vld [vmem:[%s3 + $0x70] sm:$0xff]
    %v265 = vld [vmem:[%s4] sm:$0x1]
    %v267 = vlaneseq
    %v268 = vshrl.u32 %v267, 7
    %v269 = vsub.s32 0, %v268
    %v270 = vrot.slane %v265, %v269
    %vm272 = vcmask 982016
    %v274 = vsel %vm272, %v249, 0
    %276 = vmatprep.subr.mxu0 0.0
    %277 = vmatpush1.msra.mxu0 0.0
    %278 = vmatprep.subr.mxu0 0.0
    %279 = vmatpush1.msra.mxu0 %v264
    %280 = vmatprep.subr.mxu0 0.0
    %281 = vmatpush1.msra.mxu0 %v263
    %282 = vmatprep.subr.mxu0 0.0
    %283 = vmatpush1.msra.mxu0 %v262
    %284 = vmatprep.subr.mxu0 0.0
    %285 = vmatpush1.msra.mxu0 %v261
    %286 = vmatprep.subr.mxu0 0.0
    %287 = vmatpush1.msra.mxu0 %v260
    %288 = vmatprep.subr.mxu0 0.0
    %289 = vmatpush1.msra.mxu0 %v259
    %290 = vmatprep.subr.mxu0 0.0
    %291 = vmatpush1.msra.mxu0 %v258
    %292 = vmatprep.subr.mxu0 0.0
    %293 = vmatpush1.msra.mxu0 %v257
    %294 = vmatprep.subr.mxu0 0.0
    %295 = vmatpush1.msra.mxu0 %v256
    %296 = vmatprep.subr.mxu0 0.0
    %297 = vmatpush1.msra.mxu0 %v255
    %298 = vmatprep.subr.mxu0 0.0
    %299 = vmatpush1.msra.mxu0 %v254
    %300 = vmatprep.subr.mxu0 0.0
    %301 = vmatpush1.msra.mxu0 %v253
    %302 = vmatprep.subr.mxu0 0.0
    %303 = vmatpush1.msra.mxu0 %v252
    %304 = vmatprep.subr.mxu0 0.0
    %305 = vmatpush1.msra.mxu0 %v251
    %306 = vmatprep.subr.mxu0 0.0
    %307 = vmatpush1.msra.mxu0 %v250
    %308 = vmatprep.subr.mxu0 0.0
    %309 = vmatpush2.msra.mxu0 0.0
    %310 = vmatprep.subr.mxu0 0.0
    %311 = vmatpush2.msra.mxu0 0.0
    %312 = vmatprep.subr.mxu0 0.0
    %313 = vmatpush2.msra.mxu0 0.0
    %314 = vmatprep.subr.mxu0 0.0
    %315 = vmatpush2.msra.mxu0 0.0
    %316 = vmatprep.subr.mxu0 0.0
    %317 = vmatpush2.msra.mxu0 0.0
    %318 = vmatprep.subr.mxu0 0.0
    %319 = vmatpush2.msra.mxu0 0.0
    %320 = vmatprep.subr.mxu0 0.0
    %321 = vmatpush2.msra.mxu0 0.0
    %322 = vmatprep.subr.mxu0 0.0
    %323 = vmatpush2.msra.mxu0 0.0
    %324 = vmatprep.subr.mxu0 0.0
    %325 = vmatpush2.msra.mxu0 0.0
    %326 = vmatprep.subr.mxu0 0.0
    %327 = vmatpush2.msra.mxu0 0.0
    %328 = vmatprep.subr.mxu0 0.0
    %329 = vmatpush2.msra.mxu0 0.0
    %330 = vmatprep.subr.mxu0 0.0
    %331 = vmatpush2.msra.mxu0 0.0
    %332 = vmatprep.subr.mxu0 0.0
    %333 = vmatpush2.msra.mxu0 0.0
    %334 = vmatprep.subr.mxu0 0.0
    %335 = vmatpush2.msra.mxu0 0.0
    %336 = vmatprep.subr.mxu0 0.0
    %337 = vmatpush2.msra.mxu0 0.0
    %338 = vmatprep.subr.mxu0 0.0
    %339 = vmatpush2.msra.mxu0 0.0
    %340 = vmatprep.mubr.f32.mxu0 0.0
    %341 = vmatmul.mubr.f32.gmra.mxu0 %v274
    %v342 = vpop.f32.mrf.mxu0
    %v343 = vadd.f32 %v270, %v342
    %v344 = vpop.f32.mrf.mxu0
    %345 = vdwg.mxu0
    %v346 = vmax.f32 %v343, 0.0
    %v347 = vld [vmem:[%s5] sm:$0xff]
    %v348 = vld [vmem:[%s5 + $0x8] sm:$0xff]
    %v349 = vld [vmem:[%s5 + $0x10] sm:$0xff]
    %v350 = vld [vmem:[%s5 + $0x18] sm:$0xff]
    %v351 = vld [vmem:[%s5 + $0x20] sm:$0xff]
    %v352 = vld [vmem:[%s5 + $0x28] sm:$0xff]
    %v353 = vld [vmem:[%s5 + $0x30] sm:$0xff]
    %v354 = vld [vmem:[%s5 + $0x38] sm:$0xff]
    %v355 = vld [vmem:[%s5 + $0x40] sm:$0xff]
    %v356 = vld [vmem:[%s5 + $0x48] sm:$0xff]
    %v357 = vld [vmem:[%s5 + $0x50] sm:$0xf]
    %v358 = vld [vmem:[%s6] sm:$0x1]
    %v360 = vlaneseq
    %v361 = vshrl.u32 %v360, 7
    %v362 = vsub.s32 0, %v361
    %v363 = vrot.slane %v358, %v362
    %vm365 = vcmask 687104
    %v367 = vsel %vm365, %v346, 0
    %vm369 = vcmask 1043456
    %v371 = vsel %vm369, %v357, 0
    %373 = vmatprep.subr.mxu0 0.0
    %374 = vmatpush1.msra.mxu0 0.0
    %375 = vmatprep.subr.mxu0 0.0
    %376 = vmatpush1.msra.mxu0 0.0
    %377 = vmatprep.subr.mxu0 0.0
    %378 = vmatpush1.msra.mxu0 0.0
    %379 = vmatprep.subr.mxu0 0.0
    %380 = vmatpush1.msra.mxu0 0.0
    %381 = vmatprep.subr.mxu0 0.0
    %382 = vmatpush1.msra.mxu0 0.0
    %383 = vmatprep.subr.mxu0 0.0
    %384 = vmatpush1.msra.mxu0 %v371
    %385 = vmatprep.subr.mxu0 0.0
    %386 = vmatpush1.msra.mxu0 %v356
    %387 = vmatprep.subr.mxu0 0.0
    %388 = vmatpush1.msra.mxu0 %v355
    %389 = vmatprep.subr.mxu0 0.0
    %390 = vmatpush1.msra.mxu0 %v354
    %391 = vmatprep.subr.mxu0 0.0
    %392 = vmatpush1.msra.mxu0 %v353
    %393 = vmatprep.subr.mxu0 0.0
    %394 = vmatpush1.msra.mxu0 %v352
    %395 = vmatprep.subr.mxu0 0.0
    %396 = vmatpush1.msra.mxu0 %v351
    %397 = vmatprep.subr.mxu0 0.0
    %398 = vmatpush1.msra.mxu0 %v350
    %399 = vmatprep.subr.mxu0 0.0
    %400 = vmatpush1.msra.mxu0 %v349
    %401 = vmatprep.subr.mxu0 0.0
    %402 = vmatpush1.msra.mxu0 %v348
    %403 = vmatprep.subr.mxu0 0.0
    %404 = vmatpush1.msra.mxu0 %v347
    %405 = vmatprep.subr.mxu0 0.0
    %406 = vmatpush2.msra.mxu0 0.0
    %407 = vmatprep.subr.mxu0 0.0
    %408 = vmatpush2.msra.mxu0 0.0
    %409 = vmatprep.subr.mxu0 0.0
    %410 = vmatpush2.msra.mxu0 0.0
    %411 = vmatprep.subr.mxu0 0.0
    %412 = vmatpush2.msra.mxu0 0.0
    %413 = vmatprep.subr.mxu0 0.0
    %414 = vmatpush2.msra.mxu0 0.0
    %415 = vmatprep.subr.mxu0 0.0
    %416 = vmatpush2.msra.mxu0 0.0
    %417 = vmatprep.subr.mxu0 0.0
    %418 = vmatpush2.msra.mxu0 0.0
    %419 = vmatprep.subr.mxu0 0.0
    %420 = vmatpush2.msra.mxu0 0.0
    %421 = vmatprep.subr.mxu0 0.0
    %422 = vmatpush2.msra.mxu0 0.0
    %423 = vmatprep.subr.mxu0 0.0
    %424 = vmatpush2.msra.mxu0 0.0
    %425 = vmatprep.subr.mxu0 0.0
    %426 = vmatpush2.msra.mxu0 0.0
    %427 = vmatprep.subr.mxu0 0.0
    %428 = vmatpush2.msra.mxu0 0.0
    %429 = vmatprep.subr.mxu0 0.0
    %430 = vmatpush2.msra.mxu0 0.0
    %431 = vmatprep.subr.mxu0 0.0
    %432 = vmatpush2.msra.mxu0 0.0
    %433 = vmatprep.subr.mxu0 0.0
    %434 = vmatpush2.msra.mxu0 0.0
    %435 = vmatprep.subr.mxu0 0.0
    %436 = vmatpush2.msra.mxu0 0.0
    %437 = vmatprep.mubr.f32.mxu0 0.0
    %438 = vmatmul.mubr.f32.gmra.mxu0 %v367
    %v439 = vpop.f32.mrf.mxu0
    %v440 = vadd.f32 %v363, %v439
    %v441 = vpop.f32.mrf.mxu0
    %442 = vdwg.mxu0
    %vm443 = vcmask 74752
    %444 = vst.msk [vmem:[#allocation2] sm:$0x3] %vm443, %v440
    // Predicated region
    $region30: #{net_forward.5} parent=1 // pred_check
      _
    $region31: #{net_forward.5} parent=1 // pred_check_branch
      %446 = sbr.rel (0) target = $region33
    $region32: #{net_forward.5} parent=1 // pred_region
      %s448 = ssub.s32 32, 32
      %449 = vsyncadd [#allocation3], %s448
      %s451 = sshll.u32 [#allocation2], 4
      %s452 = int_to_ptr.vmem [resolvable:$true] %s451
      %454 = dma.vmem_to_hbm [thread:$0]  %s452, 32, %s7, [#allocation3]
    $region33: #{net_forward.5} parent=1 // pred_fallthru
      _
    // Predicated region
    $region34: #{net_forward.5} parent=1 // pred_check
      _
    $region35: #{net_forward.5} parent=1 // pred_check_branch
      %456 = sbr.rel (0) target = $region37
    $region36: #{net_forward.5} parent=1 // pred_region
      %457 = dma.done [#allocation3], 32
    $region37: #{net_forward.5} parent=1 // pred_fallthru
      _
    %458 = vsyncpa [#allocation3], 1

</llo_original>
